<compile_context>
chip_gen: v7x
topology: tpu7x:2x2x1
jax: 0.10.0
libtpu: 0.0.40
codegen_flags: <defaults>
</compile_context>

<pallas_src>
import jax
import jax.numpy as jnp
from jax.experimental import pallas as pl
from jax.experimental.pallas import tpu as pltpu

# ----------------------------- configuration --------------------------------
C = 3            # image channels
IMG = 16         # image spatial size (H = W)
PATCH = 8        # patch size -> S = (IMG // PATCH)^2 = 4 tokens per frame
HIDDEN = 32      # backbone hidden_size
MLP = 64         # MLP intermediate size
EMBED = 32       # embed_size (LSTM hidden)
S = (IMG // PATCH) ** 2
PATCH_DIM = C * PATCH * PATCH
LN_EPS = 1e-5    # PyTorch LayerNorm default


def _layernorm(x, gamma, beta):
    mu = jnp.mean(x, axis=-1, keepdims=True)
    var = jnp.mean((x - mu) ** 2, axis=-1, keepdims=True)
    return (x - mu) * jax.lax.rsqrt(var + LN_EPS) * gamma + beta


# ----------------------------- fused Pallas kernel ---------------------------
def fused_segment_kernel(
    # scalar prefetch
    n_tok_ref,
    # per-segment input + shared constants
    patch_ref, pos_ref, bias_ref,
    # patch embedding
    w_patch, b_patch,
    # encoder block
    w_qkv, b_qkv, wo, bo, wm1, bm1, wm2, bm2,
    g1, be1, g2, be2, gf, bef,
    # LSTM (gate order i, f, g, o along the 4*EMBED axis)
    w_ih, w_hh, b_lstm,
    # output
    o_ref,
):
    seg = pl.program_id(0)
    T = patch_ref.shape[0]          # = Fmax * S (static)
    H = HIDDEN
    E = EMBED

    # ---- patch embedding + positional embedding ----
    x = patch_ref[...]                                                   # (T, PD)
    tok = jnp.dot(x, w_patch[...], preferred_element_type=jnp.float32) + b_patch[...]
    tok = tok + pos_ref[...]                                             # (T, H)

    # ---- single ViT encoder block (pre-LN, single head) ----
    h1 = _layernorm(tok, g1[...], be1[...])
    qkv = jnp.dot(h1, w_qkv[...], preferred_element_type=jnp.float32) + b_qkv[...]
    q = qkv[:, 0:H]
    k = qkv[:, H:2 * H]
    v = qkv[:, 2 * H:3 * H]
    scale = 1.0 / float(H) ** 0.5
    # contract last dims of q and k (no explicit transpose of k)
    s = jax.lax.dot_general(q, k, (((1,), (1,)), ((), ())),
                            preferred_element_type=jnp.float32) * scale  # (T, T)
    s = s + bias_ref[...]                       # block-diagonal per-frame mask
    s = s - jnp.max(s, axis=-1, keepdims=True)
    e = jnp.exp(s)
    probs = e * pl.reciprocal(jnp.sum(e, axis=-1, keepdims=True), approx=True)
    ctx = jnp.dot(probs, v, preferred_element_type=jnp.float32)
    ctx = jnp.dot(ctx, wo[...], preferred_element_type=jnp.float32) + bo[...]
    xa = tok + ctx

    h2 = _layernorm(xa, g2[...], be2[...])
    m = jnp.dot(h2, wm1[...], preferred_element_type=jnp.float32) + bm1[...]
    m = jax.nn.gelu(m, approximate=True)
    m = jnp.dot(m, wm2[...], preferred_element_type=jnp.float32) + bm2[...]
    xm = xa + m

    hidden = _layernorm(xm, gf[...], bef[...])   # last_hidden_state, flattened (T, H)

    # ---- LSTM over the token sequence, return final hidden state ----
    # Input-side gate pre-activations for ALL steps in one lane-dense matmul.
    x_gates = jnp.dot(hidden, w_ih[...], preferred_element_type=jnp.float32) + b_lstm[...]  # (T, 4E)
    w_hh_v = w_hh[...]                           # hoisted load
    n_valid = n_tok_ref[seg]                     # valid token count for this segment

    h = jnp.zeros((1, E), jnp.float32)
    c = jnp.zeros((1, E), jnp.float32)
    for t in range(T):                           # short, static trip count
        gates = x_gates[t:t + 1, :] + jnp.dot(h, w_hh_v,
                                              preferred_element_type=jnp.float32)  # (1, 128)
        i_g = jax.nn.sigmoid(gates[:, 0:E])
        f_g = jax.nn.sigmoid(gates[:, E:2 * E])
        g_g = jnp.tanh(gates[:, 2 * E:3 * E])
        o_g = jax.nn.sigmoid(gates[:, 3 * E:4 * E])
        c_new = f_g * c + i_g * g_g
        h_new = o_g * jnp.tanh(c_new)
        valid = t < n_valid                      # mask out padded frames
        h = jnp.where(valid, h_new, h)
        c = jnp.where(valid, c_new, c)

    o_ref[...] = h                               # (1, EMBED)


# ----------------------------- parameters ------------------------------------
def init_params(key):
    ks = jax.random.split(key, 8)

    def w(k, shape, scale=0.02):
        return jax.random.normal(k, shape, jnp.float32) * scale

    p = {}
    # patch embedding (conv k=stride=PATCH as matmul); row order (c, ph, pw)
    p["w_patch"] = w(ks[0], (PATCH_DIM, HIDDEN))
    p["b_patch"] = jnp.zeros((1, HIDDEN), jnp.float32)
    p["pos"] = w(ks[1], (S, HIDDEN))
    # encoder block (fused QKV)
    p["w_qkv"] = w(ks[2], (HIDDEN, 3 * HIDDEN))
    p["b_qkv"] = jnp.zeros((1, 3 * HIDDEN), jnp.float32)
    p["wo"] = w(ks[3], (HIDDEN, HIDDEN))
    p["bo"] = jnp.zeros((1, HIDDEN), jnp.float32)
    p["wm1"] = w(ks[4], (HIDDEN, MLP))
    p["bm1"] = jnp.zeros((1, MLP), jnp.float32)
    p["wm2"] = w(ks[5], (MLP, HIDDEN))
    p["bm2"] = jnp.zeros((1, HIDDEN), jnp.float32)
    for name in ("ln1", "ln2", "lnf"):
        p[name + "_g"] = jnp.ones((1, HIDDEN), jnp.float32)
        p[name + "_b"] = jnp.zeros((1, HIDDEN), jnp.float32)
    # LSTM fused gate weights, gate order (i, f, g, o) along 4*EMBED
    p["w_ih"] = w(ks[6], (HIDDEN, 4 * EMBED), 0.1)
    p["w_hh"] = w(ks[7], (EMBED, 4 * EMBED), 0.1)
    p["b_lstm"] = jnp.zeros((1, 4 * EMBED), jnp.float32)   # = b_ih + b_hh
    return p


# ----------------------------- module forward --------------------------------
def forward(batch, p):
    """batch: List[List[array[F_i, C, IMG, IMG]]] -> [B, max_segs, EMBED]."""
    # Flatten all segments across the batch; pad frames to a common Fmax.
    seg_frames, seg_lens, seg_counts = [], [], []
    for frames_list in batch:
        seg_counts.append(len(frames_list))
        for fr in frames_list:
            seg_frames.append(fr)
            seg_lens.append(fr.shape[0] * S)
    n_segs = len(seg_frames)
    f_max = max(fr.shape[0] for fr in seg_frames)
    T = f_max * S

    padded = jnp.stack(
        [jnp.pad(fr, ((0, f_max - fr.shape[0]), (0, 0), (0, 0), (0, 0)))
         for fr in seg_frames], 0)                                # [n_segs, Fmax, C, IMG, IMG]

    # im2col patch extraction (glue): tokens ordered (frame, ph, pw), rows (c, kh, kw)
    hp = IMG // PATCH
    patches = padded.reshape(n_segs, f_max, C, hp, PATCH, hp, PATCH)
    patches = patches.transpose(0, 1, 3, 5, 2, 4, 6).reshape(n_segs, T, PATCH_DIM)

    n_tok = jnp.asarray(seg_lens, jnp.int32)                      # [n_segs]
    pos_tiled = jnp.tile(p["pos"], (f_max, 1))                    # [T, HIDDEN]

    # block-diagonal (per-frame) additive attention bias
    fid = jnp.arange(T) // S
    attn_bias = jnp.where(fid[:, None] == fid[None, :], 0.0, -1e30).astype(jnp.float32)

    weights = [
        p["w_patch"], p["b_patch"],
        p["w_qkv"], p["b_qkv"], p["wo"], p["bo"],
        p["wm1"], p["bm1"], p["wm2"], p["bm2"],
        p["ln1_g"], p["ln1_b"], p["ln2_g"], p["ln2_b"], p["lnf_g"], p["lnf_b"],
        p["w_ih"], p["w_hh"], p["b_lstm"],
    ]

    def const_spec(a):
        nd = a.ndim
        return pl.BlockSpec(a.shape, lambda seg, n, _nd=nd: (0,) * _nd)

    out = pl.pallas_call(
        fused_segment_kernel,
        out_shape=jax.ShapeDtypeStruct((n_segs, 1, EMBED), jnp.float32),
        grid_spec=pltpu.PrefetchScalarGridSpec(
            num_scalar_prefetch=1,
            grid=(n_segs,),
            in_specs=[pl.BlockSpec((None, T, PATCH_DIM), lambda seg, n: (seg, 0, 0)),
                      const_spec(pos_tiled),
                      const_spec(attn_bias)]
                     + [const_spec(a) for a in weights],
            out_specs=pl.BlockSpec((None, 1, EMBED), lambda seg, n: (seg, 0, 0)),
        ),
        compiler_params=pltpu.CompilerParams(dimension_semantics=("parallel",)),
    )(n_tok, patches, pos_tiled, attn_bias, *weights)

    seg_embed = out[:, 0, :]                                      # [n_segs, EMBED]

    # regroup per batch item and pad_sequence(batch_first=True)
    max_segs = max(seg_counts)
    rows, off = [], 0
    for cnt in seg_counts:
        e = seg_embed[off:off + cnt]
        off += cnt
        rows.append(jnp.pad(e, ((0, max_segs - cnt), (0, 0))))
    return jnp.stack(rows, 0)                                     # [B, max_segs, EMBED]


# ----------------------------- main -------------------------------------------
if __name__ == "__main__":
    root = jax.random.PRNGKey(0)
    k_params, k_data = jax.random.split(root)
    params = init_params(k_params)

    kd = jax.random.split(k_data, 3)
    batch = [
        [
            jax.random.normal(kd[0], (2, C, IMG, IMG), jnp.float32),
            jax.random.normal(kd[1], (3, C, IMG, IMG), jnp.float32),
        ],
        [
            jax.random.normal(kd[2], (2, C, IMG, IMG), jnp.float32),
        ],
    ]

    out = forward(batch, params)
    out = jax.block_until_ready(out)
    assert out.shape == (2, 2, EMBED), out.shape
    assert jnp.all(jnp.isfinite(out))
    print("KERNEL_OK")
</pallas_src>

<mosaic_0001>
module attributes {stable_mosaic.version = 11 : i64} {
  func.func @fused_segment_kernel(%arg0: i32, %arg1: memref<3xi32, #tpu.memory_space<smem>>, %arg2: memref<1x12x192xf32, #tpu.memory_space<vmem>>, %arg3: memref<12x32xf32, #tpu.memory_space<vmem>>, %arg4: memref<12x12xf32, #tpu.memory_space<vmem>>, %arg5: memref<192x32xf32, #tpu.memory_space<vmem>>, %arg6: memref<1x32xf32, #tpu.memory_space<vmem>>, %arg7: memref<32x96xf32, #tpu.memory_space<vmem>>, %arg8: memref<1x96xf32, #tpu.memory_space<vmem>>, %arg9: memref<32x32xf32, #tpu.memory_space<vmem>>, %arg10: memref<1x32xf32, #tpu.memory_space<vmem>>, %arg11: memref<32x64xf32, #tpu.memory_space<vmem>>, %arg12: memref<1x64xf32, #tpu.memory_space<vmem>>, %arg13: memref<64x32xf32, #tpu.memory_space<vmem>>, %arg14: memref<1x32xf32, #tpu.memory_space<vmem>>, %arg15: memref<1x32xf32, #tpu.memory_space<vmem>>, %arg16: memref<1x32xf32, #tpu.memory_space<vmem>>, %arg17: memref<1x32xf32, #tpu.memory_space<vmem>>, %arg18: memref<1x32xf32, #tpu.memory_space<vmem>>, %arg19: memref<1x32xf32, #tpu.memory_space<vmem>>, %arg20: memref<1x32xf32, #tpu.memory_space<vmem>>, %arg21: memref<32x128xf32, #tpu.memory_space<vmem>>, %arg22: memref<32x128xf32, #tpu.memory_space<vmem>>, %arg23: memref<1x128xf32, #tpu.memory_space<vmem>>, %arg24: memref<1x1x32xf32, #tpu.memory_space<vmem>>) attributes {dimension_semantics = [#tpu.dimension_semantics<parallel>], iteration_bounds = array<i64: 3>, scalar_prefetch = 1 : i64, scratch_operands = 0 : i64, tpu.core_type = #tpu.core_type<tc>, window_params = [{transform_indices = @transform_0, window_bounds = array<i64: 1, 12, 192>}, {pipeline_mode = #tpu.pipeline_mode<synchronous>, transform_indices = @transform_1, window_bounds = array<i64: 12, 32>}, {pipeline_mode = #tpu.pipeline_mode<synchronous>, transform_indices = @transform_2, window_bounds = array<i64: 12, 12>}, {pipeline_mode = #tpu.pipeline_mode<synchronous>, transform_indices = @transform_3, window_bounds = array<i64: 192, 32>}, {pipeline_mode = #tpu.pipeline_mode<synchronous>, transform_indices = @transform_4, window_bounds = array<i64: 1, 32>}, {pipeline_mode = #tpu.pipeline_mode<synchronous>, transform_indices = @transform_5, window_bounds = array<i64: 32, 96>}, {pipeline_mode = #tpu.pipeline_mode<synchronous>, transform_indices = @transform_6, window_bounds = array<i64: 1, 96>}, {pipeline_mode = #tpu.pipeline_mode<synchronous>, transform_indices = @transform_7, window_bounds = array<i64: 32, 32>}, {pipeline_mode = #tpu.pipeline_mode<synchronous>, transform_indices = @transform_8, window_bounds = array<i64: 1, 32>}, {pipeline_mode = #tpu.pipeline_mode<synchronous>, transform_indices = @transform_9, window_bounds = array<i64: 32, 64>}, {pipeline_mode = #tpu.pipeline_mode<synchronous>, transform_indices = @transform_10, window_bounds = array<i64: 1, 64>}, {pipeline_mode = #tpu.pipeline_mode<synchronous>, transform_indices = @transform_11, window_bounds = array<i64: 64, 32>}, {pipeline_mode = #tpu.pipeline_mode<synchronous>, transform_indices = @transform_12, window_bounds = array<i64: 1, 32>}, {pipeline_mode = #tpu.pipeline_mode<synchronous>, transform_indices = @transform_13, window_bounds = array<i64: 1, 32>}, {pipeline_mode = #tpu.pipeline_mode<synchronous>, transform_indices = @transform_14, window_bounds = array<i64: 1, 32>}, {pipeline_mode = #tpu.pipeline_mode<synchronous>, transform_indices = @transform_15, window_bounds = array<i64: 1, 32>}, {pipeline_mode = #tpu.pipeline_mode<synchronous>, transform_indices = @transform_16, window_bounds = array<i64: 1, 32>}, {pipeline_mode = #tpu.pipeline_mode<synchronous>, transform_indices = @transform_17, window_bounds = array<i64: 1, 32>}, {pipeline_mode = #tpu.pipeline_mode<synchronous>, transform_indices = @transform_18, window_bounds = array<i64: 1, 32>}, {pipeline_mode = #tpu.pipeline_mode<synchronous>, transform_indices = @transform_19, window_bounds = array<i64: 32, 128>}, {pipeline_mode = #tpu.pipeline_mode<synchronous>, transform_indices = @transform_20, window_bounds = array<i64: 32, 128>}, {pipeline_mode = #tpu.pipeline_mode<synchronous>, transform_indices = @transform_21, window_bounds = array<i64: 1, 128>}, {transform_indices = @transform_22, window_bounds = array<i64: 1, 1, 32>}]} {
    %c0 = arith.constant 0 : index
    %c0_0 = arith.constant 0 : index
    %c0_1 = arith.constant 0 : index
    %0 = vector.load %arg2[%c0, %c0_0, %c0_1] : memref<1x12x192xf32, #tpu.memory_space<vmem>>, vector<1x12x192xf32>
    %1 = vector.shape_cast %0 : vector<1x12x192xf32> to vector<12x192xf32>
    %c0_2 = arith.constant 0 : index
    %c0_3 = arith.constant 0 : index
    %2 = vector.load %arg5[%c0_2, %c0_3] : memref<192x32xf32, #tpu.memory_space<vmem>>, vector<192x32xf32>
    %cst = arith.constant dense<0.000000e+00> : vector<12x32xf32>
    %3 = tpu.matmul %1, %2, %cst {dimension_numbers = #tpu.dot_dimension_numbers<[1], [0], [0], [1], [0, 0, 1, 1], [], []>} : vector<12x192xf32>, vector<192x32xf32>, vector<12x32xf32> -> vector<12x32xf32>
    %c0_4 = arith.constant 0 : index
    %c0_5 = arith.constant 0 : index
    %4 = vector.load %arg6[%c0_4, %c0_5] : memref<1x32xf32, #tpu.memory_space<vmem>>, vector<1x32xf32>
    %5 = vector.broadcast %4 : vector<1x32xf32> to vector<12x32xf32>
    %6 = arith.addf %3, %5 : vector<12x32xf32>
    %c0_6 = arith.constant 0 : index
    %c0_7 = arith.constant 0 : index
    %7 = vector.load %arg3[%c0_6, %c0_7] : memref<12x32xf32, #tpu.memory_space<vmem>>, vector<12x32xf32>
    %8 = arith.addf %6, %7 : vector<12x32xf32>
    %c0_8 = arith.constant 0 : index
    %c0_9 = arith.constant 0 : index
    %9 = vector.load %arg15[%c0_8, %c0_9] : memref<1x32xf32, #tpu.memory_space<vmem>>, vector<1x32xf32>
    %c0_10 = arith.constant 0 : index
    %c0_11 = arith.constant 0 : index
    %10 = vector.load %arg16[%c0_10, %c0_11] : memref<1x32xf32, #tpu.memory_space<vmem>>, vector<1x32xf32>
    %cst_12 = arith.constant dense<0.000000e+00> : vector<12xf32>
    %11 = vector.multi_reduction <add>, %8, %cst_12 [1] : vector<12x32xf32> to vector<12xf32>
    %12 = vector.shape_cast %11 : vector<12xf32> to vector<12x1xf32>
    %cst_13 = arith.constant 3.200000e+01 : f32
    %13 = vector.broadcast %cst_13 : f32 to vector<12x1xf32>
    %14 = arith.divf %12, %13 : vector<12x1xf32>
    %15 = vector.broadcast %14 : vector<12x1xf32> to vector<12x32xf32>
    %16 = arith.subf %8, %15 : vector<12x32xf32>
    %17 = arith.mulf %16, %16 : vector<12x32xf32>
    %cst_14 = arith.constant dense<0.000000e+00> : vector<12xf32>
    %18 = vector.multi_reduction <add>, %17, %cst_14 [1] : vector<12x32xf32> to vector<12xf32>
    %19 = vector.shape_cast %18 : vector<12xf32> to vector<12x1xf32>
    %cst_15 = arith.constant 3.200000e+01 : f32
    %20 = vector.broadcast %cst_15 : f32 to vector<12x1xf32>
    %21 = arith.divf %19, %20 : vector<12x1xf32>
    %22 = vector.broadcast %14 : vector<12x1xf32> to vector<12x32xf32>
    %23 = arith.subf %8, %22 : vector<12x32xf32>
    %cst_16 = arith.constant 9.99999974E-6 : f32
    %24 = vector.broadcast %cst_16 : f32 to vector<12x1xf32>
    %25 = arith.addf %21, %24 : vector<12x1xf32>
    %26 = math.rsqrt %25 : vector<12x1xf32>
    %27 = vector.broadcast %26 : vector<12x1xf32> to vector<12x32xf32>
    %28 = arith.mulf %23, %27 : vector<12x32xf32>
    %29 = vector.broadcast %9 : vector<1x32xf32> to vector<12x32xf32>
    %30 = arith.mulf %28, %29 : vector<12x32xf32>
    %31 = vector.broadcast %10 : vector<1x32xf32> to vector<12x32xf32>
    %32 = arith.addf %30, %31 : vector<12x32xf32>
    %c0_17 = arith.constant 0 : index
    %c0_18 = arith.constant 0 : index
    %33 = vector.load %arg7[%c0_17, %c0_18] : memref<32x96xf32, #tpu.memory_space<vmem>>, vector<32x96xf32>
    %cst_19 = arith.constant dense<0.000000e+00> : vector<12x96xf32>
    %34 = tpu.matmul %32, %33, %cst_19 {dimension_numbers = #tpu.dot_dimension_numbers<[1], [0], [0], [1], [0, 0, 1, 1], [], []>} : vector<12x32xf32>, vector<32x96xf32>, vector<12x96xf32> -> vector<12x96xf32>
    %c0_20 = arith.constant 0 : index
    %c0_21 = arith.constant 0 : index
    %35 = vector.load %arg8[%c0_20, %c0_21] : memref<1x96xf32, #tpu.memory_space<vmem>>, vector<1x96xf32>
    %36 = vector.broadcast %35 : vector<1x96xf32> to vector<12x96xf32>
    %37 = arith.addf %34, %36 : vector<12x96xf32>
    %38 = vector.extract_strided_slice %37 {offsets = [0, 0], sizes = [12, 32], strides = [1, 1]} : vector<12x96xf32> to vector<12x32xf32>
    %39 = vector.extract_strided_slice %37 {offsets = [0, 32], sizes = [12, 32], strides = [1, 1]} : vector<12x96xf32> to vector<12x32xf32>
    %40 = vector.extract_strided_slice %37 {offsets = [0, 64], sizes = [12, 32], strides = [1, 1]} : vector<12x96xf32> to vector<12x32xf32>
    %cst_22 = arith.constant dense<0.000000e+00> : vector<12x12xf32>
    %41 = tpu.matmul %38, %39, %cst_22 {dimension_numbers = #tpu.dot_dimension_numbers<[1], [1], [0], [0], [0, 0, 1, 0], [], []>} : vector<12x32xf32>, vector<12x32xf32>, vector<12x12xf32> -> vector<12x12xf32>
    %cst_23 = arith.constant 0.176776692 : f32
    %42 = vector.broadcast %cst_23 : f32 to vector<12x12xf32>
    %43 = arith.mulf %41, %42 : vector<12x12xf32>
    %c0_24 = arith.constant 0 : index
    %c0_25 = arith.constant 0 : index
    %44 = vector.load %arg4[%c0_24, %c0_25] : memref<12x12xf32, #tpu.memory_space<vmem>>, vector<12x12xf32>
    %45 = arith.addf %43, %44 : vector<12x12xf32>
    %cst_26 = arith.constant dense<0xFF800000> : vector<12xf32>
    %46 = vector.multi_reduction <maximumf>, %45, %cst_26 [1] : vector<12x12xf32> to vector<12xf32>
    %47 = vector.shape_cast %46 : vector<12xf32> to vector<12x1xf32>
    %48 = vector.broadcast %47 : vector<12x1xf32> to vector<12x12xf32>
    %49 = arith.subf %45, %48 : vector<12x12xf32>
    %50 = math.exp %49 : vector<12x12xf32>
    %cst_27 = arith.constant dense<0.000000e+00> : vector<12xf32>
    %51 = vector.multi_reduction <add>, %50, %cst_27 [1] : vector<12x12xf32> to vector<12xf32>
    %52 = vector.shape_cast %51 : vector<12xf32> to vector<12x1xf32>
    %53 = tpu.reciprocal %52 {approx = true} : vector<12x1xf32> -> vector<12x1xf32>
    %54 = vector.broadcast %53 : vector<12x1xf32> to vector<12x12xf32>
    %55 = arith.mulf %50, %54 : vector<12x12xf32>
    %cst_28 = arith.constant dense<0.000000e+00> : vector<12x32xf32>
    %56 = tpu.matmul %55, %40, %cst_28 {dimension_numbers = #tpu.dot_dimension_numbers<[1], [0], [0], [1], [0, 0, 1, 1], [], []>} : vector<12x12xf32>, vector<12x32xf32>, vector<12x32xf32> -> vector<12x32xf32>
    %c0_29 = arith.constant 0 : index
    %c0_30 = arith.constant 0 : index
    %57 = vector.load %arg9[%c0_29, %c0_30] : memref<32x32xf32, #tpu.memory_space<vmem>>, vector<32x32xf32>
    %cst_31 = arith.constant dense<0.000000e+00> : vector<12x32xf32>
    %58 = tpu.matmul %56, %57, %cst_31 {dimension_numbers = #tpu.dot_dimension_numbers<[1], [0], [0], [1], [0, 0, 1, 1], [], []>} : vector<12x32xf32>, vector<32x32xf32>, vector<12x32xf32> -> vector<12x32xf32>
    %c0_32 = arith.constant 0 : index
    %c0_33 = arith.constant 0 : index
    %59 = vector.load %arg10[%c0_32, %c0_33] : memref<1x32xf32, #tpu.memory_space<vmem>>, vector<1x32xf32>
    %60 = vector.broadcast %59 : vector<1x32xf32> to vector<12x32xf32>
    %61 = arith.addf %58, %60 : vector<12x32xf32>
    %62 = arith.addf %8, %61 : vector<12x32xf32>
    %c0_34 = arith.constant 0 : index
    %c0_35 = arith.constant 0 : index
    %63 = vector.load %arg17[%c0_34, %c0_35] : memref<1x32xf32, #tpu.memory_space<vmem>>, vector<1x32xf32>
    %c0_36 = arith.constant 0 : index
    %c0_37 = arith.constant 0 : index
    %64 = vector.load %arg18[%c0_36, %c0_37] : memref<1x32xf32, #tpu.memory_space<vmem>>, vector<1x32xf32>
    %cst_38 = arith.constant dense<0.000000e+00> : vector<12xf32>
    %65 = vector.multi_reduction <add>, %62, %cst_38 [1] : vector<12x32xf32> to vector<12xf32>
    %66 = vector.shape_cast %65 : vector<12xf32> to vector<12x1xf32>
    %cst_39 = arith.constant 3.200000e+01 : f32
    %67 = vector.broadcast %cst_39 : f32 to vector<12x1xf32>
    %68 = arith.divf %66, %67 : vector<12x1xf32>
    %69 = vector.broadcast %68 : vector<12x1xf32> to vector<12x32xf32>
    %70 = arith.subf %62, %69 : vector<12x32xf32>
    %71 = arith.mulf %70, %70 : vector<12x32xf32>
    %cst_40 = arith.constant dense<0.000000e+00> : vector<12xf32>
    %72 = vector.multi_reduction <add>, %71, %cst_40 [1] : vector<12x32xf32> to vector<12xf32>
    %73 = vector.shape_cast %72 : vector<12xf32> to vector<12x1xf32>
    %cst_41 = arith.constant 3.200000e+01 : f32
    %74 = vector.broadcast %cst_41 : f32 to vector<12x1xf32>
    %75 = arith.divf %73, %74 : vector<12x1xf32>
    %76 = vector.broadcast %68 : vector<12x1xf32> to vector<12x32xf32>
    %77 = arith.subf %62, %76 : vector<12x32xf32>
    %cst_42 = arith.constant 9.99999974E-6 : f32
    %78 = vector.broadcast %cst_42 : f32 to vector<12x1xf32>
    %79 = arith.addf %75, %78 : vector<12x1xf32>
    %80 = math.rsqrt %79 : vector<12x1xf32>
    %81 = vector.broadcast %80 : vector<12x1xf32> to vector<12x32xf32>
    %82 = arith.mulf %77, %81 : vector<12x32xf32>
    %83 = vector.broadcast %63 : vector<1x32xf32> to vector<12x32xf32>
    %84 = arith.mulf %82, %83 : vector<12x32xf32>
    %85 = vector.broadcast %64 : vector<1x32xf32> to vector<12x32xf32>
    %86 = arith.addf %84, %85 : vector<12x32xf32>
    %c0_43 = arith.constant 0 : index
    %c0_44 = arith.constant 0 : index
    %87 = vector.load %arg11[%c0_43, %c0_44] : memref<32x64xf32, #tpu.memory_space<vmem>>, vector<32x64xf32>
    %cst_45 = arith.constant dense<0.000000e+00> : vector<12x64xf32>
    %88 = tpu.matmul %86, %87, %cst_45 {dimension_numbers = #tpu.dot_dimension_numbers<[1], [0], [0], [1], [0, 0, 1, 1], [], []>} : vector<12x32xf32>, vector<32x64xf32>, vector<12x64xf32> -> vector<12x64xf32>
    %c0_46 = arith.constant 0 : index
    %c0_47 = arith.constant 0 : index
    %89 = vector.load %arg12[%c0_46, %c0_47] : memref<1x64xf32, #tpu.memory_space<vmem>>, vector<1x64xf32>
    %90 = vector.broadcast %89 : vector<1x64xf32> to vector<12x64xf32>
    %91 = arith.addf %88, %90 : vector<12x64xf32>
    %92 = arith.mulf %91, %91 : vector<12x64xf32>
    %93 = arith.mulf %91, %92 : vector<12x64xf32>
    %cst_48 = arith.constant 4.471500e-02 : f32
    %94 = vector.broadcast %cst_48 : f32 to vector<12x64xf32>
    %95 = arith.mulf %94, %93 : vector<12x64xf32>
    %96 = arith.addf %91, %95 : vector<12x64xf32>
    %cst_49 = arith.constant 0.797884583 : f32
    %97 = vector.broadcast %cst_49 : f32 to vector<12x64xf32>
    %98 = arith.mulf %97, %96 : vector<12x64xf32>
    %99 = math.tanh %98 : vector<12x64xf32>
    %cst_50 = arith.constant 1.000000e+00 : f32
    %100 = vector.broadcast %cst_50 : f32 to vector<12x64xf32>
    %101 = arith.addf %100, %99 : vector<12x64xf32>
    %cst_51 = arith.constant 5.000000e-01 : f32
    %102 = vector.broadcast %cst_51 : f32 to vector<12x64xf32>
    %103 = arith.mulf %102, %101 : vector<12x64xf32>
    %104 = arith.mulf %91, %103 : vector<12x64xf32>
    %c0_52 = arith.constant 0 : index
    %c0_53 = arith.constant 0 : index
    %105 = vector.load %arg13[%c0_52, %c0_53] : memref<64x32xf32, #tpu.memory_space<vmem>>, vector<64x32xf32>
    %cst_54 = arith.constant dense<0.000000e+00> : vector<12x32xf32>
    %106 = tpu.matmul %104, %105, %cst_54 {dimension_numbers = #tpu.dot_dimension_numbers<[1], [0], [0], [1], [0, 0, 1, 1], [], []>} : vector<12x64xf32>, vector<64x32xf32>, vector<12x32xf32> -> vector<12x32xf32>
    %c0_55 = arith.constant 0 : index
    %c0_56 = arith.constant 0 : index
    %107 = vector.load %arg14[%c0_55, %c0_56] : memref<1x32xf32, #tpu.memory_space<vmem>>, vector<1x32xf32>
    %108 = vector.broadcast %107 : vector<1x32xf32> to vector<12x32xf32>
    %109 = arith.addf %106, %108 : vector<12x32xf32>
    %110 = arith.addf %62, %109 : vector<12x32xf32>
    %c0_57 = arith.constant 0 : index
    %c0_58 = arith.constant 0 : index
    %111 = vector.load %arg19[%c0_57, %c0_58] : memref<1x32xf32, #tpu.memory_space<vmem>>, vector<1x32xf32>
    %c0_59 = arith.constant 0 : index
    %c0_60 = arith.constant 0 : index
    %112 = vector.load %arg20[%c0_59, %c0_60] : memref<1x32xf32, #tpu.memory_space<vmem>>, vector<1x32xf32>
    %cst_61 = arith.constant dense<0.000000e+00> : vector<12xf32>
    %113 = vector.multi_reduction <add>, %110, %cst_61 [1] : vector<12x32xf32> to vector<12xf32>
    %114 = vector.shape_cast %113 : vector<12xf32> to vector<12x1xf32>
    %cst_62 = arith.constant 3.200000e+01 : f32
    %115 = vector.broadcast %cst_62 : f32 to vector<12x1xf32>
    %116 = arith.divf %114, %115 : vector<12x1xf32>
    %117 = vector.broadcast %116 : vector<12x1xf32> to vector<12x32xf32>
    %118 = arith.subf %110, %117 : vector<12x32xf32>
    %119 = arith.mulf %118, %118 : vector<12x32xf32>
    %cst_63 = arith.constant dense<0.000000e+00> : vector<12xf32>
    %120 = vector.multi_reduction <add>, %119, %cst_63 [1] : vector<12x32xf32> to vector<12xf32>
    %121 = vector.shape_cast %120 : vector<12xf32> to vector<12x1xf32>
    %cst_64 = arith.constant 3.200000e+01 : f32
    %122 = vector.broadcast %cst_64 : f32 to vector<12x1xf32>
    %123 = arith.divf %121, %122 : vector<12x1xf32>
    %124 = vector.broadcast %116 : vector<12x1xf32> to vector<12x32xf32>
    %125 = arith.subf %110, %124 : vector<12x32xf32>
    %cst_65 = arith.constant 9.99999974E-6 : f32
    %126 = vector.broadcast %cst_65 : f32 to vector<12x1xf32>
    %127 = arith.addf %123, %126 : vector<12x1xf32>
    %128 = math.rsqrt %127 : vector<12x1xf32>
    %129 = vector.broadcast %128 : vector<12x1xf32> to vector<12x32xf32>
    %130 = arith.mulf %125, %129 : vector<12x32xf32>
    %131 = vector.broadcast %111 : vector<1x32xf32> to vector<12x32xf32>
    %132 = arith.mulf %130, %131 : vector<12x32xf32>
    %133 = vector.broadcast %112 : vector<1x32xf32> to vector<12x32xf32>
    %134 = arith.addf %132, %133 : vector<12x32xf32>
    %c0_66 = arith.constant 0 : index
    %c0_67 = arith.constant 0 : index
    %135 = vector.load %arg21[%c0_66, %c0_67] : memref<32x128xf32, #tpu.memory_space<vmem>>, vector<32x128xf32>
    %cst_68 = arith.constant dense<0.000000e+00> : vector<12x128xf32>
    %136 = tpu.matmul %134, %135, %cst_68 {dimension_numbers = #tpu.dot_dimension_numbers<[1], [0], [0], [1], [0, 0, 1, 1], [], []>} : vector<12x32xf32>, vector<32x128xf32>, vector<12x128xf32> -> vector<12x128xf32>
    %c0_69 = arith.constant 0 : index
    %c0_70 = arith.constant 0 : index
    %137 = vector.load %arg23[%c0_69, %c0_70] : memref<1x128xf32, #tpu.memory_space<vmem>>, vector<1x128xf32>
    %138 = vector.broadcast %137 : vector<1x128xf32> to vector<12x128xf32>
    %139 = arith.addf %136, %138 : vector<12x128xf32>
    %c0_71 = arith.constant 0 : index
    %c0_72 = arith.constant 0 : index
    %140 = vector.load %arg22[%c0_71, %c0_72] : memref<32x128xf32, #tpu.memory_space<vmem>>, vector<32x128xf32>
    %141 = arith.index_cast %arg0 : i32 to index
    %142 = memref.load %arg1[%141] : memref<3xi32, #tpu.memory_space<smem>>
    %cst_73 = arith.constant 0.000000e+00 : f32
    %143 = vector.broadcast %cst_73 : f32 to vector<1x32xf32>
    %cst_74 = arith.constant 0.000000e+00 : f32
    %144 = vector.broadcast %cst_74 : f32 to vector<1x32xf32>
    %145 = vector.extract_strided_slice %139 {offsets = [0, 0], sizes = [1, 128], strides = [1, 1]} : vector<12x128xf32> to vector<1x128xf32>
    %cst_75 = arith.constant dense<0.000000e+00> : vector<1x128xf32>
    %146 = tpu.matmul %143, %140, %cst_75 {dimension_numbers = #tpu.dot_dimension_numbers<[1], [0], [0], [1], [0, 0, 1, 1], [], []>} : vector<1x32xf32>, vector<32x128xf32>, vector<1x128xf32> -> vector<1x128xf32>
    %147 = arith.addf %145, %146 : vector<1x128xf32>
    %148 = vector.extract_strided_slice %147 {offsets = [0, 0], sizes = [1, 32], strides = [1, 1]} : vector<1x128xf32> to vector<1x32xf32>
    %149 = arith.negf %148 : vector<1x32xf32>
    %150 = math.exp %149 : vector<1x32xf32>
    %cst_76 = arith.constant 1.000000e+00 : f32
    %151 = vector.broadcast %cst_76 : f32 to vector<1x32xf32>
    %152 = arith.addf %151, %150 : vector<1x32xf32>
    %153 = arith.divf %151, %152 : vector<1x32xf32>
    %154 = vector.extract_strided_slice %147 {offsets = [0, 32], sizes = [1, 32], strides = [1, 1]} : vector<1x128xf32> to vector<1x32xf32>
    %155 = arith.negf %154 : vector<1x32xf32>
    %156 = math.exp %155 : vector<1x32xf32>
    %cst_77 = arith.constant 1.000000e+00 : f32
    %157 = vector.broadcast %cst_77 : f32 to vector<1x32xf32>
    %158 = arith.addf %157, %156 : vector<1x32xf32>
    %159 = arith.divf %157, %158 : vector<1x32xf32>
    %160 = vector.extract_strided_slice %147 {offsets = [0, 64], sizes = [1, 32], strides = [1, 1]} : vector<1x128xf32> to vector<1x32xf32>
    %161 = math.tanh %160 : vector<1x32xf32>
    %162 = vector.extract_strided_slice %147 {offsets = [0, 96], sizes = [1, 32], strides = [1, 1]} : vector<1x128xf32> to vector<1x32xf32>
    %163 = arith.negf %162 : vector<1x32xf32>
    %164 = math.exp %163 : vector<1x32xf32>
    %cst_78 = arith.constant 1.000000e+00 : f32
    %165 = vector.broadcast %cst_78 : f32 to vector<1x32xf32>
    %166 = arith.addf %165, %164 : vector<1x32xf32>
    %167 = arith.divf %165, %166 : vector<1x32xf32>
    %168 = arith.mulf %159, %144 : vector<1x32xf32>
    %169 = arith.mulf %153, %161 : vector<1x32xf32>
    %170 = arith.addf %168, %169 : vector<1x32xf32>
    %171 = math.tanh %170 : vector<1x32xf32>
    %172 = arith.mulf %167, %171 : vector<1x32xf32>
    %c0_i32 = arith.constant 0 : i32
    %173 = arith.cmpi sgt, %142, %c0_i32 : i32
    %174 = arith.select %173, %172, %143 : vector<1x32xf32>
    %175 = arith.select %173, %170, %144 : vector<1x32xf32>
    %176 = vector.extract_strided_slice %139 {offsets = [1, 0], sizes = [1, 128], strides = [1, 1]} : vector<12x128xf32> to vector<1x128xf32>
    %cst_79 = arith.constant dense<0.000000e+00> : vector<1x128xf32>
    %177 = tpu.matmul %174, %140, %cst_79 {dimension_numbers = #tpu.dot_dimension_numbers<[1], [0], [0], [1], [0, 0, 1, 1], [], []>} : vector<1x32xf32>, vector<32x128xf32>, vector<1x128xf32> -> vector<1x128xf32>
    %178 = arith.addf %176, %177 : vector<1x128xf32>
    %179 = vector.extract_strided_slice %178 {offsets = [0, 0], sizes = [1, 32], strides = [1, 1]} : vector<1x128xf32> to vector<1x32xf32>
    %180 = arith.negf %179 : vector<1x32xf32>
    %181 = math.exp %180 : vector<1x32xf32>
    %cst_80 = arith.constant 1.000000e+00 : f32
    %182 = vector.broadcast %cst_80 : f32 to vector<1x32xf32>
    %183 = arith.addf %182, %181 : vector<1x32xf32>
    %184 = arith.divf %182, %183 : vector<1x32xf32>
    %185 = vector.extract_strided_slice %178 {offsets = [0, 32], sizes = [1, 32], strides = [1, 1]} : vector<1x128xf32> to vector<1x32xf32>
    %186 = arith.negf %185 : vector<1x32xf32>
    %187 = math.exp %186 : vector<1x32xf32>
    %cst_81 = arith.constant 1.000000e+00 : f32
    %188 = vector.broadcast %cst_81 : f32 to vector<1x32xf32>
    %189 = arith.addf %188, %187 : vector<1x32xf32>
    %190 = arith.divf %188, %189 : vector<1x32xf32>
    %191 = vector.extract_strided_slice %178 {offsets = [0, 64], sizes = [1, 32], strides = [1, 1]} : vector<1x128xf32> to vector<1x32xf32>
    %192 = math.tanh %191 : vector<1x32xf32>
    %193 = vector.extract_strided_slice %178 {offsets = [0, 96], sizes = [1, 32], strides = [1, 1]} : vector<1x128xf32> to vector<1x32xf32>
    %194 = arith.negf %193 : vector<1x32xf32>
    %195 = math.exp %194 : vector<1x32xf32>
    %cst_82 = arith.constant 1.000000e+00 : f32
    %196 = vector.broadcast %cst_82 : f32 to vector<1x32xf32>
    %197 = arith.addf %196, %195 : vector<1x32xf32>
    %198 = arith.divf %196, %197 : vector<1x32xf32>
    %199 = arith.mulf %190, %175 : vector<1x32xf32>
    %200 = arith.mulf %184, %192 : vector<1x32xf32>
    %201 = arith.addf %199, %200 : vector<1x32xf32>
    %202 = math.tanh %201 : vector<1x32xf32>
    %203 = arith.mulf %198, %202 : vector<1x32xf32>
    %c1_i32 = arith.constant 1 : i32
    %204 = arith.cmpi sgt, %142, %c1_i32 : i32
    %205 = arith.select %204, %203, %174 : vector<1x32xf32>
    %206 = arith.select %204, %201, %175 : vector<1x32xf32>
    %207 = vector.extract_strided_slice %139 {offsets = [2, 0], sizes = [1, 128], strides = [1, 1]} : vector<12x128xf32> to vector<1x128xf32>
    %cst_83 = arith.constant dense<0.000000e+00> : vector<1x128xf32>
    %208 = tpu.matmul %205, %140, %cst_83 {dimension_numbers = #tpu.dot_dimension_numbers<[1], [0], [0], [1], [0, 0, 1, 1], [], []>} : vector<1x32xf32>, vector<32x128xf32>, vector<1x128xf32> -> vector<1x128xf32>
    %209 = arith.addf %207, %208 : vector<1x128xf32>
    %210 = vector.extract_strided_slice %209 {offsets = [0, 0], sizes = [1, 32], strides = [1, 1]} : vector<1x128xf32> to vector<1x32xf32>
    %211 = arith.negf %210 : vector<1x32xf32>
    %212 = math.exp %211 : vector<1x32xf32>
    %cst_84 = arith.constant 1.000000e+00 : f32
    %213 = vector.broadcast %cst_84 : f32 to vector<1x32xf32>
    %214 = arith.addf %213, %212 : vector<1x32xf32>
    %215 = arith.divf %213, %214 : vector<1x32xf32>
    %216 = vector.extract_strided_slice %209 {offsets = [0, 32], sizes = [1, 32], strides = [1, 1]} : vector<1x128xf32> to vector<1x32xf32>
    %217 = arith.negf %216 : vector<1x32xf32>
    %218 = math.exp %217 : vector<1x32xf32>
    %cst_85 = arith.constant 1.000000e+00 : f32
    %219 = vector.broadcast %cst_85 : f32 to vector<1x32xf32>
    %220 = arith.addf %219, %218 : vector<1x32xf32>
    %221 = arith.divf %219, %220 : vector<1x32xf32>
    %222 = vector.extract_strided_slice %209 {offsets = [0, 64], sizes = [1, 32], strides = [1, 1]} : vector<1x128xf32> to vector<1x32xf32>
    %223 = math.tanh %222 : vector<1x32xf32>
    %224 = vector.extract_strided_slice %209 {offsets = [0, 96], sizes = [1, 32], strides = [1, 1]} : vector<1x128xf32> to vector<1x32xf32>
    %225 = arith.negf %224 : vector<1x32xf32>
    %226 = math.exp %225 : vector<1x32xf32>
    %cst_86 = arith.constant 1.000000e+00 : f32
    %227 = vector.broadcast %cst_86 : f32 to vector<1x32xf32>
    %228 = arith.addf %227, %226 : vector<1x32xf32>
    %229 = arith.divf %227, %228 : vector<1x32xf32>
    %230 = arith.mulf %221, %206 : vector<1x32xf32>
    %231 = arith.mulf %215, %223 : vector<1x32xf32>
    %232 = arith.addf %230, %231 : vector<1x32xf32>
    %233 = math.tanh %232 : vector<1x32xf32>
    %234 = arith.mulf %229, %233 : vector<1x32xf32>
    %c2_i32 = arith.constant 2 : i32
    %235 = arith.cmpi sgt, %142, %c2_i32 : i32
    %236 = arith.select %235, %234, %205 : vector<1x32xf32>
    %237 = arith.select %235, %232, %206 : vector<1x32xf32>
    %238 = vector.extract_strided_slice %139 {offsets = [3, 0], sizes = [1, 128], strides = [1, 1]} : vector<12x128xf32> to vector<1x128xf32>
    %cst_87 = arith.constant dense<0.000000e+00> : vector<1x128xf32>
    %239 = tpu.matmul %236, %140, %cst_87 {dimension_numbers = #tpu.dot_dimension_numbers<[1], [0], [0], [1], [0, 0, 1, 1], [], []>} : vector<1x32xf32>, vector<32x128xf32>, vector<1x128xf32> -> vector<1x128xf32>
    %240 = arith.addf %238, %239 : vector<1x128xf32>
    %241 = vector.extract_strided_slice %240 {offsets = [0, 0], sizes = [1, 32], strides = [1, 1]} : vector<1x128xf32> to vector<1x32xf32>
    %242 = arith.negf %241 : vector<1x32xf32>
    %243 = math.exp %242 : vector<1x32xf32>
    %cst_88 = arith.constant 1.000000e+00 : f32
    %244 = vector.broadcast %cst_88 : f32 to vector<1x32xf32>
    %245 = arith.addf %244, %243 : vector<1x32xf32>
    %246 = arith.divf %244, %245 : vector<1x32xf32>
    %247 = vector.extract_strided_slice %240 {offsets = [0, 32], sizes = [1, 32], strides = [1, 1]} : vector<1x128xf32> to vector<1x32xf32>
    %248 = arith.negf %247 : vector<1x32xf32>
    %249 = math.exp %248 : vector<1x32xf32>
    %cst_89 = arith.constant 1.000000e+00 : f32
    %250 = vector.broadcast %cst_89 : f32 to vector<1x32xf32>
    %251 = arith.addf %250, %249 : vector<1x32xf32>
    %252 = arith.divf %250, %251 : vector<1x32xf32>
    %253 = vector.extract_strided_slice %240 {offsets = [0, 64], sizes = [1, 32], strides = [1, 1]} : vector<1x128xf32> to vector<1x32xf32>
    %254 = math.tanh %253 : vector<1x32xf32>
    %255 = vector.extract_strided_slice %240 {offsets = [0, 96], sizes = [1, 32], strides = [1, 1]} : vector<1x128xf32> to vector<1x32xf32>
    %256 = arith.negf %255 : vector<1x32xf32>
    %257 = math.exp %256 : vector<1x32xf32>
    %cst_90 = arith.constant 1.000000e+00 : f32
    %258 = vector.broadcast %cst_90 : f32 to vector<1x32xf32>
    %259 = arith.addf %258, %257 : vector<1x32xf32>
    %260 = arith.divf %258, %259 : vector<1x32xf32>
    %261 = arith.mulf %252, %237 : vector<1x32xf32>
    %262 = arith.mulf %246, %254 : vector<1x32xf32>
    %263 = arith.addf %261, %262 : vector<1x32xf32>
    %264 = math.tanh %263 : vector<1x32xf32>
    %265 = arith.mulf %260, %264 : vector<1x32xf32>
    %c3_i32 = arith.constant 3 : i32
    %266 = arith.cmpi sgt, %142, %c3_i32 : i32
    %267 = arith.select %266, %265, %236 : vector<1x32xf32>
    %268 = arith.select %266, %263, %237 : vector<1x32xf32>
    %269 = vector.extract_strided_slice %139 {offsets = [4, 0], sizes = [1, 128], strides = [1, 1]} : vector<12x128xf32> to vector<1x128xf32>
    %cst_91 = arith.constant dense<0.000000e+00> : vector<1x128xf32>
    %270 = tpu.matmul %267, %140, %cst_91 {dimension_numbers = #tpu.dot_dimension_numbers<[1], [0], [0], [1], [0, 0, 1, 1], [], []>} : vector<1x32xf32>, vector<32x128xf32>, vector<1x128xf32> -> vector<1x128xf32>
    %271 = arith.addf %269, %270 : vector<1x128xf32>
    %272 = vector.extract_strided_slice %271 {offsets = [0, 0], sizes = [1, 32], strides = [1, 1]} : vector<1x128xf32> to vector<1x32xf32>
    %273 = arith.negf %272 : vector<1x32xf32>
    %274 = math.exp %273 : vector<1x32xf32>
    %cst_92 = arith.constant 1.000000e+00 : f32
    %275 = vector.broadcast %cst_92 : f32 to vector<1x32xf32>
    %276 = arith.addf %275, %274 : vector<1x32xf32>
    %277 = arith.divf %275, %276 : vector<1x32xf32>
    %278 = vector.extract_strided_slice %271 {offsets = [0, 32], sizes = [1, 32], strides = [1, 1]} : vector<1x128xf32> to vector<1x32xf32>
    %279 = arith.negf %278 : vector<1x32xf32>
    %280 = math.exp %279 : vector<1x32xf32>
    %cst_93 = arith.constant 1.000000e+00 : f32
    %281 = vector.broadcast %cst_93 : f32 to vector<1x32xf32>
    %282 = arith.addf %281, %280 : vector<1x32xf32>
    %283 = arith.divf %281, %282 : vector<1x32xf32>
    %284 = vector.extract_strided_slice %271 {offsets = [0, 64], sizes = [1, 32], strides = [1, 1]} : vector<1x128xf32> to vector<1x32xf32>
    %285 = math.tanh %284 : vector<1x32xf32>
    %286 = vector.extract_strided_slice %271 {offsets = [0, 96], sizes = [1, 32], strides = [1, 1]} : vector<1x128xf32> to vector<1x32xf32>
    %287 = arith.negf %286 : vector<1x32xf32>
    %288 = math.exp %287 : vector<1x32xf32>
    %cst_94 = arith.constant 1.000000e+00 : f32
    %289 = vector.broadcast %cst_94 : f32 to vector<1x32xf32>
    %290 = arith.addf %289, %288 : vector<1x32xf32>
    %291 = arith.divf %289, %290 : vector<1x32xf32>
    %292 = arith.mulf %283, %268 : vector<1x32xf32>
    %293 = arith.mulf %277, %285 : vector<1x32xf32>
    %294 = arith.addf %292, %293 : vector<1x32xf32>
    %295 = math.tanh %294 : vector<1x32xf32>
    %296 = arith.mulf %291, %295 : vector<1x32xf32>
    %c4_i32 = arith.constant 4 : i32
    %297 = arith.cmpi sgt, %142, %c4_i32 : i32
    %298 = arith.select %297, %296, %267 : vector<1x32xf32>
    %299 = arith.select %297, %294, %268 : vector<1x32xf32>
    %300 = vector.extract_strided_slice %139 {offsets = [5, 0], sizes = [1, 128], strides = [1, 1]} : vector<12x128xf32> to vector<1x128xf32>
    %cst_95 = arith.constant dense<0.000000e+00> : vector<1x128xf32>
    %301 = tpu.matmul %298, %140, %cst_95 {dimension_numbers = #tpu.dot_dimension_numbers<[1], [0], [0], [1], [0, 0, 1, 1], [], []>} : vector<1x32xf32>, vector<32x128xf32>, vector<1x128xf32> -> vector<1x128xf32>
    %302 = arith.addf %300, %301 : vector<1x128xf32>
    %303 = vector.extract_strided_slice %302 {offsets = [0, 0], sizes = [1, 32], strides = [1, 1]} : vector<1x128xf32> to vector<1x32xf32>
    %304 = arith.negf %303 : vector<1x32xf32>
    %305 = math.exp %304 : vector<1x32xf32>
    %cst_96 = arith.constant 1.000000e+00 : f32
    %306 = vector.broadcast %cst_96 : f32 to vector<1x32xf32>
    %307 = arith.addf %306, %305 : vector<1x32xf32>
    %308 = arith.divf %306, %307 : vector<1x32xf32>
    %309 = vector.extract_strided_slice %302 {offsets = [0, 32], sizes = [1, 32], strides = [1, 1]} : vector<1x128xf32> to vector<1x32xf32>
    %310 = arith.negf %309 : vector<1x32xf32>
    %311 = math.exp %310 : vector<1x32xf32>
    %cst_97 = arith.constant 1.000000e+00 : f32
    %312 = vector.broadcast %cst_97 : f32 to vector<1x32xf32>
    %313 = arith.addf %312, %311 : vector<1x32xf32>
    %314 = arith.divf %312, %313 : vector<1x32xf32>
    %315 = vector.extract_strided_slice %302 {offsets = [0, 64], sizes = [1, 32], strides = [1, 1]} : vector<1x128xf32> to vector<1x32xf32>
    %316 = math.tanh %315 : vector<1x32xf32>
    %317 = vector.extract_strided_slice %302 {offsets = [0, 96], sizes = [1, 32], strides = [1, 1]} : vector<1x128xf32> to vector<1x32xf32>
    %318 = arith.negf %317 : vector<1x32xf32>
    %319 = math.exp %318 : vector<1x32xf32>
    %cst_98 = arith.constant 1.000000e+00 : f32
    %320 = vector.broadcast %cst_98 : f32 to vector<1x32xf32>
    %321 = arith.addf %320, %319 : vector<1x32xf32>
    %322 = arith.divf %320, %321 : vector<1x32xf32>
    %323 = arith.mulf %314, %299 : vector<1x32xf32>
    %324 = arith.mulf %308, %316 : vector<1x32xf32>
    %325 = arith.addf %323, %324 : vector<1x32xf32>
    %326 = math.tanh %325 : vector<1x32xf32>
    %327 = arith.mulf %322, %326 : vector<1x32xf32>
    %c5_i32 = arith.constant 5 : i32
    %328 = arith.cmpi sgt, %142, %c5_i32 : i32
    %329 = arith.select %328, %327, %298 : vector<1x32xf32>
    %330 = arith.select %328, %325, %299 : vector<1x32xf32>
    %331 = vector.extract_strided_slice %139 {offsets = [6, 0], sizes = [1, 128], strides = [1, 1]} : vector<12x128xf32> to vector<1x128xf32>
    %cst_99 = arith.constant dense<0.000000e+00> : vector<1x128xf32>
    %332 = tpu.matmul %329, %140, %cst_99 {dimension_numbers = #tpu.dot_dimension_numbers<[1], [0], [0], [1], [0, 0, 1, 1], [], []>} : vector<1x32xf32>, vector<32x128xf32>, vector<1x128xf32> -> vector<1x128xf32>
    %333 = arith.addf %331, %332 : vector<1x128xf32>
    %334 = vector.extract_strided_slice %333 {offsets = [0, 0], sizes = [1, 32], strides = [1, 1]} : vector<1x128xf32> to vector<1x32xf32>
    %335 = arith.negf %334 : vector<1x32xf32>
    %336 = math.exp %335 : vector<1x32xf32>
    %cst_100 = arith.constant 1.000000e+00 : f32
    %337 = vector.broadcast %cst_100 : f32 to vector<1x32xf32>
    %338 = arith.addf %337, %336 : vector<1x32xf32>
    %339 = arith.divf %337, %338 : vector<1x32xf32>
    %340 = vector.extract_strided_slice %333 {offsets = [0, 32], sizes = [1, 32], strides = [1, 1]} : vector<1x128xf32> to vector<1x32xf32>
    %341 = arith.negf %340 : vector<1x32xf32>
    %342 = math.exp %341 : vector<1x32xf32>
    %cst_101 = arith.constant 1.000000e+00 : f32
    %343 = vector.broadcast %cst_101 : f32 to vector<1x32xf32>
    %344 = arith.addf %343, %342 : vector<1x32xf32>
    %345 = arith.divf %343, %344 : vector<1x32xf32>
    %346 = vector.extract_strided_slice %333 {offsets = [0, 64], sizes = [1, 32], strides = [1, 1]} : vector<1x128xf32> to vector<1x32xf32>
    %347 = math.tanh %346 : vector<1x32xf32>
    %348 = vector.extract_strided_slice %333 {offsets = [0, 96], sizes = [1, 32], strides = [1, 1]} : vector<1x128xf32> to vector<1x32xf32>
    %349 = arith.negf %348 : vector<1x32xf32>
    %350 = math.exp %349 : vector<1x32xf32>
    %cst_102 = arith.constant 1.000000e+00 : f32
    %351 = vector.broadcast %cst_102 : f32 to vector<1x32xf32>
    %352 = arith.addf %351, %350 : vector<1x32xf32>
    %353 = arith.divf %351, %352 : vector<1x32xf32>
    %354 = arith.mulf %345, %330 : vector<1x32xf32>
    %355 = arith.mulf %339, %347 : vector<1x32xf32>
    %356 = arith.addf %354, %355 : vector<1x32xf32>
    %357 = math.tanh %356 : vector<1x32xf32>
    %358 = arith.mulf %353, %357 : vector<1x32xf32>
    %c6_i32 = arith.constant 6 : i32
    %359 = arith.cmpi sgt, %142, %c6_i32 : i32
    %360 = arith.select %359, %358, %329 : vector<1x32xf32>
    %361 = arith.select %359, %356, %330 : vector<1x32xf32>
    %362 = vector.extract_strided_slice %139 {offsets = [7, 0], sizes = [1, 128], strides = [1, 1]} : vector<12x128xf32> to vector<1x128xf32>
    %cst_103 = arith.constant dense<0.000000e+00> : vector<1x128xf32>
    %363 = tpu.matmul %360, %140, %cst_103 {dimension_numbers = #tpu.dot_dimension_numbers<[1], [0], [0], [1], [0, 0, 1, 1], [], []>} : vector<1x32xf32>, vector<32x128xf32>, vector<1x128xf32> -> vector<1x128xf32>
    %364 = arith.addf %362, %363 : vector<1x128xf32>
    %365 = vector.extract_strided_slice %364 {offsets = [0, 0], sizes = [1, 32], strides = [1, 1]} : vector<1x128xf32> to vector<1x32xf32>
    %366 = arith.negf %365 : vector<1x32xf32>
    %367 = math.exp %366 : vector<1x32xf32>
    %cst_104 = arith.constant 1.000000e+00 : f32
    %368 = vector.broadcast %cst_104 : f32 to vector<1x32xf32>
    %369 = arith.addf %368, %367 : vector<1x32xf32>
    %370 = arith.divf %368, %369 : vector<1x32xf32>
    %371 = vector.extract_strided_slice %364 {offsets = [0, 32], sizes = [1, 32], strides = [1, 1]} : vector<1x128xf32> to vector<1x32xf32>
    %372 = arith.negf %371 : vector<1x32xf32>
    %373 = math.exp %372 : vector<1x32xf32>
    %cst_105 = arith.constant 1.000000e+00 : f32
    %374 = vector.broadcast %cst_105 : f32 to vector<1x32xf32>
    %375 = arith.addf %374, %373 : vector<1x32xf32>
    %376 = arith.divf %374, %375 : vector<1x32xf32>
    %377 = vector.extract_strided_slice %364 {offsets = [0, 64], sizes = [1, 32], strides = [1, 1]} : vector<1x128xf32> to vector<1x32xf32>
    %378 = math.tanh %377 : vector<1x32xf32>
    %379 = vector.extract_strided_slice %364 {offsets = [0, 96], sizes = [1, 32], strides = [1, 1]} : vector<1x128xf32> to vector<1x32xf32>
    %380 = arith.negf %379 : vector<1x32xf32>
    %381 = math.exp %380 : vector<1x32xf32>
    %cst_106 = arith.constant 1.000000e+00 : f32
    %382 = vector.broadcast %cst_106 : f32 to vector<1x32xf32>
    %383 = arith.addf %382, %381 : vector<1x32xf32>
    %384 = arith.divf %382, %383 : vector<1x32xf32>
    %385 = arith.mulf %376, %361 : vector<1x32xf32>
    %386 = arith.mulf %370, %378 : vector<1x32xf32>
    %387 = arith.addf %385, %386 : vector<1x32xf32>
    %388 = math.tanh %387 : vector<1x32xf32>
    %389 = arith.mulf %384, %388 : vector<1x32xf32>
    %c7_i32 = arith.constant 7 : i32
    %390 = arith.cmpi sgt, %142, %c7_i32 : i32
    %391 = arith.select %390, %389, %360 : vector<1x32xf32>
    %392 = arith.select %390, %387, %361 : vector<1x32xf32>
    %393 = vector.extract_strided_slice %139 {offsets = [8, 0], sizes = [1, 128], strides = [1, 1]} : vector<12x128xf32> to vector<1x128xf32>
    %cst_107 = arith.constant dense<0.000000e+00> : vector<1x128xf32>
    %394 = tpu.matmul %391, %140, %cst_107 {dimension_numbers = #tpu.dot_dimension_numbers<[1], [0], [0], [1], [0, 0, 1, 1], [], []>} : vector<1x32xf32>, vector<32x128xf32>, vector<1x128xf32> -> vector<1x128xf32>
    %395 = arith.addf %393, %394 : vector<1x128xf32>
    %396 = vector.extract_strided_slice %395 {offsets = [0, 0], sizes = [1, 32], strides = [1, 1]} : vector<1x128xf32> to vector<1x32xf32>
    %397 = arith.negf %396 : vector<1x32xf32>
    %398 = math.exp %397 : vector<1x32xf32>
    %cst_108 = arith.constant 1.000000e+00 : f32
    %399 = vector.broadcast %cst_108 : f32 to vector<1x32xf32>
    %400 = arith.addf %399, %398 : vector<1x32xf32>
    %401 = arith.divf %399, %400 : vector<1x32xf32>
    %402 = vector.extract_strided_slice %395 {offsets = [0, 32], sizes = [1, 32], strides = [1, 1]} : vector<1x128xf32> to vector<1x32xf32>
    %403 = arith.negf %402 : vector<1x32xf32>
    %404 = math.exp %403 : vector<1x32xf32>
    %cst_109 = arith.constant 1.000000e+00 : f32
    %405 = vector.broadcast %cst_109 : f32 to vector<1x32xf32>
    %406 = arith.addf %405, %404 : vector<1x32xf32>
    %407 = arith.divf %405, %406 : vector<1x32xf32>
    %408 = vector.extract_strided_slice %395 {offsets = [0, 64], sizes = [1, 32], strides = [1, 1]} : vector<1x128xf32> to vector<1x32xf32>
    %409 = math.tanh %408 : vector<1x32xf32>
    %410 = vector.extract_strided_slice %395 {offsets = [0, 96], sizes = [1, 32], strides = [1, 1]} : vector<1x128xf32> to vector<1x32xf32>
    %411 = arith.negf %410 : vector<1x32xf32>
    %412 = math.exp %411 : vector<1x32xf32>
    %cst_110 = arith.constant 1.000000e+00 : f32
    %413 = vector.broadcast %cst_110 : f32 to vector<1x32xf32>
    %414 = arith.addf %413, %412 : vector<1x32xf32>
    %415 = arith.divf %413, %414 : vector<1x32xf32>
    %416 = arith.mulf %407, %392 : vector<1x32xf32>
    %417 = arith.mulf %401, %409 : vector<1x32xf32>
    %418 = arith.addf %416, %417 : vector<1x32xf32>
    %419 = math.tanh %418 : vector<1x32xf32>
    %420 = arith.mulf %415, %419 : vector<1x32xf32>
    %c8_i32 = arith.constant 8 : i32
    %421 = arith.cmpi sgt, %142, %c8_i32 : i32
    %422 = arith.select %421, %420, %391 : vector<1x32xf32>
    %423 = arith.select %421, %418, %392 : vector<1x32xf32>
    %424 = vector.extract_strided_slice %139 {offsets = [9, 0], sizes = [1, 128], strides = [1, 1]} : vector<12x128xf32> to vector<1x128xf32>
    %cst_111 = arith.constant dense<0.000000e+00> : vector<1x128xf32>
    %425 = tpu.matmul %422, %140, %cst_111 {dimension_numbers = #tpu.dot_dimension_numbers<[1], [0], [0], [1], [0, 0, 1, 1], [], []>} : vector<1x32xf32>, vector<32x128xf32>, vector<1x128xf32> -> vector<1x128xf32>
    %426 = arith.addf %424, %425 : vector<1x128xf32>
    %427 = vector.extract_strided_slice %426 {offsets = [0, 0], sizes = [1, 32], strides = [1, 1]} : vector<1x128xf32> to vector<1x32xf32>
    %428 = arith.negf %427 : vector<1x32xf32>
    %429 = math.exp %428 : vector<1x32xf32>
    %cst_112 = arith.constant 1.000000e+00 : f32
    %430 = vector.broadcast %cst_112 : f32 to vector<1x32xf32>
    %431 = arith.addf %430, %429 : vector<1x32xf32>
    %432 = arith.divf %430, %431 : vector<1x32xf32>
    %433 = vector.extract_strided_slice %426 {offsets = [0, 32], sizes = [1, 32], strides = [1, 1]} : vector<1x128xf32> to vector<1x32xf32>
    %434 = arith.negf %433 : vector<1x32xf32>
    %435 = math.exp %434 : vector<1x32xf32>
    %cst_113 = arith.constant 1.000000e+00 : f32
    %436 = vector.broadcast %cst_113 : f32 to vector<1x32xf32>
    %437 = arith.addf %436, %435 : vector<1x32xf32>
    %438 = arith.divf %436, %437 : vector<1x32xf32>
    %439 = vector.extract_strided_slice %426 {offsets = [0, 64], sizes = [1, 32], strides = [1, 1]} : vector<1x128xf32> to vector<1x32xf32>
    %440 = math.tanh %439 : vector<1x32xf32>
    %441 = vector.extract_strided_slice %426 {offsets = [0, 96], sizes = [1, 32], strides = [1, 1]} : vector<1x128xf32> to vector<1x32xf32>
    %442 = arith.negf %441 : vector<1x32xf32>
    %443 = math.exp %442 : vector<1x32xf32>
    %cst_114 = arith.constant 1.000000e+00 : f32
    %444 = vector.broadcast %cst_114 : f32 to vector<1x32xf32>
    %445 = arith.addf %444, %443 : vector<1x32xf32>
    %446 = arith.divf %444, %445 : vector<1x32xf32>
    %447 = arith.mulf %438, %423 : vector<1x32xf32>
    %448 = arith.mulf %432, %440 : vector<1x32xf32>
    %449 = arith.addf %447, %448 : vector<1x32xf32>
    %450 = math.tanh %449 : vector<1x32xf32>
    %451 = arith.mulf %446, %450 : vector<1x32xf32>
    %c9_i32 = arith.constant 9 : i32
    %452 = arith.cmpi sgt, %142, %c9_i32 : i32
    %453 = arith.select %452, %451, %422 : vector<1x32xf32>
    %454 = arith.select %452, %449, %423 : vector<1x32xf32>
    %455 = vector.extract_strided_slice %139 {offsets = [10, 0], sizes = [1, 128], strides = [1, 1]} : vector<12x128xf32> to vector<1x128xf32>
    %cst_115 = arith.constant dense<0.000000e+00> : vector<1x128xf32>
    %456 = tpu.matmul %453, %140, %cst_115 {dimension_numbers = #tpu.dot_dimension_numbers<[1], [0], [0], [1], [0, 0, 1, 1], [], []>} : vector<1x32xf32>, vector<32x128xf32>, vector<1x128xf32> -> vector<1x128xf32>
    %457 = arith.addf %455, %456 : vector<1x128xf32>
    %458 = vector.extract_strided_slice %457 {offsets = [0, 0], sizes = [1, 32], strides = [1, 1]} : vector<1x128xf32> to vector<1x32xf32>
    %459 = arith.negf %458 : vector<1x32xf32>
    %460 = math.exp %459 : vector<1x32xf32>
    %cst_116 = arith.constant 1.000000e+00 : f32
    %461 = vector.broadcast %cst_116 : f32 to vector<1x32xf32>
    %462 = arith.addf %461, %460 : vector<1x32xf32>
    %463 = arith.divf %461, %462 : vector<1x32xf32>
    %464 = vector.extract_strided_slice %457 {offsets = [0, 32], sizes = [1, 32], strides = [1, 1]} : vector<1x128xf32> to vector<1x32xf32>
    %465 = arith.negf %464 : vector<1x32xf32>
    %466 = math.exp %465 : vector<1x32xf32>
    %cst_117 = arith.constant 1.000000e+00 : f32
    %467 = vector.broadcast %cst_117 : f32 to vector<1x32xf32>
    %468 = arith.addf %467, %466 : vector<1x32xf32>
    %469 = arith.divf %467, %468 : vector<1x32xf32>
    %470 = vector.extract_strided_slice %457 {offsets = [0, 64], sizes = [1, 32], strides = [1, 1]} : vector<1x128xf32> to vector<1x32xf32>
    %471 = math.tanh %470 : vector<1x32xf32>
    %472 = vector.extract_strided_slice %457 {offsets = [0, 96], sizes = [1, 32], strides = [1, 1]} : vector<1x128xf32> to vector<1x32xf32>
    %473 = arith.negf %472 : vector<1x32xf32>
    %474 = math.exp %473 : vector<1x32xf32>
    %cst_118 = arith.constant 1.000000e+00 : f32
    %475 = vector.broadcast %cst_118 : f32 to vector<1x32xf32>
    %476 = arith.addf %475, %474 : vector<1x32xf32>
    %477 = arith.divf %475, %476 : vector<1x32xf32>
    %478 = arith.mulf %469, %454 : vector<1x32xf32>
    %479 = arith.mulf %463, %471 : vector<1x32xf32>
    %480 = arith.addf %478, %479 : vector<1x32xf32>
    %481 = math.tanh %480 : vector<1x32xf32>
    %482 = arith.mulf %477, %481 : vector<1x32xf32>
    %c10_i32 = arith.constant 10 : i32
    %483 = arith.cmpi sgt, %142, %c10_i32 : i32
    %484 = arith.select %483, %482, %453 : vector<1x32xf32>
    %485 = arith.select %483, %480, %454 : vector<1x32xf32>
    %486 = vector.extract_strided_slice %139 {offsets = [11, 0], sizes = [1, 128], strides = [1, 1]} : vector<12x128xf32> to vector<1x128xf32>
    %cst_119 = arith.constant dense<0.000000e+00> : vector<1x128xf32>
    %487 = tpu.matmul %484, %140, %cst_119 {dimension_numbers = #tpu.dot_dimension_numbers<[1], [0], [0], [1], [0, 0, 1, 1], [], []>} : vector<1x32xf32>, vector<32x128xf32>, vector<1x128xf32> -> vector<1x128xf32>
    %488 = arith.addf %486, %487 : vector<1x128xf32>
    %489 = vector.extract_strided_slice %488 {offsets = [0, 0], sizes = [1, 32], strides = [1, 1]} : vector<1x128xf32> to vector<1x32xf32>
    %490 = arith.negf %489 : vector<1x32xf32>
    %491 = math.exp %490 : vector<1x32xf32>
    %cst_120 = arith.constant 1.000000e+00 : f32
    %492 = vector.broadcast %cst_120 : f32 to vector<1x32xf32>
    %493 = arith.addf %492, %491 : vector<1x32xf32>
    %494 = arith.divf %492, %493 : vector<1x32xf32>
    %495 = vector.extract_strided_slice %488 {offsets = [0, 32], sizes = [1, 32], strides = [1, 1]} : vector<1x128xf32> to vector<1x32xf32>
    %496 = arith.negf %495 : vector<1x32xf32>
    %497 = math.exp %496 : vector<1x32xf32>
    %cst_121 = arith.constant 1.000000e+00 : f32
    %498 = vector.broadcast %cst_121 : f32 to vector<1x32xf32>
    %499 = arith.addf %498, %497 : vector<1x32xf32>
    %500 = arith.divf %498, %499 : vector<1x32xf32>
    %501 = vector.extract_strided_slice %488 {offsets = [0, 64], sizes = [1, 32], strides = [1, 1]} : vector<1x128xf32> to vector<1x32xf32>
    %502 = math.tanh %501 : vector<1x32xf32>
    %503 = vector.extract_strided_slice %488 {offsets = [0, 96], sizes = [1, 32], strides = [1, 1]} : vector<1x128xf32> to vector<1x32xf32>
    %504 = arith.negf %503 : vector<1x32xf32>
    %505 = math.exp %504 : vector<1x32xf32>
    %cst_122 = arith.constant 1.000000e+00 : f32
    %506 = vector.broadcast %cst_122 : f32 to vector<1x32xf32>
    %507 = arith.addf %506, %505 : vector<1x32xf32>
    %508 = arith.divf %506, %507 : vector<1x32xf32>
    %509 = arith.mulf %500, %485 : vector<1x32xf32>
    %510 = arith.mulf %494, %502 : vector<1x32xf32>
    %511 = arith.addf %509, %510 : vector<1x32xf32>
    %512 = math.tanh %511 : vector<1x32xf32>
    %513 = arith.mulf %508, %512 : vector<1x32xf32>
    %c11_i32 = arith.constant 11 : i32
    %514 = arith.cmpi sgt, %142, %c11_i32 : i32
    %515 = arith.select %514, %513, %484 : vector<1x32xf32>
    %c0_123 = arith.constant 0 : index
    %c0_124 = arith.constant 0 : index
    %c0_125 = arith.constant 0 : index
    %516 = vector.load %arg24[%c0_123, %c0_124, %c0_125] : memref<1x1x32xf32, #tpu.memory_space<vmem>>, vector<1x1x32xf32>
    %517 = vector.shape_cast %516 : vector<1x1x32xf32> to vector<1x32xf32>
    %518 = vector.shape_cast %515 : vector<1x32xf32> to vector<1x1x32xf32>
    tpu.vector_store %arg24[%c0_123, %c0_124, %c0_125], %518 {strides = array<i32>} : memref<1x1x32xf32, #tpu.memory_space<vmem>>, vector<1x1x32xf32>,
    return
  }
  func.func @transform_0(%arg0: i32, %arg1: memref<3xi32, #tpu.memory_space<smem>>) -> (i32, i32, i32) {
    %c0_i32 = arith.constant 0 : i32
    %c0_i32_0 = arith.constant 0 : i32
    %c0_i32_1 = arith.constant 0 : i32
    return %arg0, %c0_i32, %c0_i32_0 : i32, i32, i32
  }
  func.func @transform_1(%arg0: i32, %arg1: memref<3xi32, #tpu.memory_space<smem>>) -> (i32, i32) {
    %c0_i32 = arith.constant 0 : i32
    %c0_i32_0 = arith.constant 0 : i32
    %c0_i32_1 = arith.constant 0 : i32
    return %c0_i32, %c0_i32_0 : i32, i32
  }
  func.func @transform_2(%arg0: i32, %arg1: memref<3xi32, #tpu.memory_space<smem>>) -> (i32, i32) {
    %c0_i32 = arith.constant 0 : i32
    %c0_i32_0 = arith.constant 0 : i32
    %c0_i32_1 = arith.constant 0 : i32
    return %c0_i32, %c0_i32_0 : i32, i32
  }
  func.func @transform_3(%arg0: i32, %arg1: memref<3xi32, #tpu.memory_space<smem>>) -> (i32, i32) {
    %c0_i32 = arith.constant 0 : i32
    %c0_i32_0 = arith.constant 0 : i32
    %c0_i32_1 = arith.constant 0 : i32
    return %c0_i32, %c0_i32_0 : i32, i32
  }
  func.func @transform_4(%arg0: i32, %arg1: memref<3xi32, #tpu.memory_space<smem>>) -> (i32, i32) {
    %c0_i32 = arith.constant 0 : i32
    %c0_i32_0 = arith.constant 0 : i32
    %c0_i32_1 = arith.constant 0 : i32
    return %c0_i32, %c0_i32_0 : i32, i32
  }
  func.func @transform_5(%arg0: i32, %arg1: memref<3xi32, #tpu.memory_space<smem>>) -> (i32, i32) {
    %c0_i32 = arith.constant 0 : i32
    %c0_i32_0 = arith.constant 0 : i32
    %c0_i32_1 = arith.constant 0 : i32
    return %c0_i32, %c0_i32_0 : i32, i32
  }
  func.func @transform_6(%arg0: i32, %arg1: memref<3xi32, #tpu.memory_space<smem>>) -> (i32, i32) {
    %c0_i32 = arith.constant 0 : i32
    %c0_i32_0 = arith.constant 0 : i32
    %c0_i32_1 = arith.constant 0 : i32
    return %c0_i32, %c0_i32_0 : i32, i32
  }
  func.func @transform_7(%arg0: i32, %arg1: memref<3xi32, #tpu.memory_space<smem>>) -> (i32, i32) {
    %c0_i32 = arith.constant 0 : i32
    %c0_i32_0 = arith.constant 0 : i32
    %c0_i32_1 = arith.constant 0 : i32
    return %c0_i32, %c0_i32_0 : i32, i32
  }
  func.func @transform_8(%arg0: i32, %arg1: memref<3xi32, #tpu.memory_space<smem>>) -> (i32, i32) {
    %c0_i32 = arith.constant 0 : i32
    %c0_i32_0 = arith.constant 0 : i32
    %c0_i32_1 = arith.constant 0 : i32
    return %c0_i32, %c0_i32_0 : i32, i32
  }
  func.func @transform_9(%arg0: i32, %arg1: memref<3xi32, #tpu.memory_space<smem>>) -> (i32, i32) {
    %c0_i32 = arith.constant 0 : i32
    %c0_i32_0 = arith.constant 0 : i32
    %c0_i32_1 = arith.constant 0 : i32
    return %c0_i32, %c0_i32_0 : i32, i32
  }
  func.func @transform_10(%arg0: i32, %arg1: memref<3xi32, #tpu.memory_space<smem>>) -> (i32, i32) {
    %c0_i32 = arith.constant 0 : i32
    %c0_i32_0 = arith.constant 0 : i32
    %c0_i32_1 = arith.constant 0 : i32
    return %c0_i32, %c0_i32_0 : i32, i32
  }
  func.func @transform_11(%arg0: i32, %arg1: memref<3xi32, #tpu.memory_space<smem>>) -> (i32, i32) {
    %c0_i32 = arith.constant 0 : i32
    %c0_i32_0 = arith.constant 0 : i32
    %c0_i32_1 = arith.constant 0 : i32
    return %c0_i32, %c0_i32_0 : i32, i32
  }
  func.func @transform_12(%arg0: i32, %arg1: memref<3xi32, #tpu.memory_space<smem>>) -> (i32, i32) {
    %c0_i32 = arith.constant 0 : i32
    %c0_i32_0 = arith.constant 0 : i32
    %c0_i32_1 = arith.constant 0 : i32
    return %c0_i32, %c0_i32_0 : i32, i32
  }
  func.func @transform_13(%arg0: i32, %arg1: memref<3xi32, #tpu.memory_space<smem>>) -> (i32, i32) {
    %c0_i32 = arith.constant 0 : i32
    %c0_i32_0 = arith.constant 0 : i32
    %c0_i32_1 = arith.constant 0 : i32
    return %c0_i32, %c0_i32_0 : i32, i32
  }
  func.func @transform_14(%arg0: i32, %arg1: memref<3xi32, #tpu.memory_space<smem>>) -> (i32, i32) {
    %c0_i32 = arith.constant 0 : i32
    %c0_i32_0 = arith.constant 0 : i32
    %c0_i32_1 = arith.constant 0 : i32
    return %c0_i32, %c0_i32_0 : i32, i32
  }
  func.func @transform_15(%arg0: i32, %arg1: memref<3xi32, #tpu.memory_space<smem>>) -> (i32, i32) {
    %c0_i32 = arith.constant 0 : i32
    %c0_i32_0 = arith.constant 0 : i32
    %c0_i32_1 = arith.constant 0 : i32
    return %c0_i32, %c0_i32_0 : i32, i32
  }
  func.func @transform_16(%arg0: i32, %arg1: memref<3xi32, #tpu.memory_space<smem>>) -> (i32, i32) {
    %c0_i32 = arith.constant 0 : i32
    %c0_i32_0 = arith.constant 0 : i32
    %c0_i32_1 = arith.constant 0 : i32
    return %c0_i32, %c0_i32_0 : i32, i32
  }
  func.func @transform_17(%arg0: i32, %arg1: memref<3xi32, #tpu.memory_space<smem>>) -> (i32, i32) {
    %c0_i32 = arith.constant 0 : i32
    %c0_i32_0 = arith.constant 0 : i32
    %c0_i32_1 = arith.constant 0 : i32
    return %c0_i32, %c0_i32_0 : i32, i32
  }
  func.func @transform_18(%arg0: i32, %arg1: memref<3xi32, #tpu.memory_space<smem>>) -> (i32, i32) {
    %c0_i32 = arith.constant 0 : i32
    %c0_i32_0 = arith.constant 0 : i32
    %c0_i32_1 = arith.constant 0 : i32
    return %c0_i32, %c0_i32_0 : i32, i32
  }
  func.func @transform_19(%arg0: i32, %arg1: memref<3xi32, #tpu.memory_space<smem>>) -> (i32, i32) {
    %c0_i32 = arith.constant 0 : i32
    %c0_i32_0 = arith.constant 0 : i32
    %c0_i32_1 = arith.constant 0 : i32
    return %c0_i32, %c0_i32_0 : i32, i32
  }
  func.func @transform_20(%arg0: i32, %arg1: memref<3xi32, #tpu.memory_space<smem>>) -> (i32, i32) {
    %c0_i32 = arith.constant 0 : i32
    %c0_i32_0 = arith.constant 0 : i32
    %c0_i32_1 = arith.constant 0 : i32
    return %c0_i32, %c0_i32_0 : i32, i32
  }
  func.func @transform_21(%arg0: i32, %arg1: memref<3xi32, #tpu.memory_space<smem>>) -> (i32, i32) {
    %c0_i32 = arith.constant 0 : i32
    %c0_i32_0 = arith.constant 0 : i32
    %c0_i32_1 = arith.constant 0 : i32
    return %c0_i32, %c0_i32_0 : i32, i32
  }
  func.func @transform_22(%arg0: i32, %arg1: memref<3xi32, #tpu.memory_space<smem>>) -> (i32, i32, i32) {
    %c0_i32 = arith.constant 0 : i32
    %c0_i32_0 = arith.constant 0 : i32
    %c0_i32_1 = arith.constant 0 : i32
    return %arg0, %c0_i32, %c0_i32_0 : i32, i32, i32
  }
}

</mosaic_0001>

<llo_original>
// kernel: tpu_custom_call.1
$region0: #{tpu_custom_call.1}
  #allocation0 [shape = 'u32[]', space=smem, size = 0x4, offset = 0x4, fixed_abs, tag = 'smem constant byte address 0x4 - core index']
  #allocation1 [shape = 'u32[144,128]{1,0:T(1,128)}', space=vmem, size = 0x12000, scoped, tag = 'internal scratch']
  #allocation2 [shape = 's32[1]{0}', space=sflag, size = 0x4, scoped, tag = 'scoped memory for tpu_custom_call.1']
  #allocation3 [shape = 'u8[512]{0}', space=smem, size = 0x200, scoped, tag = 'prefetched SMEM operand 0']
  %s0 = inlined_call_operand.vmem [shape: s32[3], index: 0, kind: input, shape index: {}]
  %s1 = inlined_call_operand.vmem [shape: f32[3,12,192], index: 1, kind: input, shape index: {}]
  %s2 = inlined_call_operand.vmem [shape: f32[12,32], index: 2, kind: input, shape index: {}]
  %s3 = inlined_call_operand.vmem [shape: f32[12,12], index: 3, kind: input, shape index: {}]
  %s4 = inlined_call_operand.vmem [shape: f32[192,32], index: 4, kind: input, shape index: {}]
  %s5 = inlined_call_operand.vmem [shape: f32[1,32], index: 5, kind: input, shape index: {}]
  %s6 = inlined_call_operand.vmem [shape: f32[32,96], index: 6, kind: input, shape index: {}]
  %s7 = inlined_call_operand.vmem [shape: f32[1,96], index: 7, kind: input, shape index: {}]
  %s8 = inlined_call_operand.vmem [shape: f32[32,32], index: 8, kind: input, shape index: {}]
  %s9 = inlined_call_operand.vmem [shape: f32[1,32], index: 9, kind: input, shape index: {}]
  %s10 = inlined_call_operand.vmem [shape: f32[32,64], index: 10, kind: input, shape index: {}]
  %s11 = inlined_call_operand.vmem [shape: f32[1,64], index: 11, kind: input, shape index: {}]
  %s12 = inlined_call_operand.vmem [shape: f32[64,32], index: 12, kind: input, shape index: {}]
  %s13 = inlined_call_operand.vmem [shape: f32[1,32], index: 13, kind: input, shape index: {}]
  %s14 = inlined_call_operand.vmem [shape: f32[1,32], index: 14, kind: input, shape index: {}]
  %s15 = inlined_call_operand.vmem [shape: f32[1,32], index: 15, kind: input, shape index: {}]
  %s16 = inlined_call_operand.vmem [shape: f32[1,32], index: 16, kind: input, shape index: {}]
  %s17 = inlined_call_operand.vmem [shape: f32[1,32], index: 17, kind: input, shape index: {}]
  %s18 = inlined_call_operand.vmem [shape: f32[1,32], index: 18, kind: input, shape index: {}]
  %s19 = inlined_call_operand.vmem [shape: f32[1,32], index: 19, kind: input, shape index: {}]
  %s20 = inlined_call_operand.vmem [shape: f32[32,128], index: 20, kind: input, shape index: {}]
  %s21 = inlined_call_operand.vmem [shape: f32[32,128], index: 21, kind: input, shape index: {}]
  %s22 = inlined_call_operand.vmem [shape: f32[1,128], index: 22, kind: input, shape index: {}]
  %s23 = inlined_call_operand.hbm [shape: f32[3,1,32], index: 23, kind: output, shape index: {}]
  %s24 = sld [smem:[#allocation0]]
  $region121: #{tpu_custom_call.1} parent=0
    _
  %s26 = ssub.s32 1, %s24
  %s27 = scalar_select 0, %s26, %s24
  %s28 = sshll.u32 %s0, 4
  %s29 = int_to_ptr.vmem [resolvable:$true] %s28
  %31 = dma.vmem_to_smem %s29, 16, [#allocation3], [#allocation2]
  %32 = dma.done [#allocation2], 16
  %33 = sfence
  $region1: #{tpu_custom_call.1} parent=0
    #allocation4 [shape = 'u8[1024]{0}', space=vmem, size = 0x400, scoped, tag = 'output window, operand 0']
    #allocation5 [shape = 's32[2]{0}', space=sflag, size = 0x8, scoped, tag = 'scoped memory for tpu_custom_call.1']
    %34 = vsyncpa [#allocation5], 0
    %s35 = scalar_lea.sflag [#allocation5], 1
    %36 = vsyncpa %s35, 0
    loop: start=0, step=1, limit=5
    $region2: #{tpu_custom_call.1} parent=1 // loop_pre_header
      _
    $region3: #{tpu_custom_call.1} parent=1 // loop_header
      %s38 = sphi 0, %s42
      %p39 = scmp.ge.s32.totalorder %s38, 5
      %s48 = sphi 0, %s50
      %s51 = sphi 0, %s48
      %s52 = sphi 0, %s51
      %s68 = sphi 0, %s52
      %s72 = sphi 0, %s72
      %s74 = sphi 0, %s72
      %s75 = sphi 0, %s74
      %s89 = sphi 0, %s75
      %s93 = sphi 0, %s93
      %s95 = sphi 0, %s93
      %s96 = sphi 0, %s95
      %s110 = sphi 0, %s96
      %s114 = sphi 0, %s114
      %s116 = sphi 0, %s114
      %s117 = sphi 0, %s116
      %s131 = sphi 0, %s117
      %s135 = sphi 0, %s135
      %s137 = sphi 0, %s135
      %s138 = sphi 0, %s137
      %s152 = sphi 0, %s138
      %s156 = sphi 0, %s156
      %s158 = sphi 0, %s156
      %s159 = sphi 0, %s158
      %s173 = sphi 0, %s159
      %s177 = sphi 0, %s177
      %s179 = sphi 0, %s177
      %s180 = sphi 0, %s179
      %s194 = sphi 0, %s180
      %s198 = sphi 0, %s198
      %s200 = sphi 0, %s198
      %s201 = sphi 0, %s200
      %s215 = sphi 0, %s201
      %s219 = sphi 0, %s219
      %s221 = sphi 0, %s219
      %s222 = sphi 0, %s221
      %s236 = sphi 0, %s222
      %s240 = sphi 0, %s240
      %s242 = sphi 0, %s240
      %s243 = sphi 0, %s242
      %s257 = sphi 0, %s243
      %s261 = sphi 0, %s261
      %s263 = sphi 0, %s261
      %s264 = sphi 0, %s263
      %s278 = sphi 0, %s264
      %s282 = sphi 0, %s282
      %s284 = sphi 0, %s282
      %s285 = sphi 0, %s284
      %s299 = sphi 0, %s285
      %s303 = sphi 0, %s303
      %s305 = sphi 0, %s303
      %s306 = sphi 0, %s305
      %s320 = sphi 0, %s306
      %s324 = sphi 0, %s324
      %s326 = sphi 0, %s324
      %s327 = sphi 0, %s326
      %s341 = sphi 0, %s327
      %s345 = sphi 0, %s345
      %s347 = sphi 0, %s345
      %s348 = sphi 0, %s347
      %s362 = sphi 0, %s348
      %s366 = sphi 0, %s366
      %s368 = sphi 0, %s366
      %s369 = sphi 0, %s368
      %s383 = sphi 0, %s369
      %s387 = sphi 0, %s387
      %s389 = sphi 0, %s387
      %s390 = sphi 0, %s389
      %s404 = sphi 0, %s390
      %s408 = sphi 0, %s408
      %s410 = sphi 0, %s408
      %s411 = sphi 0, %s410
      %s425 = sphi 0, %s411
      %s429 = sphi 0, %s429
      %s431 = sphi 0, %s429
      %s432 = sphi 0, %s431
      %s446 = sphi 0, %s432
      %s450 = sphi 0, %s450
      %s452 = sphi 0, %s450
      %s453 = sphi 0, %s452
      %s467 = sphi 0, %s453
      %s471 = sphi 0, %s471
      %s473 = sphi 0, %s471
      %s474 = sphi 0, %s473
      %s488 = sphi 0, %s474
      %s492 = sphi 0, %s492
      %s494 = sphi 0, %s492
      %s495 = sphi 0, %s494
      %s509 = sphi 0, %s495
      %s515 = sphi 0, %s517
      %s518 = sphi 0, %s515
      %s519 = sphi 0, %s518
      %s535 = sphi 0, %s519
    $region4: #{tpu_custom_call.1} parent=1 // loop_header_branch
      %41 = sbr.rel (%p39) target = $region8
    $region5: #{tpu_custom_call.1} parent=1 // loop_body
      %s43 = ssub.s32 %s38, 1
      %s44 = ssub.s32 %s38, 2
      %s45 = sadd.s32 %s38, 1
      %s46 = ssub.s32 %s38, %s45
      %p47 = scmp.eq.s32.totalorder %s46, 0
      %s49 = sadd.s32 %s48, 1
      %s50 = scalar_select %p47, %s48, %s49
      %p53 = pneg %p47
      %p54 = scmp.eq.s32.totalorder %s38, 2
      %p55 = por %p53, %p54
      %p56 = scmp.ne.s32.totalorder %s48, %s51
      %p57 = scmp.eq.s32.totalorder %s38, 0
      %p58 = por %p56, %p57
      %p59 = scmp.ne.s32.totalorder %s48, %s51
      %p60 = scmp.eq.s32.totalorder %s43, 2
      %p61 = por %p59, %p60
      %p62 = scmp.ne.s32.totalorder %s51, %s52
      %p63 = scmp.eq.s32.totalorder %s43, 0
      %p64 = por %p62, %p63
      %p65 = scmp.ne.s32.totalorder %s51, %s52
      %p66 = scmp.eq.s32.totalorder %s44, 2
      %p67 = por %p65, %p66
      %p69 = scmp.ne.s32.totalorder %s52, %s68
      %p70 = scmp.eq.s32.totalorder %s44, 0
      %p71 = por %p69, %p70
      %s73 = sadd.s32 %s72, 1
      %p76 = scmp.eq.s32.totalorder %s38, 2
      %p77 = scmp.ne.s32.totalorder %s72, %s74
      %p78 = scmp.eq.s32.totalorder %s38, 0
      %p79 = por %p77, %p78
      %p80 = scmp.ne.s32.totalorder %s72, %s74
      %p81 = scmp.eq.s32.totalorder %s43, 2
      %p82 = por %p80, %p81
      %p83 = scmp.ne.s32.totalorder %s74, %s75
      %p84 = scmp.eq.s32.totalorder %s43, 0
      %p85 = por %p83, %p84
      %p86 = scmp.ne.s32.totalorder %s74, %s75
      %p87 = scmp.eq.s32.totalorder %s44, 2
      %p88 = por %p86, %p87
      %p90 = scmp.ne.s32.totalorder %s75, %s89
      %p91 = scmp.eq.s32.totalorder %s44, 0
      %p92 = por %p90, %p91
      %s94 = sadd.s32 %s93, 1
      %p97 = scmp.eq.s32.totalorder %s38, 2
      %p98 = scmp.ne.s32.totalorder %s93, %s95
      %p99 = scmp.eq.s32.totalorder %s38, 0
      %p100 = por %p98, %p99
      %p101 = scmp.ne.s32.totalorder %s93, %s95
      %p102 = scmp.eq.s32.totalorder %s43, 2
      %p103 = por %p101, %p102
      %p104 = scmp.ne.s32.totalorder %s95, %s96
      %p105 = scmp.eq.s32.totalorder %s43, 0
      %p106 = por %p104, %p105
      %p107 = scmp.ne.s32.totalorder %s95, %s96
      %p108 = scmp.eq.s32.totalorder %s44, 2
      %p109 = por %p107, %p108
      %p111 = scmp.ne.s32.totalorder %s96, %s110
      %p112 = scmp.eq.s32.totalorder %s44, 0
      %p113 = por %p111, %p112
      %s115 = sadd.s32 %s114, 1
      %p118 = scmp.eq.s32.totalorder %s38, 2
      %p119 = scmp.ne.s32.totalorder %s114, %s116
      %p120 = scmp.eq.s32.totalorder %s38, 0
      %p121 = por %p119, %p120
      %p122 = scmp.ne.s32.totalorder %s114, %s116
      %p123 = scmp.eq.s32.totalorder %s43, 2
      %p124 = por %p122, %p123
      %p125 = scmp.ne.s32.totalorder %s116, %s117
      %p126 = scmp.eq.s32.totalorder %s43, 0
      %p127 = por %p125, %p126
      %p128 = scmp.ne.s32.totalorder %s116, %s117
      %p129 = scmp.eq.s32.totalorder %s44, 2
      %p130 = por %p128, %p129
      %p132 = scmp.ne.s32.totalorder %s117, %s131
      %p133 = scmp.eq.s32.totalorder %s44, 0
      %p134 = por %p132, %p133
      %s136 = sadd.s32 %s135, 1
      %p139 = scmp.eq.s32.totalorder %s38, 2
      %p140 = scmp.ne.s32.totalorder %s135, %s137
      %p141 = scmp.eq.s32.totalorder %s38, 0
      %p142 = por %p140, %p141
      %p143 = scmp.ne.s32.totalorder %s135, %s137
      %p144 = scmp.eq.s32.totalorder %s43, 2
      %p145 = por %p143, %p144
      %p146 = scmp.ne.s32.totalorder %s137, %s138
      %p147 = scmp.eq.s32.totalorder %s43, 0
      %p148 = por %p146, %p147
      %p149 = scmp.ne.s32.totalorder %s137, %s138
      %p150 = scmp.eq.s32.totalorder %s44, 2
      %p151 = por %p149, %p150
      %p153 = scmp.ne.s32.totalorder %s138, %s152
      %p154 = scmp.eq.s32.totalorder %s44, 0
      %p155 = por %p153, %p154
      %s157 = sadd.s32 %s156, 1
      %p160 = scmp.eq.s32.totalorder %s38, 2
      %p161 = scmp.ne.s32.totalorder %s156, %s158
      %p162 = scmp.eq.s32.totalorder %s38, 0
      %p163 = por %p161, %p162
      %p164 = scmp.ne.s32.totalorder %s156, %s158
      %p165 = scmp.eq.s32.totalorder %s43, 2
      %p166 = por %p164, %p165
      %p167 = scmp.ne.s32.totalorder %s158, %s159
      %p168 = scmp.eq.s32.totalorder %s43, 0
      %p169 = por %p167, %p168
      %p170 = scmp.ne.s32.totalorder %s158, %s159
      %p171 = scmp.eq.s32.totalorder %s44, 2
      %p172 = por %p170, %p171
      %p174 = scmp.ne.s32.totalorder %s159, %s173
      %p175 = scmp.eq.s32.totalorder %s44, 0
      %p176 = por %p174, %p175
      %s178 = sadd.s32 %s177, 1
      %p181 = scmp.eq.s32.totalorder %s38, 2
      %p182 = scmp.ne.s32.totalorder %s177, %s179
      %p183 = scmp.eq.s32.totalorder %s38, 0
      %p184 = por %p182, %p183
      %p185 = scmp.ne.s32.totalorder %s177, %s179
      %p186 = scmp.eq.s32.totalorder %s43, 2
      %p187 = por %p185, %p186
      %p188 = scmp.ne.s32.totalorder %s179, %s180
      %p189 = scmp.eq.s32.totalorder %s43, 0
      %p190 = por %p188, %p189
      %p191 = scmp.ne.s32.totalorder %s179, %s180
      %p192 = scmp.eq.s32.totalorder %s44, 2
      %p193 = por %p191, %p192
      %p195 = scmp.ne.s32.totalorder %s180, %s194
      %p196 = scmp.eq.s32.totalorder %s44, 0
      %p197 = por %p195, %p196
      %s199 = sadd.s32 %s198, 1
      %p202 = scmp.eq.s32.totalorder %s38, 2
      %p203 = scmp.ne.s32.totalorder %s198, %s200
      %p204 = scmp.eq.s32.totalorder %s38, 0
      %p205 = por %p203, %p204
      %p206 = scmp.ne.s32.totalorder %s198, %s200
      %p207 = scmp.eq.s32.totalorder %s43, 2
      %p208 = por %p206, %p207
      %p209 = scmp.ne.s32.totalorder %s200, %s201
      %p210 = scmp.eq.s32.totalorder %s43, 0
      %p211 = por %p209, %p210
      %p212 = scmp.ne.s32.totalorder %s200, %s201
      %p213 = scmp.eq.s32.totalorder %s44, 2
      %p214 = por %p212, %p213
      %p216 = scmp.ne.s32.totalorder %s201, %s215
      %p217 = scmp.eq.s32.totalorder %s44, 0
      %p218 = por %p216, %p217
      %s220 = sadd.s32 %s219, 1
      %p223 = scmp.eq.s32.totalorder %s38, 2
      %p224 = scmp.ne.s32.totalorder %s219, %s221
      %p225 = scmp.eq.s32.totalorder %s38, 0
      %p226 = por %p224, %p225
      %p227 = scmp.ne.s32.totalorder %s219, %s221
      %p228 = scmp.eq.s32.totalorder %s43, 2
      %p229 = por %p227, %p228
      %p230 = scmp.ne.s32.totalorder %s221, %s222
      %p231 = scmp.eq.s32.totalorder %s43, 0
      %p232 = por %p230, %p231
      %p233 = scmp.ne.s32.totalorder %s221, %s222
      %p234 = scmp.eq.s32.totalorder %s44, 2
      %p235 = por %p233, %p234
      %p237 = scmp.ne.s32.totalorder %s222, %s236
      %p238 = scmp.eq.s32.totalorder %s44, 0
      %p239 = por %p237, %p238
      %s241 = sadd.s32 %s240, 1
      %p244 = scmp.eq.s32.totalorder %s38, 2
      %p245 = scmp.ne.s32.totalorder %s240, %s242
      %p246 = scmp.eq.s32.totalorder %s38, 0
      %p247 = por %p245, %p246
      %p248 = scmp.ne.s32.totalorder %s240, %s242
      %p249 = scmp.eq.s32.totalorder %s43, 2
      %p250 = por %p248, %p249
      %p251 = scmp.ne.s32.totalorder %s242, %s243
      %p252 = scmp.eq.s32.totalorder %s43, 0
      %p253 = por %p251, %p252
      %p254 = scmp.ne.s32.totalorder %s242, %s243
      %p255 = scmp.eq.s32.totalorder %s44, 2
      %p256 = por %p254, %p255
      %p258 = scmp.ne.s32.totalorder %s243, %s257
      %p259 = scmp.eq.s32.totalorder %s44, 0
      %p260 = por %p258, %p259
      %s262 = sadd.s32 %s261, 1
      %p265 = scmp.eq.s32.totalorder %s38, 2
      %p266 = scmp.ne.s32.totalorder %s261, %s263
      %p267 = scmp.eq.s32.totalorder %s38, 0
      %p268 = por %p266, %p267
      %p269 = scmp.ne.s32.totalorder %s261, %s263
      %p270 = scmp.eq.s32.totalorder %s43, 2
      %p271 = por %p269, %p270
      %p272 = scmp.ne.s32.totalorder %s263, %s264
      %p273 = scmp.eq.s32.totalorder %s43, 0
      %p274 = por %p272, %p273
      %p275 = scmp.ne.s32.totalorder %s263, %s264
      %p276 = scmp.eq.s32.totalorder %s44, 2
      %p277 = por %p275, %p276
      %p279 = scmp.ne.s32.totalorder %s264, %s278
      %p280 = scmp.eq.s32.totalorder %s44, 0
      %p281 = por %p279, %p280
      %s283 = sadd.s32 %s282, 1
      %p286 = scmp.eq.s32.totalorder %s38, 2
      %p287 = scmp.ne.s32.totalorder %s282, %s284
      %p288 = scmp.eq.s32.totalorder %s38, 0
      %p289 = por %p287, %p288
      %p290 = scmp.ne.s32.totalorder %s282, %s284
      %p291 = scmp.eq.s32.totalorder %s43, 2
      %p292 = por %p290, %p291
      %p293 = scmp.ne.s32.totalorder %s284, %s285
      %p294 = scmp.eq.s32.totalorder %s43, 0
      %p295 = por %p293, %p294
      %p296 = scmp.ne.s32.totalorder %s284, %s285
      %p297 = scmp.eq.s32.totalorder %s44, 2
      %p298 = por %p296, %p297
      %p300 = scmp.ne.s32.totalorder %s285, %s299
      %p301 = scmp.eq.s32.totalorder %s44, 0
      %p302 = por %p300, %p301
      %s304 = sadd.s32 %s303, 1
      %p307 = scmp.eq.s32.totalorder %s38, 2
      %p308 = scmp.ne.s32.totalorder %s303, %s305
      %p309 = scmp.eq.s32.totalorder %s38, 0
      %p310 = por %p308, %p309
      %p311 = scmp.ne.s32.totalorder %s303, %s305
      %p312 = scmp.eq.s32.totalorder %s43, 2
      %p313 = por %p311, %p312
      %p314 = scmp.ne.s32.totalorder %s305, %s306
      %p315 = scmp.eq.s32.totalorder %s43, 0
      %p316 = por %p314, %p315
      %p317 = scmp.ne.s32.totalorder %s305, %s306
      %p318 = scmp.eq.s32.totalorder %s44, 2
      %p319 = por %p317, %p318
      %p321 = scmp.ne.s32.totalorder %s306, %s320
      %p322 = scmp.eq.s32.totalorder %s44, 0
      %p323 = por %p321, %p322
      %s325 = sadd.s32 %s324, 1
      %p328 = scmp.eq.s32.totalorder %s38, 2
      %p329 = scmp.ne.s32.totalorder %s324, %s326
      %p330 = scmp.eq.s32.totalorder %s38, 0
      %p331 = por %p329, %p330
      %p332 = scmp.ne.s32.totalorder %s324, %s326
      %p333 = scmp.eq.s32.totalorder %s43, 2
      %p334 = por %p332, %p333
      %p335 = scmp.ne.s32.totalorder %s326, %s327
      %p336 = scmp.eq.s32.totalorder %s43, 0
      %p337 = por %p335, %p336
      %p338 = scmp.ne.s32.totalorder %s326, %s327
      %p339 = scmp.eq.s32.totalorder %s44, 2
      %p340 = por %p338, %p339
      %p342 = scmp.ne.s32.totalorder %s327, %s341
      %p343 = scmp.eq.s32.totalorder %s44, 0
      %p344 = por %p342, %p343
      %s346 = sadd.s32 %s345, 1
      %p349 = scmp.eq.s32.totalorder %s38, 2
      %p350 = scmp.ne.s32.totalorder %s345, %s347
      %p351 = scmp.eq.s32.totalorder %s38, 0
      %p352 = por %p350, %p351
      %p353 = scmp.ne.s32.totalorder %s345, %s347
      %p354 = scmp.eq.s32.totalorder %s43, 2
      %p355 = por %p353, %p354
      %p356 = scmp.ne.s32.totalorder %s347, %s348
      %p357 = scmp.eq.s32.totalorder %s43, 0
      %p358 = por %p356, %p357
      %p359 = scmp.ne.s32.totalorder %s347, %s348
      %p360 = scmp.eq.s32.totalorder %s44, 2
      %p361 = por %p359, %p360
      %p363 = scmp.ne.s32.totalorder %s348, %s362
      %p364 = scmp.eq.s32.totalorder %s44, 0
      %p365 = por %p363, %p364
      %s367 = sadd.s32 %s366, 1
      %p370 = scmp.eq.s32.totalorder %s38, 2
      %p371 = scmp.ne.s32.totalorder %s366, %s368
      %p372 = scmp.eq.s32.totalorder %s38, 0
      %p373 = por %p371, %p372
      %p374 = scmp.ne.s32.totalorder %s366, %s368
      %p375 = scmp.eq.s32.totalorder %s43, 2
      %p376 = por %p374, %p375
      %p377 = scmp.ne.s32.totalorder %s368, %s369
      %p378 = scmp.eq.s32.totalorder %s43, 0
      %p379 = por %p377, %p378
      %p380 = scmp.ne.s32.totalorder %s368, %s369
      %p381 = scmp.eq.s32.totalorder %s44, 2
      %p382 = por %p380, %p381
      %p384 = scmp.ne.s32.totalorder %s369, %s383
      %p385 = scmp.eq.s32.totalorder %s44, 0
      %p386 = por %p384, %p385
      %s388 = sadd.s32 %s387, 1
      %p391 = scmp.eq.s32.totalorder %s38, 2
      %p392 = scmp.ne.s32.totalorder %s387, %s389
      %p393 = scmp.eq.s32.totalorder %s38, 0
      %p394 = por %p392, %p393
      %p395 = scmp.ne.s32.totalorder %s387, %s389
      %p396 = scmp.eq.s32.totalorder %s43, 2
      %p397 = por %p395, %p396
      %p398 = scmp.ne.s32.totalorder %s389, %s390
      %p399 = scmp.eq.s32.totalorder %s43, 0
      %p400 = por %p398, %p399
      %p401 = scmp.ne.s32.totalorder %s389, %s390
      %p402 = scmp.eq.s32.totalorder %s44, 2
      %p403 = por %p401, %p402
      %p405 = scmp.ne.s32.totalorder %s390, %s404
      %p406 = scmp.eq.s32.totalorder %s44, 0
      %p407 = por %p405, %p406
      %s409 = sadd.s32 %s408, 1
      %p412 = scmp.eq.s32.totalorder %s38, 2
      %p413 = scmp.ne.s32.totalorder %s408, %s410
      %p414 = scmp.eq.s32.totalorder %s38, 0
      %p415 = por %p413, %p414
      %p416 = scmp.ne.s32.totalorder %s408, %s410
      %p417 = scmp.eq.s32.totalorder %s43, 2
      %p418 = por %p416, %p417
      %p419 = scmp.ne.s32.totalorder %s410, %s411
      %p420 = scmp.eq.s32.totalorder %s43, 0
      %p421 = por %p419, %p420
      %p422 = scmp.ne.s32.totalorder %s410, %s411
      %p423 = scmp.eq.s32.totalorder %s44, 2
      %p424 = por %p422, %p423
      %p426 = scmp.ne.s32.totalorder %s411, %s425
      %p427 = scmp.eq.s32.totalorder %s44, 0
      %p428 = por %p426, %p427
      %s430 = sadd.s32 %s429, 1
      %p433 = scmp.eq.s32.totalorder %s38, 2
      %p434 = scmp.ne.s32.totalorder %s429, %s431
      %p435 = scmp.eq.s32.totalorder %s38, 0
      %p436 = por %p434, %p435
      %p437 = scmp.ne.s32.totalorder %s429, %s431
      %p438 = scmp.eq.s32.totalorder %s43, 2
      %p439 = por %p437, %p438
      %p440 = scmp.ne.s32.totalorder %s431, %s432
      %p441 = scmp.eq.s32.totalorder %s43, 0
      %p442 = por %p440, %p441
      %p443 = scmp.ne.s32.totalorder %s431, %s432
      %p444 = scmp.eq.s32.totalorder %s44, 2
      %p445 = por %p443, %p444
      %p447 = scmp.ne.s32.totalorder %s432, %s446
      %p448 = scmp.eq.s32.totalorder %s44, 0
      %p449 = por %p447, %p448
      %s451 = sadd.s32 %s450, 1
      %p454 = scmp.eq.s32.totalorder %s38, 2
      %p455 = scmp.ne.s32.totalorder %s450, %s452
      %p456 = scmp.eq.s32.totalorder %s38, 0
      %p457 = por %p455, %p456
      %p458 = scmp.ne.s32.totalorder %s450, %s452
      %p459 = scmp.eq.s32.totalorder %s43, 2
      %p460 = por %p458, %p459
      %p461 = scmp.ne.s32.totalorder %s452, %s453
      %p462 = scmp.eq.s32.totalorder %s43, 0
      %p463 = por %p461, %p462
      %p464 = scmp.ne.s32.totalorder %s452, %s453
      %p465 = scmp.eq.s32.totalorder %s44, 2
      %p466 = por %p464, %p465
      %p468 = scmp.ne.s32.totalorder %s453, %s467
      %p469 = scmp.eq.s32.totalorder %s44, 0
      %p470 = por %p468, %p469
      %s472 = sadd.s32 %s471, 1
      %p475 = scmp.eq.s32.totalorder %s38, 2
      %p476 = scmp.ne.s32.totalorder %s471, %s473
      %p477 = scmp.eq.s32.totalorder %s38, 0
      %p478 = por %p476, %p477
      %p479 = scmp.ne.s32.totalorder %s471, %s473
      %p480 = scmp.eq.s32.totalorder %s43, 2
      %p481 = por %p479, %p480
      %p482 = scmp.ne.s32.totalorder %s473, %s474
      %p483 = scmp.eq.s32.totalorder %s43, 0
      %p484 = por %p482, %p483
      %p485 = scmp.ne.s32.totalorder %s473, %s474
      %p486 = scmp.eq.s32.totalorder %s44, 2
      %p487 = por %p485, %p486
      %p489 = scmp.ne.s32.totalorder %s474, %s488
      %p490 = scmp.eq.s32.totalorder %s44, 0
      %p491 = por %p489, %p490
      %s493 = sadd.s32 %s492, 1
      %p496 = scmp.eq.s32.totalorder %s38, 2
      %p497 = scmp.ne.s32.totalorder %s492, %s494
      %p498 = scmp.eq.s32.totalorder %s38, 0
      %p499 = por %p497, %p498
      %p500 = scmp.ne.s32.totalorder %s492, %s494
      %p501 = scmp.eq.s32.totalorder %s43, 2
      %p502 = por %p500, %p501
      %p503 = scmp.ne.s32.totalorder %s494, %s495
      %p504 = scmp.eq.s32.totalorder %s43, 0
      %p505 = por %p503, %p504
      %p506 = scmp.ne.s32.totalorder %s494, %s495
      %p507 = scmp.eq.s32.totalorder %s44, 2
      %p508 = por %p506, %p507
      %p510 = scmp.ne.s32.totalorder %s495, %s509
      %p511 = scmp.eq.s32.totalorder %s44, 0
      %p512 = por %p510, %p511
      %s513 = ssub.s32 %s38, %s45
      %p514 = scmp.eq.s32.totalorder %s513, 0
      %s516 = sadd.s32 %s515, 1
      %s517 = scalar_select %p514, %s515, %s516
      %p520 = pneg %p514
      %p521 = scmp.eq.s32.totalorder %s38, 2
      %p522 = por %p520, %p521
      %p523 = scmp.ne.s32.totalorder %s515, %s518
      %p524 = scmp.eq.s32.totalorder %s38, 0
      %p525 = por %p523, %p524
      %p526 = scmp.ne.s32.totalorder %s515, %s518
      %p527 = scmp.eq.s32.totalorder %s43, 2
      %p528 = por %p526, %p527
      %p529 = scmp.ne.s32.totalorder %s518, %s519
      %p530 = scmp.eq.s32.totalorder %s43, 0
      %p531 = por %p529, %p530
      %p532 = scmp.ne.s32.totalorder %s518, %s519
      %p533 = scmp.eq.s32.totalorder %s44, 2
      %p534 = por %p532, %p533
      %p536 = scmp.ne.s32.totalorder %s519, %s535
      %p537 = scmp.eq.s32.totalorder %s44, 0
      %p538 = por %p536, %p537
      %p539 = scmp.le.s32.totalorder 1, %s38
      %p540 = scmp.lt.s32.totalorder %s38, 4
      %p541 = pnand %p539, %p540
      %p542 = pneg %p541
      // Predicated region
      $region9: #{tpu_custom_call.1} parent=5 // pred_check
        _
      $region10: #{tpu_custom_call.1} parent=5 // pred_check_branch
        %544 = sbr.rel (%p541) target = $region12
      $region11: #{tpu_custom_call.1} parent=5 // pred_region
        %s545 = ssub.s32 %s38, 1
        // Predicated region
        $region13: #{tpu_custom_call.1} parent=11 // pred_check
          %p546 = pneg %p85
        $region14: #{tpu_custom_call.1} parent=11 // pred_check_branch
          %548 = sbr.rel (%p546) target = $region16
        $region15: #{tpu_custom_call.1} parent=11 // pred_region
          _
        $region16: #{tpu_custom_call.1} parent=11 // pred_fallthru
          _
        // Predicated region
        $region17: #{tpu_custom_call.1} parent=11 // pred_check
          %p549 = pneg %p106
        $region18: #{tpu_custom_call.1} parent=11 // pred_check_branch
          %551 = sbr.rel (%p549) target = $region20
        $region19: #{tpu_custom_call.1} parent=11 // pred_region
          _
        $region20: #{tpu_custom_call.1} parent=11 // pred_fallthru
          _
        // Predicated region
        $region21: #{tpu_custom_call.1} parent=11 // pred_check
          %p552 = pneg %p127
        $region22: #{tpu_custom_call.1} parent=11 // pred_check_branch
          %554 = sbr.rel (%p552) target = $region24
        $region23: #{tpu_custom_call.1} parent=11 // pred_region
          _
        $region24: #{tpu_custom_call.1} parent=11 // pred_fallthru
          _
        // Predicated region
        $region25: #{tpu_custom_call.1} parent=11 // pred_check
          %p555 = pneg %p148
        $region26: #{tpu_custom_call.1} parent=11 // pred_check_branch
          %557 = sbr.rel (%p555) target = $region28
        $region27: #{tpu_custom_call.1} parent=11 // pred_region
          _
        $region28: #{tpu_custom_call.1} parent=11 // pred_fallthru
          _
        // Predicated region
        $region29: #{tpu_custom_call.1} parent=11 // pred_check
          %p558 = pneg %p169
        $region30: #{tpu_custom_call.1} parent=11 // pred_check_branch
          %560 = sbr.rel (%p558) target = $region32
        $region31: #{tpu_custom_call.1} parent=11 // pred_region
          _
        $region32: #{tpu_custom_call.1} parent=11 // pred_fallthru
          _
        // Predicated region
        $region33: #{tpu_custom_call.1} parent=11 // pred_check
          %p561 = pneg %p190
        $region34: #{tpu_custom_call.1} parent=11 // pred_check_branch
          %563 = sbr.rel (%p561) target = $region36
        $region35: #{tpu_custom_call.1} parent=11 // pred_region
          _
        $region36: #{tpu_custom_call.1} parent=11 // pred_fallthru
          _
        // Predicated region
        $region37: #{tpu_custom_call.1} parent=11 // pred_check
          %p564 = pneg %p211
        $region38: #{tpu_custom_call.1} parent=11 // pred_check_branch
          %566 = sbr.rel (%p564) target = $region40
        $region39: #{tpu_custom_call.1} parent=11 // pred_region
          _
        $region40: #{tpu_custom_call.1} parent=11 // pred_fallthru
          _
        // Predicated region
        $region41: #{tpu_custom_call.1} parent=11 // pred_check
          %p567 = pneg %p232
        $region42: #{tpu_custom_call.1} parent=11 // pred_check_branch
          %569 = sbr.rel (%p567) target = $region44
        $region43: #{tpu_custom_call.1} parent=11 // pred_region
          _
        $region44: #{tpu_custom_call.1} parent=11 // pred_fallthru
          _
        // Predicated region
        $region45: #{tpu_custom_call.1} parent=11 // pred_check
          %p570 = pneg %p253
        $region46: #{tpu_custom_call.1} parent=11 // pred_check_branch
          %572 = sbr.rel (%p570) target = $region48
        $region47: #{tpu_custom_call.1} parent=11 // pred_region
          _
        $region48: #{tpu_custom_call.1} parent=11 // pred_fallthru
          _
        // Predicated region
        $region49: #{tpu_custom_call.1} parent=11 // pred_check
          %p573 = pneg %p274
        $region50: #{tpu_custom_call.1} parent=11 // pred_check_branch
          %575 = sbr.rel (%p573) target = $region52
        $region51: #{tpu_custom_call.1} parent=11 // pred_region
          _
        $region52: #{tpu_custom_call.1} parent=11 // pred_fallthru
          _
        // Predicated region
        $region53: #{tpu_custom_call.1} parent=11 // pred_check
          %p576 = pneg %p295
        $region54: #{tpu_custom_call.1} parent=11 // pred_check_branch
          %578 = sbr.rel (%p576) target = $region56
        $region55: #{tpu_custom_call.1} parent=11 // pred_region
          _
        $region56: #{tpu_custom_call.1} parent=11 // pred_fallthru
          _
        // Predicated region
        $region57: #{tpu_custom_call.1} parent=11 // pred_check
          %p579 = pneg %p316
        $region58: #{tpu_custom_call.1} parent=11 // pred_check_branch
          %581 = sbr.rel (%p579) target = $region60
        $region59: #{tpu_custom_call.1} parent=11 // pred_region
          _
        $region60: #{tpu_custom_call.1} parent=11 // pred_fallthru
          _
        // Predicated region
        $region61: #{tpu_custom_call.1} parent=11 // pred_check
          %p582 = pneg %p337
        $region62: #{tpu_custom_call.1} parent=11 // pred_check_branch
          %584 = sbr.rel (%p582) target = $region64
        $region63: #{tpu_custom_call.1} parent=11 // pred_region
          _
        $region64: #{tpu_custom_call.1} parent=11 // pred_fallthru
          _
        // Predicated region
        $region65: #{tpu_custom_call.1} parent=11 // pred_check
          %p585 = pneg %p358
        $region66: #{tpu_custom_call.1} parent=11 // pred_check_branch
          %587 = sbr.rel (%p585) target = $region68
        $region67: #{tpu_custom_call.1} parent=11 // pred_region
          _
        $region68: #{tpu_custom_call.1} parent=11 // pred_fallthru
          _
        // Predicated region
        $region69: #{tpu_custom_call.1} parent=11 // pred_check
          %p588 = pneg %p379
        $region70: #{tpu_custom_call.1} parent=11 // pred_check_branch
          %590 = sbr.rel (%p588) target = $region72
        $region71: #{tpu_custom_call.1} parent=11 // pred_region
          _
        $region72: #{tpu_custom_call.1} parent=11 // pred_fallthru
          _
        // Predicated region
        $region73: #{tpu_custom_call.1} parent=11 // pred_check
          %p591 = pneg %p400
        $region74: #{tpu_custom_call.1} parent=11 // pred_check_branch
          %593 = sbr.rel (%p591) target = $region76
        $region75: #{tpu_custom_call.1} parent=11 // pred_region
          _
        $region76: #{tpu_custom_call.1} parent=11 // pred_fallthru
          _
        // Predicated region
        $region77: #{tpu_custom_call.1} parent=11 // pred_check
          %p594 = pneg %p421
        $region78: #{tpu_custom_call.1} parent=11 // pred_check_branch
          %596 = sbr.rel (%p594) target = $region80
        $region79: #{tpu_custom_call.1} parent=11 // pred_region
          _
        $region80: #{tpu_custom_call.1} parent=11 // pred_fallthru
          _
        // Predicated region
        $region81: #{tpu_custom_call.1} parent=11 // pred_check
          %p597 = pneg %p442
        $region82: #{tpu_custom_call.1} parent=11 // pred_check_branch
          %599 = sbr.rel (%p597) target = $region84
        $region83: #{tpu_custom_call.1} parent=11 // pred_region
          _
        $region84: #{tpu_custom_call.1} parent=11 // pred_fallthru
          _
        // Predicated region
        $region85: #{tpu_custom_call.1} parent=11 // pred_check
          %p600 = pneg %p463
        $region86: #{tpu_custom_call.1} parent=11 // pred_check_branch
          %602 = sbr.rel (%p600) target = $region88
        $region87: #{tpu_custom_call.1} parent=11 // pred_region
          _
        $region88: #{tpu_custom_call.1} parent=11 // pred_fallthru
          _
        // Predicated region
        $region89: #{tpu_custom_call.1} parent=11 // pred_check
          %p603 = pneg %p484
        $region90: #{tpu_custom_call.1} parent=11 // pred_check_branch
          %605 = sbr.rel (%p603) target = $region92
        $region91: #{tpu_custom_call.1} parent=11 // pred_region
          _
        $region92: #{tpu_custom_call.1} parent=11 // pred_fallthru
          _
        // Predicated region
        $region93: #{tpu_custom_call.1} parent=11 // pred_check
          %p606 = pneg %p505
        $region94: #{tpu_custom_call.1} parent=11 // pred_check_branch
          %608 = sbr.rel (%p606) target = $region96
        $region95: #{tpu_custom_call.1} parent=11 // pred_region
          _
        $region96: #{tpu_custom_call.1} parent=11 // pred_fallthru
          _
      $region12: #{tpu_custom_call.1} parent=5 // pred_fallthru
        _
      %p609 = scmp.lt.s32.totalorder %s38, 3
      // Predicated region
      $region97: #{tpu_custom_call.1} parent=5 // pred_check
        %p610 = pneg %p609
      $region98: #{tpu_custom_call.1} parent=5 // pred_check_branch
        %612 = sbr.rel (%p610) target = $region100
      $region99: #{tpu_custom_call.1} parent=5 // pred_region
        // Predicated region
        $region101: #{tpu_custom_call.1} parent=99 // pred_check
          %p613 = pneg %p58
        $region102: #{tpu_custom_call.1} parent=99 // pred_check_branch
          %615 = sbr.rel (%p613) target = $region104
        $region103: #{tpu_custom_call.1} parent=99 // pred_region
          %p616 = scmp.lt.s32.totalorder %s38, 2
          %s617 = scalar_select %p616, %s38, 2
          %s618 = smul.addr %s617, 4
          %s619 = smul.addr %s618, 8
          %s620 = scalar_lea.vmem %s1, %s619
        $region104: #{tpu_custom_call.1} parent=99 // pred_fallthru
          _
      $region100: #{tpu_custom_call.1} parent=5 // pred_fallthru
        _
      %p621 = scmp.le.s32.totalorder 1, %s38
      %p622 = scmp.lt.s32.totalorder %s38, 4
      %p623 = pnand %p621, %p622
      %p624 = pneg %p623
      // Predicated region
      $region105: #{tpu_custom_call.1} parent=5 // pred_check
        _
      $region106: #{tpu_custom_call.1} parent=5 // pred_check_branch
        %626 = sbr.rel (%p623) target = $region108
      $region107: #{tpu_custom_call.1} parent=5 // pred_region
        %s627 = ssub.s32 %s38, 1
        %p628 = scmp.lt.s32.totalorder %s43, 2
        %s629 = scalar_select %p628, %s43, 2
        %s630 = smul.addr %s629, 4
        %s631 = smul.addr %s630, 8
        %s632 = scalar_lea.vmem %s1, %s631
        %p633 = pneg %p64
        %p634 = pneg %p61
        %p635 = pneg %p85
        %p636 = pneg %p82
        %p637 = pneg %p106
        %p638 = pneg %p103
        %p639 = pneg %p127
        %p640 = pneg %p124
        %p641 = pneg %p148
        %p642 = pneg %p145
        %p643 = pneg %p169
        %p644 = pneg %p166
        %p645 = pneg %p190
        %p646 = pneg %p187
        %p647 = pneg %p211
        %p648 = pneg %p208
        %p649 = pneg %p232
        %p650 = pneg %p229
        %p651 = pneg %p253
        %p652 = pneg %p250
        %p653 = pneg %p274
        %p654 = pneg %p271
        %p655 = pneg %p295
        %p656 = pneg %p292
        %p657 = pneg %p316
        %p658 = pneg %p313
        %p659 = pneg %p337
        %p660 = pneg %p334
        %p661 = pneg %p358
        %p662 = pneg %p355
        %p663 = pneg %p379
        %p664 = pneg %p376
        %p665 = pneg %p400
        %p666 = pneg %p397
        %p667 = pneg %p421
        %p668 = pneg %p418
        %p669 = pneg %p442
        %p670 = pneg %p439
        %p671 = pneg %p463
        %p672 = pneg %p460
        %p673 = pneg %p484
        %p674 = pneg %p481
        %p675 = pneg %p505
        %p676 = pneg %p502
        %p677 = pneg %p531
        %p678 = pneg %p528
        %s679 = sand.u32 %s518, 1
        %s680 = scalar_lea.sflag [#allocation5], %s679
        %s681 = sand.u32 %s518, 1
        %s682 = scalar_lea.vmem [#allocation4], %s681
        %p683 = scmp.lt.s32.totalorder %s43, 2
        %s684 = scalar_select %p683, %s43, 2
        %s685 = smul.addr %s684, 4
        %s686 = smul.addr %s685, 8
        %s687 = scalar_lea.vmem %s1, %s686
        %v688 = vld [vmem:[%s687] sm:$0xff]
        %v689 = vld [vmem:[%s687 + $0x8] sm:$0xff]
        %v690 = vld [vmem:[%s687 + $0x10] sm:$0xf]
        %v691 = vld [vmem:[%s687 + $0x18] sm:$0xf]
        %v692 = vld [vmem:[%s4] sm:$0xff]
        %v693 = vld [vmem:[%s4 + $0x8] sm:$0xff]
        %v694 = vld [vmem:[%s4 + $0x10] sm:$0xff]
        %v695 = vld [vmem:[%s4 + $0x18] sm:$0xff]
        %v696 = vld [vmem:[%s4 + $0x20] sm:$0xff]
        %v697 = vld [vmem:[%s4 + $0x28] sm:$0xff]
        %v698 = vld [vmem:[%s4 + $0x30] sm:$0xff]
        %v699 = vld [vmem:[%s4 + $0x38] sm:$0xff]
        %v700 = vld [vmem:[%s4 + $0x40] sm:$0xff]
        %v701 = vld [vmem:[%s4 + $0x48] sm:$0xff]
        %v702 = vld [vmem:[%s4 + $0x50] sm:$0xff]
        %v703 = vld [vmem:[%s4 + $0x58] sm:$0xff]
        %v704 = vld [vmem:[%s4 + $0x60] sm:$0xff]
        %v705 = vld [vmem:[%s4 + $0x68] sm:$0xff]
        %v706 = vld [vmem:[%s4 + $0x70] sm:$0xff]
        %v707 = vld [vmem:[%s4 + $0x78] sm:$0xff]
        %v708 = vld [vmem:[%s4 + $0x80] sm:$0xff]
        %v709 = vld [vmem:[%s4 + $0x88] sm:$0xff]
        %v710 = vld [vmem:[%s4 + $0x90] sm:$0xff]
        %v711 = vld [vmem:[%s4 + $0x98] sm:$0xff]
        %v712 = vld [vmem:[%s4 + $0xa0] sm:$0xff]
        %v713 = vld [vmem:[%s4 + $0xa8] sm:$0xff]
        %v714 = vld [vmem:[%s4 + $0xb0] sm:$0xff]
        %v715 = vld [vmem:[%s4 + $0xb8] sm:$0xff]
        %v716 = vld [vmem:[%s5] sm:$0x1]
        %v718 = vlaneseq
        %v719 = vshrl.u32 %v718, 7
        %v720 = vsub.s32 0, %v719
        %v721 = vrot.slane %v716, %v720
        %vm723 = vcmask 523264
        %v725 = vsel %vm723, %v689, 0
        %v728 = vsel %vm723, %v691, 0
        %730 = vmatprep.subr.mxu0 0.0
        %731 = vmatpush1.msra.mxu0 %v692
        %732 = vmatprep.subr.mxu0 0.0
        %733 = vmatpush1.msra.mxu0 %v693
        %734 = vmatprep.subr.mxu0 0.0
        %735 = vmatpush1.msra.mxu0 %v694
        %736 = vmatprep.subr.mxu0 0.0
        %737 = vmatpush1.msra.mxu0 %v695
        %738 = vmatprep.subr.mxu0 0.0
        %739 = vmatpush1.msra.mxu0 %v696
        %740 = vmatprep.subr.mxu0 0.0
        %741 = vmatpush1.msra.mxu0 %v697
        %742 = vmatprep.subr.mxu0 0.0
        %743 = vmatpush1.msra.mxu0 %v698
        %744 = vmatprep.subr.mxu0 0.0
        %745 = vmatpush1.msra.mxu0 %v699
        %746 = vmatprep.subr.mxu0 0.0
        %747 = vmatpush1.msra.mxu0 %v700
        %748 = vmatprep.subr.mxu0 0.0
        %749 = vmatpush1.msra.mxu0 %v701
        %750 = vmatprep.subr.mxu0 0.0
        %751 = vmatpush1.msra.mxu0 %v702
        %752 = vmatprep.subr.mxu0 0.0
        %753 = vmatpush1.msra.mxu0 %v703
        %754 = vmatprep.subr.mxu0 0.0
        %755 = vmatpush1.msra.mxu0 %v704
        %756 = vmatprep.subr.mxu0 0.0
        %757 = vmatpush1.msra.mxu0 %v705
        %758 = vmatprep.subr.mxu0 0.0
        %759 = vmatpush1.msra.mxu0 %v706
        %760 = vmatprep.subr.mxu0 0.0
        %761 = vmatpush1.msra.mxu0 %v707
        %762 = vmatprep.subr.mxu0 0.0
        %763 = vmatpush1.msra.mxu0 %v708
        %764 = vmatprep.subr.mxu0 0.0
        %765 = vmatpush1.msra.mxu0 %v709
        %766 = vmatprep.subr.mxu0 0.0
        %767 = vmatpush1.msra.mxu0 %v710
        %768 = vmatprep.subr.mxu0 0.0
        %769 = vmatpush1.msra.mxu0 %v711
        %770 = vmatprep.subr.mxu0 0.0
        %771 = vmatpush1.msra.mxu0 %v712
        %772 = vmatprep.subr.mxu0 0.0
        %773 = vmatpush1.msra.mxu0 %v713
        %774 = vmatprep.subr.mxu0 0.0
        %775 = vmatpush1.msra.mxu0 %v714
        %776 = vmatprep.subr.mxu0 0.0
        %777 = vmatpush1.msra.mxu0 %v715
        %778 = vmatprep.subr.mxu0 0.0
        %779 = vmatpush1.msra.mxu0 0.0
        %780 = vmatprep.subr.mxu0 0.0
        %781 = vmatpush1.msra.mxu0 0.0
        %782 = vmatprep.subr.mxu0 0.0
        %783 = vmatpush1.msra.mxu0 0.0
        %784 = vmatprep.subr.mxu0 0.0
        %785 = vmatpush1.msra.mxu0 0.0
        %786 = vmatprep.subr.mxu0 0.0
        %787 = vmatpush1.msra.mxu0 0.0
        %788 = vmatprep.subr.mxu0 0.0
        %789 = vmatpush1.msra.mxu0 0.0
        %790 = vmatprep.subr.mxu0 0.0
        %791 = vmatpush1.msra.mxu0 0.0
        %792 = vmatprep.subr.mxu0 0.0
        %793 = vmatpush1.msra.mxu0 0.0
        %794 = vmatprep.mubr.f32.mxu0 %v725
        %795 = vmatmul.mubr.f32.gmra.mrb[0].mxu0 %v688
        %v796 = vpop.f32.mrb[0].mxu0
        %v797 = vadd.f32 %v721, %v796
        %v798 = vpop.f32.mrb[0].mxu0
        %799 = vmatprep.mubr.f32.mxu0 %v728
        %800 = vmatmul.mubr.f32.gmra.mrb[0].mxu0 %v690
        %v801 = vpop.f32.mrb[0].mxu0
        %v802 = vadd.f32 %v721, %v801
        %v803 = vpop.f32.mrb[0].mxu0
        %804 = vdwg.mxu0
        %v805 = vld [vmem:[%s2] sm:$0xff]
        %v806 = vld [vmem:[%s2 + $0x8] sm:$0xf]
        %v807 = vadd.f32 %v797, %v805
        %v808 = vadd.f32 %v802, %v806
        %v809 = vld [vmem:[%s14] sm:$0x1]
        %v810 = vld [vmem:[%s15] sm:$0x1]
        %vm811 = vcmask 261120
        %v812 = vsel %vm811, %v807, 0.0
        %813 = vadd.xlane.f32.xlu0 %v812
        %v814 = vpop.xlane.xlu0 %813
        %vm815 = vcmask 257024
        %v816 = vsel %vm815, %v808, 0.0
        %817 = vadd.xlane.f32.xlu0 %v816
        %v818 = vpop.xlane.xlu0 %817
        %v819 = vrcp.pop 32.0
        %v820 = vmul.f32 %v814, %v819
        %v821 = vmul.f32 %v818, %v819
        %v822 = vsub.f32 %v807, %v820
        %v823 = vsub.f32 %v808, %v821
        %v824 = vmul.f32 %v822, %v822
        %v825 = vmul.f32 %v823, %v823
        %v826 = vsel %vm811, %v824, 0.0
        %827 = vadd.xlane.f32.xlu0 %v826
        %v828 = vpop.xlane.xlu0 %827
        %v829 = vsel %vm815, %v825, 0.0
        %830 = vadd.xlane.f32.xlu0 %v829
        %v831 = vpop.xlane.xlu0 %830
        %v832 = vmul.f32 %v828, %v819
        %v833 = vmul.f32 %v831, %v819
        %v834 = vadd.f32 %v832, 1e-05
        %v835 = vadd.f32 %v833, 1e-05
        %v836 = vrsqrt.pop %v834
        %v837 = vrsqrt.pop %v835
        %v838 = vmul.f32 %v822, %v836
        %v839 = vmul.f32 %v823, %v837
        %v841 = vlaneseq
        %v842 = vshrl.u32 %v841, 7
        %v843 = vsub.s32 0, %v842
        %v844 = vrot.slane %v809, %v843
        %v846 = vmul.f32 %v838, %v844
        %v847 = vmul.f32 %v839, %v844
        %v849 = vlaneseq
        %v850 = vshrl.u32 %v849, 7
        %v851 = vsub.s32 0, %v850
        %v852 = vrot.slane %v810, %v851
        %v854 = vadd.f32 %v846, %v852
        %v855 = vadd.f32 %v847, %v852
        %v856 = vld [vmem:[%s6] sm:$0xff]
        %v857 = vld [vmem:[%s6 + $0x8] sm:$0xff]
        %v858 = vld [vmem:[%s6 + $0x10] sm:$0xff]
        %v859 = vld [vmem:[%s6 + $0x18] sm:$0xff]
        %v860 = vld [vmem:[%s7] sm:$0x1]
        %v862 = vlaneseq
        %v863 = vshrl.u32 %v862, 7
        %v864 = vsub.s32 0, %v863
        %v865 = vrot.slane %v860, %v864
        %v868 = vsel %vm811, %v854, 0
        %v871 = vsel %vm811, %v855, 0
        %873 = vmatprep.subr.mxu0 0.0
        %874 = vmatpush1.msra.mxu0 %v856
        %875 = vmatprep.subr.mxu0 0.0
        %876 = vmatpush1.msra.mxu0 %v857
        %877 = vmatprep.subr.mxu0 0.0
        %878 = vmatpush1.msra.mxu0 %v858
        %879 = vmatprep.subr.mxu0 0.0
        %880 = vmatpush1.msra.mxu0 %v859
        %881 = vmatprep.subr.mxu0 0.0
        %882 = vmatpush1.msra.mxu0 0.0
        %883 = vmatprep.subr.mxu0 0.0
        %884 = vmatpush1.msra.mxu0 0.0
        %885 = vmatprep.subr.mxu0 0.0
        %886 = vmatpush1.msra.mxu0 0.0
        %887 = vmatprep.subr.mxu0 0.0
        %888 = vmatpush1.msra.mxu0 0.0
        %889 = vmatprep.subr.mxu0 0.0
        %890 = vmatpush1.msra.mxu0 0.0
        %891 = vmatprep.subr.mxu0 0.0
        %892 = vmatpush1.msra.mxu0 0.0
        %893 = vmatprep.subr.mxu0 0.0
        %894 = vmatpush1.msra.mxu0 0.0
        %895 = vmatprep.subr.mxu0 0.0
        %896 = vmatpush1.msra.mxu0 0.0
        %897 = vmatprep.subr.mxu0 0.0
        %898 = vmatpush1.msra.mxu0 0.0
        %899 = vmatprep.subr.mxu0 0.0
        %900 = vmatpush1.msra.mxu0 0.0
        %901 = vmatprep.subr.mxu0 0.0
        %902 = vmatpush1.msra.mxu0 0.0
        %903 = vmatprep.subr.mxu0 0.0
        %904 = vmatpush1.msra.mxu0 0.0
        %905 = vmatprep.subr.mxu0 0.0
        %906 = vmatpush1.msra.mxu0 0.0
        %907 = vmatprep.subr.mxu0 0.0
        %908 = vmatpush1.msra.mxu0 0.0
        %909 = vmatprep.subr.mxu0 0.0
        %910 = vmatpush1.msra.mxu0 0.0
        %911 = vmatprep.subr.mxu0 0.0
        %912 = vmatpush1.msra.mxu0 0.0
        %913 = vmatprep.subr.mxu0 0.0
        %914 = vmatpush1.msra.mxu0 0.0
        %915 = vmatprep.subr.mxu0 0.0
        %916 = vmatpush1.msra.mxu0 0.0
        %917 = vmatprep.subr.mxu0 0.0
        %918 = vmatpush1.msra.mxu0 0.0
        %919 = vmatprep.subr.mxu0 0.0
        %920 = vmatpush1.msra.mxu0 0.0
        %921 = vmatprep.subr.mxu0 0.0
        %922 = vmatpush1.msra.mxu0 0.0
        %923 = vmatprep.subr.mxu0 0.0
        %924 = vmatpush1.msra.mxu0 0.0
        %925 = vmatprep.subr.mxu0 0.0
        %926 = vmatpush1.msra.mxu0 0.0
        %927 = vmatprep.subr.mxu0 0.0
        %928 = vmatpush1.msra.mxu0 0.0
        %929 = vmatprep.subr.mxu0 0.0
        %930 = vmatpush1.msra.mxu0 0.0
        %931 = vmatprep.subr.mxu0 0.0
        %932 = vmatpush1.msra.mxu0 0.0
        %933 = vmatprep.subr.mxu0 0.0
        %934 = vmatpush1.msra.mxu0 0.0
        %935 = vmatprep.subr.mxu0 0.0
        %936 = vmatpush1.msra.mxu0 0.0
        %937 = vmatprep.mubr.f32.mxu0 0.0
        %938 = vmatmul.mubr.f32.gmra.mrb[0].mxu0 %v868
        %v939 = vpop.f32.mrb[0].mxu0
        %v940 = vadd.f32 %v865, %v939
        %v941 = vpop.f32.mrb[0].mxu0
        %942 = vmatprep.mubr.f32.mxu0 0.0
        %943 = vmatmul.mubr.f32.gmra.mrb[0].mxu0 %v871
        %v944 = vpop.f32.mrb[0].mxu0
        %v945 = vadd.f32 %v865, %v944
        %v946 = vpop.f32.mrb[0].mxu0
        %947 = vdwg.mxu0
        %950 = vrot.lane.b32.xlu0 %v940, 96
        %v951 = vpop.permute.xlu0 %950
        %952 = vrot.lane.b32.xlu0 %v945, 96
        %v953 = vpop.permute.xlu0 %952
        %v954 = vsel %vm811, %v940, 0
        %v956 = vsel %vm811, %v945, 0
        %v958 = vsel %vm811, %v951, 0
        %v960 = vsel %vm811, %v953, 0
        %962 = vmatprep.subr.mxu0 0.0
        %963 = vmatpush1.xpose.msra.mxu0 %v958
        %964 = vmatprep.subr.mxu0 0.0
        %965 = vmatpush1.xpose.msra.mxu0 %v960
        %966 = vmatprep.subr.mxu0 0.0
        %967 = vmatpush1.xpose.msra.mxu0 0.0
        %968 = vmatprep.subr.mxu0 0.0
        %969 = vmatpush1.xpose.msra.mxu0 0.0
        %970 = vmatprep.subr.mxu0 0.0
        %971 = vmatpush1.xpose.msra.mxu0 0.0
        %972 = vmatprep.subr.mxu0 0.0
        %973 = vmatpush1.xpose.msra.mxu0 0.0
        %974 = vmatprep.subr.mxu0 0.0
        %975 = vmatpush1.xpose.msra.mxu0 0.0
        %976 = vmatprep.subr.mxu0 0.0
        %977 = vmatpush1.xpose.msra.mxu0 0.0
        %978 = vmatprep.subr.mxu0 0.0
        %979 = vmatpush1.xpose.msra.mxu0 0.0
        %980 = vmatprep.subr.mxu0 0.0
        %981 = vmatpush1.xpose.msra.mxu0 0.0
        %982 = vmatprep.subr.mxu0 0.0
        %983 = vmatpush1.xpose.msra.mxu0 0.0
        %984 = vmatprep.subr.mxu0 0.0
        %985 = vmatpush1.xpose.msra.mxu0 0.0
        %986 = vmatprep.subr.mxu0 0.0
        %987 = vmatpush1.xpose.msra.mxu0 0.0
        %988 = vmatprep.subr.mxu0 0.0
        %989 = vmatpush1.xpose.msra.mxu0 0.0
        %990 = vmatprep.subr.mxu0 0.0
        %991 = vmatpush1.xpose.msra.mxu0 0.0
        %992 = vmatprep.subr.mxu0 0.0
        %993 = vmatpush1.xpose.msra.mxu0 0.0
        %994 = vmatprep.subr.mxu0 0.0
        %995 = vmatpush1.xpose.msra.mxu0 0.0
        %996 = vmatprep.subr.mxu0 0.0
        %997 = vmatpush1.xpose.msra.mxu0 0.0
        %998 = vmatprep.subr.mxu0 0.0
        %999 = vmatpush1.xpose.msra.mxu0 0.0
        %1000 = vmatprep.subr.mxu0 0.0
        %1001 = vmatpush1.xpose.msra.mxu0 0.0
        %1002 = vmatprep.subr.mxu0 0.0
        %1003 = vmatpush1.xpose.msra.mxu0 0.0
        %1004 = vmatprep.subr.mxu0 0.0
        %1005 = vmatpush1.xpose.msra.mxu0 0.0
        %1006 = vmatprep.subr.mxu0 0.0
        %1007 = vmatpush1.xpose.msra.mxu0 0.0
        %1008 = vmatprep.subr.mxu0 0.0
        %1009 = vmatpush1.xpose.msra.mxu0 0.0
        %1010 = vmatprep.subr.mxu0 0.0
        %1011 = vmatpush1.xpose.msra.mxu0 0.0
        %1012 = vmatprep.subr.mxu0 0.0
        %1013 = vmatpush1.xpose.msra.mxu0 0.0
        %1014 = vmatprep.subr.mxu0 0.0
        %1015 = vmatpush1.xpose.msra.mxu0 0.0
        %1016 = vmatprep.subr.mxu0 0.0
        %1017 = vmatpush1.xpose.msra.mxu0 0.0
        %1018 = vmatprep.subr.mxu0 0.0
        %1019 = vmatpush1.xpose.msra.mxu0 0.0
        %1020 = vmatprep.subr.mxu0 0.0
        %1021 = vmatpush1.xpose.msra.mxu0 0.0
        %1022 = vmatprep.subr.mxu0 0.0
        %1023 = vmatpush1.xpose.msra.mxu0 0.0
        %1024 = vmatprep.subr.mxu0 0.0
        %1025 = vmatpush1.xpose.msra.mxu0 0.0
        %1026 = vmatprep.mubr.f32.mxu0 0.0
        %1027 = vmatmul.mubr.f32.gmra.mrb[0].mxu0 %v954
        %v1028 = vpop.f32.mrb[0].mxu0
        %v1029 = vadd.f32 0.0, %v1028
        %v1030 = vpop.f32.mrb[0].mxu0
        %1031 = vmatprep.mubr.f32.mxu0 0.0
        %1032 = vmatmul.mubr.f32.gmra.mrb[0].mxu0 %v956
        %v1033 = vpop.f32.mrb[0].mxu0
        %v1034 = vadd.f32 0.0, %v1033
        %v1035 = vpop.f32.mrb[0].mxu0
        %1036 = vdwg.mxu0
        %v1037 = vmul.f32 %v1029, 0.17677669
        %v1038 = vmul.f32 %v1034, 0.17677669
        %v1039 = vld [vmem:[%s3] sm:$0xff]
        %v1040 = vld [vmem:[%s3 + $0x8] sm:$0xf]
        %v1041 = vadd.f32 %v1037, %v1039
        %v1042 = vadd.f32 %v1038, %v1040
        %vm1043 = vcmask 97280
        %v1044 = vsel %vm1043, %v1041, -inf
        %1045 = vmax.xlane.f32.xlu0 %v1044
        %v1046 = vpop.xlane.xlu0 %1045
        %vm1047 = vcmask 93184
        %v1048 = vsel %vm1047, %v1042, -inf
        %1049 = vmax.xlane.f32.xlu0 %v1048
        %v1050 = vpop.xlane.xlu0 %1049
        %v1051 = vsub.f32 %v1041, %v1046
        %v1052 = vsub.f32 %v1042, %v1050
        %v1053 = vmul.f32 %v1051, 1.442695
        %v1054 = vpow.pop %v1053
        %v1055 = vmul.f32 %v1052, 1.442695
        %v1056 = vpow.pop %v1055
        %v1057 = vsel %vm1043, %v1054, 0.0
        %1058 = vadd.xlane.f32.xlu0 %v1057
        %v1059 = vpop.xlane.xlu0 %1058
        %v1060 = vsel %vm1047, %v1056, 0.0
        %1061 = vadd.xlane.f32.xlu0 %v1060
        %v1062 = vpop.xlane.xlu0 %1061
        %v1063 = vrcp.pop %v1059
        %v1064 = vrcp.pop %v1062
        %v1065 = vmul.f32 %v1054, %v1063
        %v1066 = vmul.f32 %v1056, %v1064
        %1067 = vrot.lane.b32.xlu0 %v940, 64
        %v1068 = vpop.permute.xlu0 %1067
        %1069 = vrot.lane.b32.xlu0 %v945, 64
        %v1070 = vpop.permute.xlu0 %1069
        %v1073 = vsel %vm1043, %v1065, 0
        %v1076 = vsel %vm1043, %v1066, 0
        %vm1078 = vcmask 1043456
        %v1079 = vsel %vm1078, %v1070, 0
        %1081 = vmatprep.subr.mxu0 0.0
        %1082 = vmatpush1.msra.mxu0 %v1068
        %1083 = vmatprep.subr.mxu0 0.0
        %1084 = vmatpush1.msra.mxu0 %v1079
        %1085 = vmatprep.subr.mxu0 0.0
        %1086 = vmatpush1.msra.mxu0 0.0
        %1087 = vmatprep.subr.mxu0 0.0
        %1088 = vmatpush1.msra.mxu0 0.0
        %1089 = vmatprep.subr.mxu0 0.0
        %1090 = vmatpush1.msra.mxu0 0.0
        %1091 = vmatprep.subr.mxu0 0.0
        %1092 = vmatpush1.msra.mxu0 0.0
        %1093 = vmatprep.subr.mxu0 0.0
        %1094 = vmatpush1.msra.mxu0 0.0
        %1095 = vmatprep.subr.mxu0 0.0
        %1096 = vmatpush1.msra.mxu0 0.0
        %1097 = vmatprep.subr.mxu0 0.0
        %1098 = vmatpush1.msra.mxu0 0.0
        %1099 = vmatprep.subr.mxu0 0.0
        %1100 = vmatpush1.msra.mxu0 0.0
        %1101 = vmatprep.subr.mxu0 0.0
        %1102 = vmatpush1.msra.mxu0 0.0
        %1103 = vmatprep.subr.mxu0 0.0
        %1104 = vmatpush1.msra.mxu0 0.0
        %1105 = vmatprep.subr.mxu0 0.0
        %1106 = vmatpush1.msra.mxu0 0.0
        %1107 = vmatprep.subr.mxu0 0.0
        %1108 = vmatpush1.msra.mxu0 0.0
        %1109 = vmatprep.subr.mxu0 0.0
        %1110 = vmatpush1.msra.mxu0 0.0
        %1111 = vmatprep.subr.mxu0 0.0
        %1112 = vmatpush1.msra.mxu0 0.0
        %1113 = vmatprep.subr.mxu0 0.0
        %1114 = vmatpush1.msra.mxu0 0.0
        %1115 = vmatprep.subr.mxu0 0.0
        %1116 = vmatpush1.msra.mxu0 0.0
        %1117 = vmatprep.subr.mxu0 0.0
        %1118 = vmatpush1.msra.mxu0 0.0
        %1119 = vmatprep.subr.mxu0 0.0
        %1120 = vmatpush1.msra.mxu0 0.0
        %1121 = vmatprep.subr.mxu0 0.0
        %1122 = vmatpush1.msra.mxu0 0.0
        %1123 = vmatprep.subr.mxu0 0.0
        %1124 = vmatpush1.msra.mxu0 0.0
        %1125 = vmatprep.subr.mxu0 0.0
        %1126 = vmatpush1.msra.mxu0 0.0
        %1127 = vmatprep.subr.mxu0 0.0
        %1128 = vmatpush1.msra.mxu0 0.0
        %1129 = vmatprep.subr.mxu0 0.0
        %1130 = vmatpush1.msra.mxu0 0.0
        %1131 = vmatprep.subr.mxu0 0.0
        %1132 = vmatpush1.msra.mxu0 0.0
        %1133 = vmatprep.subr.mxu0 0.0
        %1134 = vmatpush1.msra.mxu0 0.0
        %1135 = vmatprep.subr.mxu0 0.0
        %1136 = vmatpush1.msra.mxu0 0.0
        %1137 = vmatprep.subr.mxu0 0.0
        %1138 = vmatpush1.msra.mxu0 0.0
        %1139 = vmatprep.subr.mxu0 0.0
        %1140 = vmatpush1.msra.mxu0 0.0
        %1141 = vmatprep.subr.mxu0 0.0
        %1142 = vmatpush1.msra.mxu0 0.0
        %1143 = vmatprep.subr.mxu0 0.0
        %1144 = vmatpush1.msra.mxu0 0.0
        %1145 = vmatprep.mubr.f32.mxu0 0.0
        %1146 = vmatmul.mubr.f32.gmra.mrb[0].mxu0 %v1073
        %v1147 = vpop.f32.mrb[0].mxu0
        %v1148 = vadd.f32 0.0, %v1147
        %v1149 = vpop.f32.mrb[0].mxu0
        %1150 = vmatprep.mubr.f32.mxu0 0.0
        %1151 = vmatmul.mubr.f32.gmra.mrb[0].mxu0 %v1076
        %v1152 = vpop.f32.mrb[0].mxu0
        %v1153 = vadd.f32 0.0, %v1152
        %v1154 = vpop.f32.mrb[0].mxu0
        %1155 = vdwg.mxu0
        %v1156 = vld [vmem:[%s8] sm:$0xff]
        %v1157 = vld [vmem:[%s8 + $0x8] sm:$0xff]
        %v1158 = vld [vmem:[%s8 + $0x10] sm:$0xff]
        %v1159 = vld [vmem:[%s8 + $0x18] sm:$0xff]
        %v1160 = vld [vmem:[%s9] sm:$0x1]
        %v1162 = vlaneseq
        %v1163 = vshrl.u32 %v1162, 7
        %v1164 = vsub.s32 0, %v1163
        %v1165 = vrot.slane %v1160, %v1164
        %v1168 = vsel %vm811, %v1148, 0
        %v1171 = vsel %vm811, %v1153, 0
        %1173 = vmatprep.subr.mxu0 0.0
        %1174 = vmatpush1.msra.mxu0 %v1156
        %1175 = vmatprep.subr.mxu0 0.0
        %1176 = vmatpush1.msra.mxu0 %v1157
        %1177 = vmatprep.subr.mxu0 0.0
        %1178 = vmatpush1.msra.mxu0 %v1158
        %1179 = vmatprep.subr.mxu0 0.0
        %1180 = vmatpush1.msra.mxu0 %v1159
        %1181 = vmatprep.subr.mxu0 0.0
        %1182 = vmatpush1.msra.mxu0 0.0
        %1183 = vmatprep.subr.mxu0 0.0
        %1184 = vmatpush1.msra.mxu0 0.0
        %1185 = vmatprep.subr.mxu0 0.0
        %1186 = vmatpush1.msra.mxu0 0.0
        %1187 = vmatprep.subr.mxu0 0.0
        %1188 = vmatpush1.msra.mxu0 0.0
        %1189 = vmatprep.subr.mxu0 0.0
        %1190 = vmatpush1.msra.mxu0 0.0
        %1191 = vmatprep.subr.mxu0 0.0
        %1192 = vmatpush1.msra.mxu0 0.0
        %1193 = vmatprep.subr.mxu0 0.0
        %1194 = vmatpush1.msra.mxu0 0.0
        %1195 = vmatprep.subr.mxu0 0.0
        %1196 = vmatpush1.msra.mxu0 0.0
        %1197 = vmatprep.subr.mxu0 0.0
        %1198 = vmatpush1.msra.mxu0 0.0
        %1199 = vmatprep.subr.mxu0 0.0
        %1200 = vmatpush1.msra.mxu0 0.0
        %1201 = vmatprep.subr.mxu0 0.0
        %1202 = vmatpush1.msra.mxu0 0.0
        %1203 = vmatprep.subr.mxu0 0.0
        %1204 = vmatpush1.msra.mxu0 0.0
        %1205 = vmatprep.subr.mxu0 0.0
        %1206 = vmatpush1.msra.mxu0 0.0
        %1207 = vmatprep.subr.mxu0 0.0
        %1208 = vmatpush1.msra.mxu0 0.0
        %1209 = vmatprep.subr.mxu0 0.0
        %1210 = vmatpush1.msra.mxu0 0.0
        %1211 = vmatprep.subr.mxu0 0.0
        %1212 = vmatpush1.msra.mxu0 0.0
        %1213 = vmatprep.subr.mxu0 0.0
        %1214 = vmatpush1.msra.mxu0 0.0
        %1215 = vmatprep.subr.mxu0 0.0
        %1216 = vmatpush1.msra.mxu0 0.0
        %1217 = vmatprep.subr.mxu0 0.0
        %1218 = vmatpush1.msra.mxu0 0.0
        %1219 = vmatprep.subr.mxu0 0.0
        %1220 = vmatpush1.msra.mxu0 0.0
        %1221 = vmatprep.subr.mxu0 0.0
        %1222 = vmatpush1.msra.mxu0 0.0
        %1223 = vmatprep.subr.mxu0 0.0
        %1224 = vmatpush1.msra.mxu0 0.0
        %1225 = vmatprep.subr.mxu0 0.0
        %1226 = vmatpush1.msra.mxu0 0.0
        %1227 = vmatprep.subr.mxu0 0.0
        %1228 = vmatpush1.msra.mxu0 0.0
        %1229 = vmatprep.subr.mxu0 0.0
        %1230 = vmatpush1.msra.mxu0 0.0
        %1231 = vmatprep.subr.mxu0 0.0
        %1232 = vmatpush1.msra.mxu0 0.0
        %1233 = vmatprep.subr.mxu0 0.0
        %1234 = vmatpush1.msra.mxu0 0.0
        %1235 = vmatprep.subr.mxu0 0.0
        %1236 = vmatpush1.msra.mxu0 0.0
        %1237 = vmatprep.mubr.f32.mxu0 0.0
        %1238 = vmatmul.mubr.f32.gmra.mrb[0].mxu0 %v1168
        %v1239 = vpop.f32.mrb[0].mxu0
        %v1240 = vadd.f32 %v1165, %v1239
        %v1241 = vpop.f32.mrb[0].mxu0
        %1242 = vmatprep.mubr.f32.mxu0 0.0
        %1243 = vmatmul.mubr.f32.gmra.mrb[0].mxu0 %v1171
        %v1244 = vpop.f32.mrb[0].mxu0
        %v1245 = vadd.f32 %v1165, %v1244
        %v1246 = vpop.f32.mrb[0].mxu0
        %1247 = vdwg.mxu0
        %v1248 = vadd.f32 %v807, %v1240
        %v1249 = vadd.f32 %v808, %v1245
        %v1250 = vld [vmem:[%s16] sm:$0x1]
        %v1251 = vld [vmem:[%s17] sm:$0x1]
        %v1252 = vsel %vm811, %v1248, 0.0
        %1253 = vadd.xlane.f32.xlu0 %v1252
        %v1254 = vpop.xlane.xlu0 %1253
        %v1255 = vsel %vm815, %v1249, 0.0
        %1256 = vadd.xlane.f32.xlu0 %v1255
        %v1257 = vpop.xlane.xlu0 %1256
        %v1258 = vmul.f32 %v1254, %v819
        %v1259 = vmul.f32 %v1257, %v819
        %v1260 = vsub.f32 %v1248, %v1258
        %v1261 = vsub.f32 %v1249, %v1259
        %v1262 = vmul.f32 %v1260, %v1260
        %v1263 = vmul.f32 %v1261, %v1261
        %v1264 = vsel %vm811, %v1262, 0.0
        %1265 = vadd.xlane.f32.xlu0 %v1264
        %v1266 = vpop.xlane.xlu0 %1265
        %v1267 = vsel %vm815, %v1263, 0.0
        %1268 = vadd.xlane.f32.xlu0 %v1267
        %v1269 = vpop.xlane.xlu0 %1268
        %v1270 = vmul.f32 %v1266, %v819
        %v1271 = vmul.f32 %v1269, %v819
        %v1272 = vadd.f32 %v1270, 1e-05
        %v1273 = vadd.f32 %v1271, 1e-05
        %v1274 = vrsqrt.pop %v1272
        %v1275 = vrsqrt.pop %v1273
        %v1276 = vmul.f32 %v1260, %v1274
        %v1277 = vmul.f32 %v1261, %v1275
        %v1279 = vlaneseq
        %v1280 = vshrl.u32 %v1279, 7
        %v1281 = vsub.s32 0, %v1280
        %v1282 = vrot.slane %v1250, %v1281
        %v1284 = vmul.f32 %v1276, %v1282
        %v1285 = vmul.f32 %v1277, %v1282
        %v1287 = vlaneseq
        %v1288 = vshrl.u32 %v1287, 7
        %v1289 = vsub.s32 0, %v1288
        %v1290 = vrot.slane %v1251, %v1289
        %v1292 = vadd.f32 %v1284, %v1290
        %v1293 = vadd.f32 %v1285, %v1290
        %v1294 = vld [vmem:[%s10] sm:$0xff]
        %v1295 = vld [vmem:[%s10 + $0x8] sm:$0xff]
        %v1296 = vld [vmem:[%s10 + $0x10] sm:$0xff]
        %v1297 = vld [vmem:[%s10 + $0x18] sm:$0xff]
        %v1298 = vld [vmem:[%s11] sm:$0x1]
        %v1300 = vlaneseq
        %v1301 = vshrl.u32 %v1300, 7
        %v1302 = vsub.s32 0, %v1301
        %v1303 = vrot.slane %v1298, %v1302
        %v1306 = vsel %vm811, %v1292, 0
        %v1309 = vsel %vm811, %v1293, 0
        %1311 = vmatprep.subr.mxu0 0.0
        %1312 = vmatpush1.msra.mxu0 %v1294
        %1313 = vmatprep.subr.mxu0 0.0
        %1314 = vmatpush1.msra.mxu0 %v1295
        %1315 = vmatprep.subr.mxu0 0.0
        %1316 = vmatpush1.msra.mxu0 %v1296
        %1317 = vmatprep.subr.mxu0 0.0
        %1318 = vmatpush1.msra.mxu0 %v1297
        %1319 = vmatprep.subr.mxu0 0.0
        %1320 = vmatpush1.msra.mxu0 0.0
        %1321 = vmatprep.subr.mxu0 0.0
        %1322 = vmatpush1.msra.mxu0 0.0
        %1323 = vmatprep.subr.mxu0 0.0
        %1324 = vmatpush1.msra.mxu0 0.0
        %1325 = vmatprep.subr.mxu0 0.0
        %1326 = vmatpush1.msra.mxu0 0.0
        %1327 = vmatprep.subr.mxu0 0.0
        %1328 = vmatpush1.msra.mxu0 0.0
        %1329 = vmatprep.subr.mxu0 0.0
        %1330 = vmatpush1.msra.mxu0 0.0
        %1331 = vmatprep.subr.mxu0 0.0
        %1332 = vmatpush1.msra.mxu0 0.0
        %1333 = vmatprep.subr.mxu0 0.0
        %1334 = vmatpush1.msra.mxu0 0.0
        %1335 = vmatprep.subr.mxu0 0.0
        %1336 = vmatpush1.msra.mxu0 0.0
        %1337 = vmatprep.subr.mxu0 0.0
        %1338 = vmatpush1.msra.mxu0 0.0
        %1339 = vmatprep.subr.mxu0 0.0
        %1340 = vmatpush1.msra.mxu0 0.0
        %1341 = vmatprep.subr.mxu0 0.0
        %1342 = vmatpush1.msra.mxu0 0.0
        %1343 = vmatprep.subr.mxu0 0.0
        %1344 = vmatpush1.msra.mxu0 0.0
        %1345 = vmatprep.subr.mxu0 0.0
        %1346 = vmatpush1.msra.mxu0 0.0
        %1347 = vmatprep.subr.mxu0 0.0
        %1348 = vmatpush1.msra.mxu0 0.0
        %1349 = vmatprep.subr.mxu0 0.0
        %1350 = vmatpush1.msra.mxu0 0.0
        %1351 = vmatprep.subr.mxu0 0.0
        %1352 = vmatpush1.msra.mxu0 0.0
        %1353 = vmatprep.subr.mxu0 0.0
        %1354 = vmatpush1.msra.mxu0 0.0
        %1355 = vmatprep.subr.mxu0 0.0
        %1356 = vmatpush1.msra.mxu0 0.0
        %1357 = vmatprep.subr.mxu0 0.0
        %1358 = vmatpush1.msra.mxu0 0.0
        %1359 = vmatprep.subr.mxu0 0.0
        %1360 = vmatpush1.msra.mxu0 0.0
        %1361 = vmatprep.subr.mxu0 0.0
        %1362 = vmatpush1.msra.mxu0 0.0
        %1363 = vmatprep.subr.mxu0 0.0
        %1364 = vmatpush1.msra.mxu0 0.0
        %1365 = vmatprep.subr.mxu0 0.0
        %1366 = vmatpush1.msra.mxu0 0.0
        %1367 = vmatprep.subr.mxu0 0.0
        %1368 = vmatpush1.msra.mxu0 0.0
        %1369 = vmatprep.subr.mxu0 0.0
        %1370 = vmatpush1.msra.mxu0 0.0
        %1371 = vmatprep.subr.mxu0 0.0
        %1372 = vmatpush1.msra.mxu0 0.0
        %1373 = vmatprep.subr.mxu0 0.0
        %1374 = vmatpush1.msra.mxu0 0.0
        %1375 = vmatprep.mubr.f32.mxu0 0.0
        %1376 = vmatmul.mubr.f32.gmra.mrb[0].mxu0 %v1306
        %v1377 = vpop.f32.mrb[0].mxu0
        %v1378 = vadd.f32 %v1303, %v1377
        %v1379 = vpop.f32.mrb[0].mxu0
        %1380 = vmatprep.mubr.f32.mxu0 0.0
        %1381 = vmatmul.mubr.f32.gmra.mrb[0].mxu0 %v1309
        %v1382 = vpop.f32.mrb[0].mxu0
        %v1383 = vadd.f32 %v1303, %v1382
        %v1384 = vpop.f32.mrb[0].mxu0
        %1385 = vdwg.mxu0
        %v1386 = vmul.f32 %v1378, %v1378
        %v1387 = vmul.f32 %v1383, %v1383
        %v1388 = vmul.f32 %v1378, %v1386
        %v1389 = vmul.f32 %v1383, %v1387
        %v1390 = vmul.f32 %v1388, 0.044715
        %v1391 = vmul.f32 %v1389, 0.044715
        %v1392 = vadd.f32 %v1378, %v1390
        %v1393 = vadd.f32 %v1383, %v1391
        %v1394 = vmul.f32 %v1392, 0.7978846
        %v1395 = vmul.f32 %v1393, 0.7978846
        %v1396 = vtanh.pop %v1394
        %v1397 = vtanh.pop %v1395
        %v1398 = vadd.f32 %v1396, 1.0
        %v1399 = vadd.f32 %v1397, 1.0
        %v1400 = vmul.f32 %v1398, 0.5
        %v1401 = vmul.f32 %v1399, 0.5
        %v1402 = vmul.f32 %v1378, %v1400
        %v1403 = vmul.f32 %v1383, %v1401
        %v1404 = vld [vmem:[%s12] sm:$0xff]
        %v1405 = vld [vmem:[%s12 + $0x8] sm:$0xff]
        %v1406 = vld [vmem:[%s12 + $0x10] sm:$0xff]
        %v1407 = vld [vmem:[%s12 + $0x18] sm:$0xff]
        %v1408 = vld [vmem:[%s12 + $0x20] sm:$0xff]
        %v1409 = vld [vmem:[%s12 + $0x28] sm:$0xff]
        %v1410 = vld [vmem:[%s12 + $0x30] sm:$0xff]
        %v1411 = vld [vmem:[%s12 + $0x38] sm:$0xff]
        %v1412 = vld [vmem:[%s13] sm:$0x1]
        %v1414 = vlaneseq
        %v1415 = vshrl.u32 %v1414, 7
        %v1416 = vsub.s32 0, %v1415
        %v1417 = vrot.slane %v1412, %v1416
        %v1420 = vsel %vm723, %v1402, 0
        %v1423 = vsel %vm723, %v1403, 0
        %1425 = vmatprep.subr.mxu0 0.0
        %1426 = vmatpush1.msra.mxu0 %v1404
        %1427 = vmatprep.subr.mxu0 0.0
        %1428 = vmatpush1.msra.mxu0 %v1405
        %1429 = vmatprep.subr.mxu0 0.0
        %1430 = vmatpush1.msra.mxu0 %v1406
        %1431 = vmatprep.subr.mxu0 0.0
        %1432 = vmatpush1.msra.mxu0 %v1407
        %1433 = vmatprep.subr.mxu0 0.0
        %1434 = vmatpush1.msra.mxu0 %v1408
        %1435 = vmatprep.subr.mxu0 0.0
        %1436 = vmatpush1.msra.mxu0 %v1409
        %1437 = vmatprep.subr.mxu0 0.0
        %1438 = vmatpush1.msra.mxu0 %v1410
        %1439 = vmatprep.subr.mxu0 0.0
        %1440 = vmatpush1.msra.mxu0 %v1411
        %1441 = vmatprep.subr.mxu0 0.0
        %1442 = vmatpush1.msra.mxu0 0.0
        %1443 = vmatprep.subr.mxu0 0.0
        %1444 = vmatpush1.msra.mxu0 0.0
        %1445 = vmatprep.subr.mxu0 0.0
        %1446 = vmatpush1.msra.mxu0 0.0
        %1447 = vmatprep.subr.mxu0 0.0
        %1448 = vmatpush1.msra.mxu0 0.0
        %1449 = vmatprep.subr.mxu0 0.0
        %1450 = vmatpush1.msra.mxu0 0.0
        %1451 = vmatprep.subr.mxu0 0.0
        %1452 = vmatpush1.msra.mxu0 0.0
        %1453 = vmatprep.subr.mxu0 0.0
        %1454 = vmatpush1.msra.mxu0 0.0
        %1455 = vmatprep.subr.mxu0 0.0
        %1456 = vmatpush1.msra.mxu0 0.0
        %1457 = vmatprep.subr.mxu0 0.0
        %1458 = vmatpush1.msra.mxu0 0.0
        %1459 = vmatprep.subr.mxu0 0.0
        %1460 = vmatpush1.msra.mxu0 0.0
        %1461 = vmatprep.subr.mxu0 0.0
        %1462 = vmatpush1.msra.mxu0 0.0
        %1463 = vmatprep.subr.mxu0 0.0
        %1464 = vmatpush1.msra.mxu0 0.0
        %1465 = vmatprep.subr.mxu0 0.0
        %1466 = vmatpush1.msra.mxu0 0.0
        %1467 = vmatprep.subr.mxu0 0.0
        %1468 = vmatpush1.msra.mxu0 0.0
        %1469 = vmatprep.subr.mxu0 0.0
        %1470 = vmatpush1.msra.mxu0 0.0
        %1471 = vmatprep.subr.mxu0 0.0
        %1472 = vmatpush1.msra.mxu0 0.0
        %1473 = vmatprep.subr.mxu0 0.0
        %1474 = vmatpush1.msra.mxu0 0.0
        %1475 = vmatprep.subr.mxu0 0.0
        %1476 = vmatpush1.msra.mxu0 0.0
        %1477 = vmatprep.subr.mxu0 0.0
        %1478 = vmatpush1.msra.mxu0 0.0
        %1479 = vmatprep.subr.mxu0 0.0
        %1480 = vmatpush1.msra.mxu0 0.0
        %1481 = vmatprep.subr.mxu0 0.0
        %1482 = vmatpush1.msra.mxu0 0.0
        %1483 = vmatprep.subr.mxu0 0.0
        %1484 = vmatpush1.msra.mxu0 0.0
        %1485 = vmatprep.subr.mxu0 0.0
        %1486 = vmatpush1.msra.mxu0 0.0
        %1487 = vmatprep.subr.mxu0 0.0
        %1488 = vmatpush1.msra.mxu0 0.0
        %1489 = vmatprep.mubr.f32.mxu0 0.0
        %1490 = vmatmul.mubr.f32.gmra.mrb[0].mxu0 %v1420
        %v1491 = vpop.f32.mrb[0].mxu0
        %v1492 = vadd.f32 %v1417, %v1491
        %v1493 = vpop.f32.mrb[0].mxu0
        %1494 = vmatprep.mubr.f32.mxu0 0.0
        %1495 = vmatmul.mubr.f32.gmra.mrb[0].mxu0 %v1423
        %v1496 = vpop.f32.mrb[0].mxu0
        %v1497 = vadd.f32 %v1417, %v1496
        %v1498 = vpop.f32.mrb[0].mxu0
        %1499 = vdwg.mxu0
        %v1500 = vadd.f32 %v1248, %v1492
        %v1501 = vadd.f32 %v1249, %v1497
        %v1502 = vld [vmem:[%s18] sm:$0x1]
        %v1503 = vld [vmem:[%s19] sm:$0x1]
        %v1504 = vsel %vm811, %v1500, 0.0
        %1505 = vadd.xlane.f32.xlu0 %v1504
        %v1506 = vpop.xlane.xlu0 %1505
        %v1507 = vsel %vm815, %v1501, 0.0
        %1508 = vadd.xlane.f32.xlu0 %v1507
        %v1509 = vpop.xlane.xlu0 %1508
        %v1510 = vmul.f32 %v1506, %v819
        %v1511 = vmul.f32 %v1509, %v819
        %v1512 = vsub.f32 %v1500, %v1510
        %v1513 = vsub.f32 %v1501, %v1511
        %v1514 = vmul.f32 %v1512, %v1512
        %v1515 = vmul.f32 %v1513, %v1513
        %v1516 = vsel %vm811, %v1514, 0.0
        %1517 = vadd.xlane.f32.xlu0 %v1516
        %v1518 = vpop.xlane.xlu0 %1517
        %v1519 = vsel %vm815, %v1515, 0.0
        %1520 = vadd.xlane.f32.xlu0 %v1519
        %v1521 = vpop.xlane.xlu0 %1520
        %v1522 = vmul.f32 %v1518, %v819
        %v1523 = vmul.f32 %v1521, %v819
        %v1524 = vadd.f32 %v1522, 1e-05
        %v1525 = vadd.f32 %v1523, 1e-05
        %v1526 = vrsqrt.pop %v1524
        %v1527 = vrsqrt.pop %v1525
        %v1528 = vmul.f32 %v1512, %v1526
        %v1529 = vmul.f32 %v1513, %v1527
        %v1531 = vlaneseq
        %v1532 = vshrl.u32 %v1531, 7
        %v1533 = vsub.s32 0, %v1532
        %v1534 = vrot.slane %v1502, %v1533
        %v1536 = vmul.f32 %v1528, %v1534
        %v1537 = vmul.f32 %v1529, %v1534
        %v1539 = vlaneseq
        %v1540 = vshrl.u32 %v1539, 7
        %v1541 = vsub.s32 0, %v1540
        %v1542 = vrot.slane %v1503, %v1541
        %v1544 = vadd.f32 %v1536, %v1542
        %v1545 = vadd.f32 %v1537, %v1542
        %v1546 = vld [vmem:[%s20] sm:$0xff]
        %v1547 = vld [vmem:[%s20 + $0x8] sm:$0xff]
        %v1548 = vld [vmem:[%s20 + $0x10] sm:$0xff]
        %v1549 = vld [vmem:[%s20 + $0x18] sm:$0xff]
        %v1550 = vld [vmem:[%s22] sm:$0x1]
        %v1552 = vlaneseq
        %v1553 = vshrl.u32 %v1552, 7
        %v1554 = vsub.s32 0, %v1553
        %v1555 = vrot.slane %v1550, %v1554
        %v1558 = vsel %vm811, %v1544, 0
        %v1561 = vsel %vm811, %v1545, 0
        %1563 = vmatprep.subr.mxu0 0.0
        %1564 = vmatpush1.msra.mxu0 %v1546
        %1565 = vmatprep.subr.mxu0 0.0
        %1566 = vmatpush1.msra.mxu0 %v1547
        %1567 = vmatprep.subr.mxu0 0.0
        %1568 = vmatpush1.msra.mxu0 %v1548
        %1569 = vmatprep.subr.mxu0 0.0
        %1570 = vmatpush1.msra.mxu0 %v1549
        %1571 = vmatprep.subr.mxu0 0.0
        %1572 = vmatpush1.msra.mxu0 0.0
        %1573 = vmatprep.subr.mxu0 0.0
        %1574 = vmatpush1.msra.mxu0 0.0
        %1575 = vmatprep.subr.mxu0 0.0
        %1576 = vmatpush1.msra.mxu0 0.0
        %1577 = vmatprep.subr.mxu0 0.0
        %1578 = vmatpush1.msra.mxu0 0.0
        %1579 = vmatprep.subr.mxu0 0.0
        %1580 = vmatpush1.msra.mxu0 0.0
        %1581 = vmatprep.subr.mxu0 0.0
        %1582 = vmatpush1.msra.mxu0 0.0
        %1583 = vmatprep.subr.mxu0 0.0
        %1584 = vmatpush1.msra.mxu0 0.0
        %1585 = vmatprep.subr.mxu0 0.0
        %1586 = vmatpush1.msra.mxu0 0.0
        %1587 = vmatprep.subr.mxu0 0.0
        %1588 = vmatpush1.msra.mxu0 0.0
        %1589 = vmatprep.subr.mxu0 0.0
        %1590 = vmatpush1.msra.mxu0 0.0
        %1591 = vmatprep.subr.mxu0 0.0
        %1592 = vmatpush1.msra.mxu0 0.0
        %1593 = vmatprep.subr.mxu0 0.0
        %1594 = vmatpush1.msra.mxu0 0.0
        %1595 = vmatprep.subr.mxu0 0.0
        %1596 = vmatpush1.msra.mxu0 0.0
        %1597 = vmatprep.subr.mxu0 0.0
        %1598 = vmatpush1.msra.mxu0 0.0
        %1599 = vmatprep.subr.mxu0 0.0
        %1600 = vmatpush1.msra.mxu0 0.0
        %1601 = vmatprep.subr.mxu0 0.0
        %1602 = vmatpush1.msra.mxu0 0.0
        %1603 = vmatprep.subr.mxu0 0.0
        %1604 = vmatpush1.msra.mxu0 0.0
        %1605 = vmatprep.subr.mxu0 0.0
        %1606 = vmatpush1.msra.mxu0 0.0
        %1607 = vmatprep.subr.mxu0 0.0
        %1608 = vmatpush1.msra.mxu0 0.0
        %1609 = vmatprep.subr.mxu0 0.0
        %1610 = vmatpush1.msra.mxu0 0.0
        %1611 = vmatprep.subr.mxu0 0.0
        %1612 = vmatpush1.msra.mxu0 0.0
        %1613 = vmatprep.subr.mxu0 0.0
        %1614 = vmatpush1.msra.mxu0 0.0
        %1615 = vmatprep.subr.mxu0 0.0
        %1616 = vmatpush1.msra.mxu0 0.0
        %1617 = vmatprep.subr.mxu0 0.0
        %1618 = vmatpush1.msra.mxu0 0.0
        %1619 = vmatprep.subr.mxu0 0.0
        %1620 = vmatpush1.msra.mxu0 0.0
        %1621 = vmatprep.subr.mxu0 0.0
        %1622 = vmatpush1.msra.mxu0 0.0
        %1623 = vmatprep.subr.mxu0 0.0
        %1624 = vmatpush1.msra.mxu0 0.0
        %1625 = vmatprep.subr.mxu0 0.0
        %1626 = vmatpush1.msra.mxu0 0.0
        %1627 = vmatprep.mubr.f32.mxu0 0.0
        %1628 = vmatmul.mubr.f32.gmra.mrb[0].mxu0 %v1558
        %v1629 = vpop.f32.mrb[0].mxu0
        %v1630 = vadd.f32 %v1555, %v1629
        %v1631 = vpop.f32.mrb[0].mxu0
        %1632 = vmatprep.mubr.f32.mxu0 0.0
        %1633 = vmatmul.mubr.f32.gmra.mrb[0].mxu0 %v1561
        %v1634 = vpop.f32.mrb[0].mxu0
        %v1635 = vadd.f32 %v1555, %v1634
        %v1636 = vpop.f32.mrb[0].mxu0
        %1637 = vdwg.mxu0
        %v1638 = vld [vmem:[%s21] sm:$0xff]
        %v1639 = vld [vmem:[%s21 + $0x8] sm:$0xff]
        %v1640 = vld [vmem:[%s21 + $0x10] sm:$0xff]
        %v1641 = vld [vmem:[%s21 + $0x18] sm:$0xff]
        %s1642 = sld [smem:[#allocation3 + %s43]]
        %v1644 = vsel %vm811, 0.0, 0
        %1646 = vmatprep.subr.mxu0 0.0
        %1647 = vmatpush1.msra.mxu0 %v1638
        %1648 = vmatprep.subr.mxu0 0.0
        %1649 = vmatpush1.msra.mxu0 %v1639
        %1650 = vmatprep.subr.mxu0 0.0
        %1651 = vmatpush1.msra.mxu0 %v1640
        %1652 = vmatprep.subr.mxu0 0.0
        %1653 = vmatpush1.msra.mxu0 %v1641
        %1654 = vmatprep.subr.mxu0 0.0
        %1655 = vmatpush1.msra.mxu0 0.0
        %1656 = vmatprep.subr.mxu0 0.0
        %1657 = vmatpush1.msra.mxu0 0.0
        %1658 = vmatprep.subr.mxu0 0.0
        %1659 = vmatpush1.msra.mxu0 0.0
        %1660 = vmatprep.subr.mxu0 0.0
        %1661 = vmatpush1.msra.mxu0 0.0
        %1662 = vmatprep.subr.mxu0 0.0
        %1663 = vmatpush1.msra.mxu0 0.0
        %1664 = vmatprep.subr.mxu0 0.0
        %1665 = vmatpush1.msra.mxu0 0.0
        %1666 = vmatprep.subr.mxu0 0.0
        %1667 = vmatpush1.msra.mxu0 0.0
        %1668 = vmatprep.subr.mxu0 0.0
        %1669 = vmatpush1.msra.mxu0 0.0
        %1670 = vmatprep.subr.mxu0 0.0
        %1671 = vmatpush1.msra.mxu0 0.0
        %1672 = vmatprep.subr.mxu0 0.0
        %1673 = vmatpush1.msra.mxu0 0.0
        %1674 = vmatprep.subr.mxu0 0.0
        %1675 = vmatpush1.msra.mxu0 0.0
        %1676 = vmatprep.subr.mxu0 0.0
        %1677 = vmatpush1.msra.mxu0 0.0
        %1678 = vmatprep.subr.mxu0 0.0
        %1679 = vmatpush1.msra.mxu0 0.0
        %1680 = vmatprep.subr.mxu0 0.0
        %1681 = vmatpush1.msra.mxu0 0.0
        %1682 = vmatprep.subr.mxu0 0.0
        %1683 = vmatpush1.msra.mxu0 0.0
        %1684 = vmatprep.subr.mxu0 0.0
        %1685 = vmatpush1.msra.mxu0 0.0
        %1686 = vmatprep.subr.mxu0 0.0
        %1687 = vmatpush1.msra.mxu0 0.0
        %1688 = vmatprep.subr.mxu0 0.0
        %1689 = vmatpush1.msra.mxu0 0.0
        %1690 = vmatprep.subr.mxu0 0.0
        %1691 = vmatpush1.msra.mxu0 0.0
        %1692 = vmatprep.subr.mxu0 0.0
        %1693 = vmatpush1.msra.mxu0 0.0
        %1694 = vmatprep.subr.mxu0 0.0
        %1695 = vmatpush1.msra.mxu0 0.0
        %1696 = vmatprep.subr.mxu0 0.0
        %1697 = vmatpush1.msra.mxu0 0.0
        %1698 = vmatprep.subr.mxu0 0.0
        %1699 = vmatpush1.msra.mxu0 0.0
        %1700 = vmatprep.subr.mxu0 0.0
        %1701 = vmatpush1.msra.mxu0 0.0
        %1702 = vmatprep.subr.mxu0 0.0
        %1703 = vmatpush1.msra.mxu0 0.0
        %1704 = vmatprep.subr.mxu0 0.0
        %1705 = vmatpush1.msra.mxu0 0.0
        %1706 = vmatprep.subr.mxu0 0.0
        %1707 = vmatpush1.msra.mxu0 0.0
        %1708 = vmatprep.subr.mxu0 0.0
        %1709 = vmatpush1.msra.mxu0 0.0
        %1710 = vmatprep.mubr.f32.mxu0 0.0
        %1711 = vmatmul.mubr.f32.gmra.mrb[0].mxu0 %v1644
        %v1712 = vpop.f32.mrb[0].mxu0
        %v1713 = vadd.f32 0.0, %v1712
        %v1714 = vpop.f32.mrb[0].mxu0
        %1715 = vdwg.mxu0
        %v1716 = vadd.f32 %v1630, %v1713
        %v1717 = vxor.u32 %v1716, 2147483648
        %v1718 = vmul.f32 %v1717, 1.442695
        %v1719 = vpow.pop %v1718
        %v1720 = vadd.f32 %v1719, 1.0
        %v1721 = vrcp.pop %v1720
        %v1722 = vmul.f32 1.0, %v1721
        %v1723 = vtanh.pop %v1716
        %v1724 = vmul.f32 %v1722, 0.0
        %1726 = vrot.lane.b32.xlu0 %v1723, 64
        %v1727 = vpop.permute.xlu0 %1726
        %v1729 = vmul.f32 %v1722, %v1727
        %1731 = vrot.lane.b32.xlu0 %v1729, 32
        %v1732 = vpop.permute.xlu0 %1731
        %v1734 = vadd.f32 %v1724, %v1732
        %v1735 = vtanh.pop %v1734
        %1737 = vrot.lane.b32.xlu0 %v1735, 64
        %v1738 = vpop.permute.xlu0 %1737
        %v1740 = vmul.f32 %v1722, %v1738
        %p1741 = scmp.gt.s32.totalorder %s1642, 0
        %s1742 = scalar_select %p1741, 1, 0
        %v1743 = vstv %s1742
        %vm1744 = vcmp.eq.s32.totalorder %v1743, 1
        %v1745 = vsel %vm1744, %v1740, 0.0
        %v1746 = vsel %vm1744, %v1734, 0.0
        %1748 = vrot.lane.b32.xlu0 %v1745, 32
        %v1749 = vpop.permute.xlu0 %1748
        %v1750 = vsel %vm811, %v1749, 0
        %1752 = vmatprep.subr.mxu0 0.0
        %1753 = vmatpush1.msra.mxu0 %v1638
        %1754 = vmatprep.subr.mxu0 0.0
        %1755 = vmatpush1.msra.mxu0 %v1639
        %1756 = vmatprep.subr.mxu0 0.0
        %1757 = vmatpush1.msra.mxu0 %v1640
        %1758 = vmatprep.subr.mxu0 0.0
        %1759 = vmatpush1.msra.mxu0 %v1641
        %1760 = vmatprep.subr.mxu0 0.0
        %1761 = vmatpush1.msra.mxu0 0.0
        %1762 = vmatprep.subr.mxu0 0.0
        %1763 = vmatpush1.msra.mxu0 0.0
        %1764 = vmatprep.subr.mxu0 0.0
        %1765 = vmatpush1.msra.mxu0 0.0
        %1766 = vmatprep.subr.mxu0 0.0
        %1767 = vmatpush1.msra.mxu0 0.0
        %1768 = vmatprep.subr.mxu0 0.0
        %1769 = vmatpush1.msra.mxu0 0.0
        %1770 = vmatprep.subr.mxu0 0.0
        %1771 = vmatpush1.msra.mxu0 0.0
        %1772 = vmatprep.subr.mxu0 0.0
        %1773 = vmatpush1.msra.mxu0 0.0
        %1774 = vmatprep.subr.mxu0 0.0
        %1775 = vmatpush1.msra.mxu0 0.0
        %1776 = vmatprep.subr.mxu0 0.0
        %1777 = vmatpush1.msra.mxu0 0.0
        %1778 = vmatprep.subr.mxu0 0.0
        %1779 = vmatpush1.msra.mxu0 0.0
        %1780 = vmatprep.subr.mxu0 0.0
        %1781 = vmatpush1.msra.mxu0 0.0
        %1782 = vmatprep.subr.mxu0 0.0
        %1783 = vmatpush1.msra.mxu0 0.0
        %1784 = vmatprep.subr.mxu0 0.0
        %1785 = vmatpush1.msra.mxu0 0.0
        %1786 = vmatprep.subr.mxu0 0.0
        %1787 = vmatpush1.msra.mxu0 0.0
        %1788 = vmatprep.subr.mxu0 0.0
        %1789 = vmatpush1.msra.mxu0 0.0
        %1790 = vmatprep.subr.mxu0 0.0
        %1791 = vmatpush1.msra.mxu0 0.0
        %1792 = vmatprep.subr.mxu0 0.0
        %1793 = vmatpush1.msra.mxu0 0.0
        %1794 = vmatprep.subr.mxu0 0.0
        %1795 = vmatpush1.msra.mxu0 0.0
        %1796 = vmatprep.subr.mxu0 0.0
        %1797 = vmatpush1.msra.mxu0 0.0
        %1798 = vmatprep.subr.mxu0 0.0
        %1799 = vmatpush1.msra.mxu0 0.0
        %1800 = vmatprep.subr.mxu0 0.0
        %1801 = vmatpush1.msra.mxu0 0.0
        %1802 = vmatprep.subr.mxu0 0.0
        %1803 = vmatpush1.msra.mxu0 0.0
        %1804 = vmatprep.subr.mxu0 0.0
        %1805 = vmatpush1.msra.mxu0 0.0
        %1806 = vmatprep.subr.mxu0 0.0
        %1807 = vmatpush1.msra.mxu0 0.0
        %1808 = vmatprep.subr.mxu0 0.0
        %1809 = vmatpush1.msra.mxu0 0.0
        %1810 = vmatprep.subr.mxu0 0.0
        %1811 = vmatpush1.msra.mxu0 0.0
        %1812 = vmatprep.subr.mxu0 0.0
        %1813 = vmatpush1.msra.mxu0 0.0
        %1814 = vmatprep.subr.mxu0 0.0
        %1815 = vmatpush1.msra.mxu0 0.0
        %1816 = vmatprep.mubr.f32.mxu0 0.0
        %1817 = vmatmul.mubr.f32.gmra.mrb[0].mxu0 %v1750
        %v1818 = vpop.f32.mrb[0].mxu0
        %v1819 = vadd.f32 0.0, %v1818
        %v1820 = vpop.f32.mrb[0].mxu0
        %1821 = vdwg.mxu0
        %v1823 = vrot.slane %v1819, 7
        %v1825 = vadd.f32 %v1630, %v1823
        %v1826 = vxor.u32 %v1825, 2147483648
        %v1827 = vmul.f32 %v1826, 1.442695
        %v1828 = vpow.pop %v1827
        %v1829 = vadd.f32 %v1828, 1.0
        %v1830 = vrcp.pop %v1829
        %v1831 = vmul.f32 1.0, %v1830
        %v1832 = vtanh.pop %v1825
        %v1834 = vrot.slane %v1746, 7
        %v1836 = vmul.f32 %v1831, %v1834
        %1838 = vrot.lane.b32.xlu0 %v1832, 64
        %v1839 = vpop.permute.xlu0 %1838
        %v1841 = vmul.f32 %v1831, %v1839
        %1843 = vrot.lane.b32.xlu0 %v1841, 32
        %v1844 = vpop.permute.xlu0 %1843
        %v1846 = vadd.f32 %v1836, %v1844
        %v1847 = vtanh.pop %v1846
        %1849 = vrot.lane.b32.xlu0 %v1847, 64
        %v1850 = vpop.permute.xlu0 %1849
        %v1852 = vmul.f32 %v1831, %v1850
        %p1853 = scmp.gt.s32.totalorder %s1642, 1
        %s1854 = scalar_select %p1853, 1, 0
        %v1855 = vstv %s1854
        %vm1856 = vcmp.eq.s32.totalorder %v1855, 1
        %v1857 = vrot.slane %v1745, 7
        %v1859 = vsel %vm1856, %v1852, %v1857
        %v1860 = vsel %vm1856, %v1846, %v1834
        %v1862 = vrot.slane %v1859, 1
        %1863 = vrot.lane.b32.xlu0 %v1862, 32
        %v1864 = vpop.permute.xlu0 %1863
        %v1865 = vsel %vm811, %v1864, 0
        %1867 = vmatprep.subr.mxu0 0.0
        %1868 = vmatpush1.msra.mxu0 %v1638
        %1869 = vmatprep.subr.mxu0 0.0
        %1870 = vmatpush1.msra.mxu0 %v1639
        %1871 = vmatprep.subr.mxu0 0.0
        %1872 = vmatpush1.msra.mxu0 %v1640
        %1873 = vmatprep.subr.mxu0 0.0
        %1874 = vmatpush1.msra.mxu0 %v1641
        %1875 = vmatprep.subr.mxu0 0.0
        %1876 = vmatpush1.msra.mxu0 0.0
        %1877 = vmatprep.subr.mxu0 0.0
        %1878 = vmatpush1.msra.mxu0 0.0
        %1879 = vmatprep.subr.mxu0 0.0
        %1880 = vmatpush1.msra.mxu0 0.0
        %1881 = vmatprep.subr.mxu0 0.0
        %1882 = vmatpush1.msra.mxu0 0.0
        %1883 = vmatprep.subr.mxu0 0.0
        %1884 = vmatpush1.msra.mxu0 0.0
        %1885 = vmatprep.subr.mxu0 0.0
        %1886 = vmatpush1.msra.mxu0 0.0
        %1887 = vmatprep.subr.mxu0 0.0
        %1888 = vmatpush1.msra.mxu0 0.0
        %1889 = vmatprep.subr.mxu0 0.0
        %1890 = vmatpush1.msra.mxu0 0.0
        %1891 = vmatprep.subr.mxu0 0.0
        %1892 = vmatpush1.msra.mxu0 0.0
        %1893 = vmatprep.subr.mxu0 0.0
        %1894 = vmatpush1.msra.mxu0 0.0
        %1895 = vmatprep.subr.mxu0 0.0
        %1896 = vmatpush1.msra.mxu0 0.0
        %1897 = vmatprep.subr.mxu0 0.0
        %1898 = vmatpush1.msra.mxu0 0.0
        %1899 = vmatprep.subr.mxu0 0.0
        %1900 = vmatpush1.msra.mxu0 0.0
        %1901 = vmatprep.subr.mxu0 0.0
        %1902 = vmatpush1.msra.mxu0 0.0
        %1903 = vmatprep.subr.mxu0 0.0
        %1904 = vmatpush1.msra.mxu0 0.0
        %1905 = vmatprep.subr.mxu0 0.0
        %1906 = vmatpush1.msra.mxu0 0.0
        %1907 = vmatprep.subr.mxu0 0.0
        %1908 = vmatpush1.msra.mxu0 0.0
        %1909 = vmatprep.subr.mxu0 0.0
        %1910 = vmatpush1.msra.mxu0 0.0
        %1911 = vmatprep.subr.mxu0 0.0
        %1912 = vmatpush1.msra.mxu0 0.0
        %1913 = vmatprep.subr.mxu0 0.0
        %1914 = vmatpush1.msra.mxu0 0.0
        %1915 = vmatprep.subr.mxu0 0.0
        %1916 = vmatpush1.msra.mxu0 0.0
        %1917 = vmatprep.subr.mxu0 0.0
        %1918 = vmatpush1.msra.mxu0 0.0
        %1919 = vmatprep.subr.mxu0 0.0
        %1920 = vmatpush1.msra.mxu0 0.0
        %1921 = vmatprep.subr.mxu0 0.0
        %1922 = vmatpush1.msra.mxu0 0.0
        %1923 = vmatprep.subr.mxu0 0.0
        %1924 = vmatpush1.msra.mxu0 0.0
        %1925 = vmatprep.subr.mxu0 0.0
        %1926 = vmatpush1.msra.mxu0 0.0
        %1927 = vmatprep.subr.mxu0 0.0
        %1928 = vmatpush1.msra.mxu0 0.0
        %1929 = vmatprep.subr.mxu0 0.0
        %1930 = vmatpush1.msra.mxu0 0.0
        %1931 = vmatprep.mubr.f32.mxu0 0.0
        %1932 = vmatmul.mubr.f32.gmra.mrb[0].mxu0 %v1865
        %v1933 = vpop.f32.mrb[0].mxu0
        %v1934 = vadd.f32 0.0, %v1933
        %v1935 = vpop.f32.mrb[0].mxu0
        %1936 = vdwg.mxu0
        %v1938 = vrot.slane %v1934, 6
        %v1940 = vadd.f32 %v1630, %v1938
        %v1941 = vxor.u32 %v1940, 2147483648
        %v1942 = vmul.f32 %v1941, 1.442695
        %v1943 = vpow.pop %v1942
        %v1944 = vadd.f32 %v1943, 1.0
        %v1945 = vrcp.pop %v1944
        %v1946 = vmul.f32 1.0, %v1945
        %v1947 = vtanh.pop %v1940
        %v1949 = vrot.slane %v1860, 7
        %v1951 = vmul.f32 %v1946, %v1949
        %1953 = vrot.lane.b32.xlu0 %v1947, 64
        %v1954 = vpop.permute.xlu0 %1953
        %v1956 = vmul.f32 %v1946, %v1954
        %1958 = vrot.lane.b32.xlu0 %v1956, 32
        %v1959 = vpop.permute.xlu0 %1958
        %v1961 = vadd.f32 %v1951, %v1959
        %v1962 = vtanh.pop %v1961
        %1964 = vrot.lane.b32.xlu0 %v1962, 64
        %v1965 = vpop.permute.xlu0 %1964
        %v1967 = vmul.f32 %v1946, %v1965
        %p1968 = scmp.gt.s32.totalorder %s1642, 2
        %s1969 = scalar_select %p1968, 1, 0
        %v1970 = vstv %s1969
        %vm1971 = vcmp.eq.s32.totalorder %v1970, 1
        %v1972 = vrot.slane %v1859, 7
        %v1974 = vsel %vm1971, %v1967, %v1972
        %v1975 = vsel %vm1971, %v1961, %v1949
        %v1977 = vrot.slane %v1974, 2
        %1978 = vrot.lane.b32.xlu0 %v1977, 32
        %v1979 = vpop.permute.xlu0 %1978
        %v1980 = vsel %vm811, %v1979, 0
        %1982 = vmatprep.subr.mxu0 0.0
        %1983 = vmatpush1.msra.mxu0 %v1638
        %1984 = vmatprep.subr.mxu0 0.0
        %1985 = vmatpush1.msra.mxu0 %v1639
        %1986 = vmatprep.subr.mxu0 0.0
        %1987 = vmatpush1.msra.mxu0 %v1640
        %1988 = vmatprep.subr.mxu0 0.0
        %1989 = vmatpush1.msra.mxu0 %v1641
        %1990 = vmatprep.subr.mxu0 0.0
        %1991 = vmatpush1.msra.mxu0 0.0
        %1992 = vmatprep.subr.mxu0 0.0
        %1993 = vmatpush1.msra.mxu0 0.0
        %1994 = vmatprep.subr.mxu0 0.0
        %1995 = vmatpush1.msra.mxu0 0.0
        %1996 = vmatprep.subr.mxu0 0.0
        %1997 = vmatpush1.msra.mxu0 0.0
        %1998 = vmatprep.subr.mxu0 0.0
        %1999 = vmatpush1.msra.mxu0 0.0
        %2000 = vmatprep.subr.mxu0 0.0
        %2001 = vmatpush1.msra.mxu0 0.0
        %2002 = vmatprep.subr.mxu0 0.0
        %2003 = vmatpush1.msra.mxu0 0.0
        %2004 = vmatprep.subr.mxu0 0.0
        %2005 = vmatpush1.msra.mxu0 0.0
        %2006 = vmatprep.subr.mxu0 0.0
        %2007 = vmatpush1.msra.mxu0 0.0
        %2008 = vmatprep.subr.mxu0 0.0
        %2009 = vmatpush1.msra.mxu0 0.0
        %2010 = vmatprep.subr.mxu0 0.0
        %2011 = vmatpush1.msra.mxu0 0.0
        %2012 = vmatprep.subr.mxu0 0.0
        %2013 = vmatpush1.msra.mxu0 0.0
        %2014 = vmatprep.subr.mxu0 0.0
        %2015 = vmatpush1.msra.mxu0 0.0
        %2016 = vmatprep.subr.mxu0 0.0
        %2017 = vmatpush1.msra.mxu0 0.0
        %2018 = vmatprep.subr.mxu0 0.0
        %2019 = vmatpush1.msra.mxu0 0.0
        %2020 = vmatprep.subr.mxu0 0.0
        %2021 = vmatpush1.msra.mxu0 0.0
        %2022 = vmatprep.subr.mxu0 0.0
        %2023 = vmatpush1.msra.mxu0 0.0
        %2024 = vmatprep.subr.mxu0 0.0
        %2025 = vmatpush1.msra.mxu0 0.0
        %2026 = vmatprep.subr.mxu0 0.0
        %2027 = vmatpush1.msra.mxu0 0.0
        %2028 = vmatprep.subr.mxu0 0.0
        %2029 = vmatpush1.msra.mxu0 0.0
        %2030 = vmatprep.subr.mxu0 0.0
        %2031 = vmatpush1.msra.mxu0 0.0
        %2032 = vmatprep.subr.mxu0 0.0
        %2033 = vmatpush1.msra.mxu0 0.0
        %2034 = vmatprep.subr.mxu0 0.0
        %2035 = vmatpush1.msra.mxu0 0.0
        %2036 = vmatprep.subr.mxu0 0.0
        %2037 = vmatpush1.msra.mxu0 0.0
        %2038 = vmatprep.subr.mxu0 0.0
        %2039 = vmatpush1.msra.mxu0 0.0
        %2040 = vmatprep.subr.mxu0 0.0
        %2041 = vmatpush1.msra.mxu0 0.0
        %2042 = vmatprep.subr.mxu0 0.0
        %2043 = vmatpush1.msra.mxu0 0.0
        %2044 = vmatprep.subr.mxu0 0.0
        %2045 = vmatpush1.msra.mxu0 0.0
        %2046 = vmatprep.mubr.f32.mxu0 0.0
        %2047 = vmatmul.mubr.f32.gmra.mrb[0].mxu0 %v1980
        %v2048 = vpop.f32.mrb[0].mxu0
        %v2049 = vadd.f32 0.0, %v2048
        %v2050 = vpop.f32.mrb[0].mxu0
        %2051 = vdwg.mxu0
        %v2053 = vrot.slane %v2049, 5
        %v2055 = vadd.f32 %v1630, %v2053
        %v2056 = vxor.u32 %v2055, 2147483648
        %v2057 = vmul.f32 %v2056, 1.442695
        %v2058 = vpow.pop %v2057
        %v2059 = vadd.f32 %v2058, 1.0
        %v2060 = vrcp.pop %v2059
        %v2061 = vmul.f32 1.0, %v2060
        %v2062 = vtanh.pop %v2055
        %v2064 = vrot.slane %v1975, 7
        %v2066 = vmul.f32 %v2061, %v2064
        %2068 = vrot.lane.b32.xlu0 %v2062, 64
        %v2069 = vpop.permute.xlu0 %2068
        %v2071 = vmul.f32 %v2061, %v2069
        %2073 = vrot.lane.b32.xlu0 %v2071, 32
        %v2074 = vpop.permute.xlu0 %2073
        %v2076 = vadd.f32 %v2066, %v2074
        %v2077 = vtanh.pop %v2076
        %2079 = vrot.lane.b32.xlu0 %v2077, 64
        %v2080 = vpop.permute.xlu0 %2079
        %v2082 = vmul.f32 %v2061, %v2080
        %p2083 = scmp.gt.s32.totalorder %s1642, 3
        %s2084 = scalar_select %p2083, 1, 0
        %v2085 = vstv %s2084
        %vm2086 = vcmp.eq.s32.totalorder %v2085, 1
        %v2087 = vrot.slane %v1974, 7
        %v2089 = vsel %vm2086, %v2082, %v2087
        %v2090 = vsel %vm2086, %v2076, %v2064
        %v2092 = vrot.slane %v2089, 3
        %2093 = vrot.lane.b32.xlu0 %v2092, 32
        %v2094 = vpop.permute.xlu0 %2093
        %v2095 = vsel %vm811, %v2094, 0
        %2097 = vmatprep.subr.mxu0 0.0
        %2098 = vmatpush1.msra.mxu0 %v1638
        %2099 = vmatprep.subr.mxu0 0.0
        %2100 = vmatpush1.msra.mxu0 %v1639
        %2101 = vmatprep.subr.mxu0 0.0
        %2102 = vmatpush1.msra.mxu0 %v1640
        %2103 = vmatprep.subr.mxu0 0.0
        %2104 = vmatpush1.msra.mxu0 %v1641
        %2105 = vmatprep.subr.mxu0 0.0
        %2106 = vmatpush1.msra.mxu0 0.0
        %2107 = vmatprep.subr.mxu0 0.0
        %2108 = vmatpush1.msra.mxu0 0.0
        %2109 = vmatprep.subr.mxu0 0.0
        %2110 = vmatpush1.msra.mxu0 0.0
        %2111 = vmatprep.subr.mxu0 0.0
        %2112 = vmatpush1.msra.mxu0 0.0
        %2113 = vmatprep.subr.mxu0 0.0
        %2114 = vmatpush1.msra.mxu0 0.0
        %2115 = vmatprep.subr.mxu0 0.0
        %2116 = vmatpush1.msra.mxu0 0.0
        %2117 = vmatprep.subr.mxu0 0.0
        %2118 = vmatpush1.msra.mxu0 0.0
        %2119 = vmatprep.subr.mxu0 0.0
        %2120 = vmatpush1.msra.mxu0 0.0
        %2121 = vmatprep.subr.mxu0 0.0
        %2122 = vmatpush1.msra.mxu0 0.0
        %2123 = vmatprep.subr.mxu0 0.0
        %2124 = vmatpush1.msra.mxu0 0.0
        %2125 = vmatprep.subr.mxu0 0.0
        %2126 = vmatpush1.msra.mxu0 0.0
        %2127 = vmatprep.subr.mxu0 0.0
        %2128 = vmatpush1.msra.mxu0 0.0
        %2129 = vmatprep.subr.mxu0 0.0
        %2130 = vmatpush1.msra.mxu0 0.0
        %2131 = vmatprep.subr.mxu0 0.0
        %2132 = vmatpush1.msra.mxu0 0.0
        %2133 = vmatprep.subr.mxu0 0.0
        %2134 = vmatpush1.msra.mxu0 0.0
        %2135 = vmatprep.subr.mxu0 0.0
        %2136 = vmatpush1.msra.mxu0 0.0
        %2137 = vmatprep.subr.mxu0 0.0
        %2138 = vmatpush1.msra.mxu0 0.0
        %2139 = vmatprep.subr.mxu0 0.0
        %2140 = vmatpush1.msra.mxu0 0.0
        %2141 = vmatprep.subr.mxu0 0.0
        %2142 = vmatpush1.msra.mxu0 0.0
        %2143 = vmatprep.subr.mxu0 0.0
        %2144 = vmatpush1.msra.mxu0 0.0
        %2145 = vmatprep.subr.mxu0 0.0
        %2146 = vmatpush1.msra.mxu0 0.0
        %2147 = vmatprep.subr.mxu0 0.0
        %2148 = vmatpush1.msra.mxu0 0.0
        %2149 = vmatprep.subr.mxu0 0.0
        %2150 = vmatpush1.msra.mxu0 0.0
        %2151 = vmatprep.subr.mxu0 0.0
        %2152 = vmatpush1.msra.mxu0 0.0
        %2153 = vmatprep.subr.mxu0 0.0
        %2154 = vmatpush1.msra.mxu0 0.0
        %2155 = vmatprep.subr.mxu0 0.0
        %2156 = vmatpush1.msra.mxu0 0.0
        %2157 = vmatprep.subr.mxu0 0.0
        %2158 = vmatpush1.msra.mxu0 0.0
        %2159 = vmatprep.subr.mxu0 0.0
        %2160 = vmatpush1.msra.mxu0 0.0
        %2161 = vmatprep.mubr.f32.mxu0 0.0
        %2162 = vmatmul.mubr.f32.gmra.mrb[0].mxu0 %v2095
        %v2163 = vpop.f32.mrb[0].mxu0
        %v2164 = vadd.f32 0.0, %v2163
        %v2165 = vpop.f32.mrb[0].mxu0
        %2166 = vdwg.mxu0
        %v2168 = vrot.slane %v2164, 4
        %v2170 = vadd.f32 %v1630, %v2168
        %v2171 = vxor.u32 %v2170, 2147483648
        %v2172 = vmul.f32 %v2171, 1.442695
        %v2173 = vpow.pop %v2172
        %v2174 = vadd.f32 %v2173, 1.0
        %v2175 = vrcp.pop %v2174
        %v2176 = vmul.f32 1.0, %v2175
        %v2177 = vtanh.pop %v2170
        %v2179 = vrot.slane %v2090, 7
        %v2181 = vmul.f32 %v2176, %v2179
        %2183 = vrot.lane.b32.xlu0 %v2177, 64
        %v2184 = vpop.permute.xlu0 %2183
        %v2186 = vmul.f32 %v2176, %v2184
        %2188 = vrot.lane.b32.xlu0 %v2186, 32
        %v2189 = vpop.permute.xlu0 %2188
        %v2191 = vadd.f32 %v2181, %v2189
        %v2192 = vtanh.pop %v2191
        %2194 = vrot.lane.b32.xlu0 %v2192, 64
        %v2195 = vpop.permute.xlu0 %2194
        %v2197 = vmul.f32 %v2176, %v2195
        %p2198 = scmp.gt.s32.totalorder %s1642, 4
        %s2199 = scalar_select %p2198, 1, 0
        %v2200 = vstv %s2199
        %vm2201 = vcmp.eq.s32.totalorder %v2200, 1
        %v2202 = vrot.slane %v2089, 7
        %v2204 = vsel %vm2201, %v2197, %v2202
        %v2205 = vsel %vm2201, %v2191, %v2179
        %v2207 = vrot.slane %v2204, 4
        %2208 = vrot.lane.b32.xlu0 %v2207, 32
        %v2209 = vpop.permute.xlu0 %2208
        %v2210 = vsel %vm811, %v2209, 0
        %2212 = vmatprep.subr.mxu0 0.0
        %2213 = vmatpush1.msra.mxu0 %v1638
        %2214 = vmatprep.subr.mxu0 0.0
        %2215 = vmatpush1.msra.mxu0 %v1639
        %2216 = vmatprep.subr.mxu0 0.0
        %2217 = vmatpush1.msra.mxu0 %v1640
        %2218 = vmatprep.subr.mxu0 0.0
        %2219 = vmatpush1.msra.mxu0 %v1641
        %2220 = vmatprep.subr.mxu0 0.0
        %2221 = vmatpush1.msra.mxu0 0.0
        %2222 = vmatprep.subr.mxu0 0.0
        %2223 = vmatpush1.msra.mxu0 0.0
        %2224 = vmatprep.subr.mxu0 0.0
        %2225 = vmatpush1.msra.mxu0 0.0
        %2226 = vmatprep.subr.mxu0 0.0
        %2227 = vmatpush1.msra.mxu0 0.0
        %2228 = vmatprep.subr.mxu0 0.0
        %2229 = vmatpush1.msra.mxu0 0.0
        %2230 = vmatprep.subr.mxu0 0.0
        %2231 = vmatpush1.msra.mxu0 0.0
        %2232 = vmatprep.subr.mxu0 0.0
        %2233 = vmatpush1.msra.mxu0 0.0
        %2234 = vmatprep.subr.mxu0 0.0
        %2235 = vmatpush1.msra.mxu0 0.0
        %2236 = vmatprep.subr.mxu0 0.0
        %2237 = vmatpush1.msra.mxu0 0.0
        %2238 = vmatprep.subr.mxu0 0.0
        %2239 = vmatpush1.msra.mxu0 0.0
        %2240 = vmatprep.subr.mxu0 0.0
        %2241 = vmatpush1.msra.mxu0 0.0
        %2242 = vmatprep.subr.mxu0 0.0
        %2243 = vmatpush1.msra.mxu0 0.0
        %2244 = vmatprep.subr.mxu0 0.0
        %2245 = vmatpush1.msra.mxu0 0.0
        %2246 = vmatprep.subr.mxu0 0.0
        %2247 = vmatpush1.msra.mxu0 0.0
        %2248 = vmatprep.subr.mxu0 0.0
        %2249 = vmatpush1.msra.mxu0 0.0
        %2250 = vmatprep.subr.mxu0 0.0
        %2251 = vmatpush1.msra.mxu0 0.0
        %2252 = vmatprep.subr.mxu0 0.0
        %2253 = vmatpush1.msra.mxu0 0.0
        %2254 = vmatprep.subr.mxu0 0.0
        %2255 = vmatpush1.msra.mxu0 0.0
        %2256 = vmatprep.subr.mxu0 0.0
        %2257 = vmatpush1.msra.mxu0 0.0
        %2258 = vmatprep.subr.mxu0 0.0
        %2259 = vmatpush1.msra.mxu0 0.0
        %2260 = vmatprep.subr.mxu0 0.0
        %2261 = vmatpush1.msra.mxu0 0.0
        %2262 = vmatprep.subr.mxu0 0.0
        %2263 = vmatpush1.msra.mxu0 0.0
        %2264 = vmatprep.subr.mxu0 0.0
        %2265 = vmatpush1.msra.mxu0 0.0
        %2266 = vmatprep.subr.mxu0 0.0
        %2267 = vmatpush1.msra.mxu0 0.0
        %2268 = vmatprep.subr.mxu0 0.0
        %2269 = vmatpush1.msra.mxu0 0.0
        %2270 = vmatprep.subr.mxu0 0.0
        %2271 = vmatpush1.msra.mxu0 0.0
        %2272 = vmatprep.subr.mxu0 0.0
        %2273 = vmatpush1.msra.mxu0 0.0
        %2274 = vmatprep.subr.mxu0 0.0
        %2275 = vmatpush1.msra.mxu0 0.0
        %2276 = vmatprep.mubr.f32.mxu0 0.0
        %2277 = vmatmul.mubr.f32.gmra.mrb[0].mxu0 %v2210
        %v2278 = vpop.f32.mrb[0].mxu0
        %v2279 = vadd.f32 0.0, %v2278
        %v2280 = vpop.f32.mrb[0].mxu0
        %2281 = vdwg.mxu0
        %v2283 = vrot.slane %v2279, 3
        %v2285 = vadd.f32 %v1630, %v2283
        %v2286 = vxor.u32 %v2285, 2147483648
        %v2287 = vmul.f32 %v2286, 1.442695
        %v2288 = vpow.pop %v2287
        %v2289 = vadd.f32 %v2288, 1.0
        %v2290 = vrcp.pop %v2289
        %v2291 = vmul.f32 1.0, %v2290
        %v2292 = vtanh.pop %v2285
        %v2294 = vrot.slane %v2205, 7
        %v2296 = vmul.f32 %v2291, %v2294
        %2298 = vrot.lane.b32.xlu0 %v2292, 64
        %v2299 = vpop.permute.xlu0 %2298
        %v2301 = vmul.f32 %v2291, %v2299
        %2303 = vrot.lane.b32.xlu0 %v2301, 32
        %v2304 = vpop.permute.xlu0 %2303
        %v2306 = vadd.f32 %v2296, %v2304
        %v2307 = vtanh.pop %v2306
        %2309 = vrot.lane.b32.xlu0 %v2307, 64
        %v2310 = vpop.permute.xlu0 %2309
        %v2312 = vmul.f32 %v2291, %v2310
        %p2313 = scmp.gt.s32.totalorder %s1642, 5
        %s2314 = scalar_select %p2313, 1, 0
        %v2315 = vstv %s2314
        %vm2316 = vcmp.eq.s32.totalorder %v2315, 1
        %v2317 = vrot.slane %v2204, 7
        %v2319 = vsel %vm2316, %v2312, %v2317
        %v2320 = vsel %vm2316, %v2306, %v2294
        %v2322 = vrot.slane %v2319, 5
        %2323 = vrot.lane.b32.xlu0 %v2322, 32
        %v2324 = vpop.permute.xlu0 %2323
        %v2325 = vsel %vm811, %v2324, 0
        %2327 = vmatprep.subr.mxu0 0.0
        %2328 = vmatpush1.msra.mxu0 %v1638
        %2329 = vmatprep.subr.mxu0 0.0
        %2330 = vmatpush1.msra.mxu0 %v1639
        %2331 = vmatprep.subr.mxu0 0.0
        %2332 = vmatpush1.msra.mxu0 %v1640
        %2333 = vmatprep.subr.mxu0 0.0
        %2334 = vmatpush1.msra.mxu0 %v1641
        %2335 = vmatprep.subr.mxu0 0.0
        %2336 = vmatpush1.msra.mxu0 0.0
        %2337 = vmatprep.subr.mxu0 0.0
        %2338 = vmatpush1.msra.mxu0 0.0
        %2339 = vmatprep.subr.mxu0 0.0
        %2340 = vmatpush1.msra.mxu0 0.0
        %2341 = vmatprep.subr.mxu0 0.0
        %2342 = vmatpush1.msra.mxu0 0.0
        %2343 = vmatprep.subr.mxu0 0.0
        %2344 = vmatpush1.msra.mxu0 0.0
        %2345 = vmatprep.subr.mxu0 0.0
        %2346 = vmatpush1.msra.mxu0 0.0
        %2347 = vmatprep.subr.mxu0 0.0
        %2348 = vmatpush1.msra.mxu0 0.0
        %2349 = vmatprep.subr.mxu0 0.0
        %2350 = vmatpush1.msra.mxu0 0.0
        %2351 = vmatprep.subr.mxu0 0.0
        %2352 = vmatpush1.msra.mxu0 0.0
        %2353 = vmatprep.subr.mxu0 0.0
        %2354 = vmatpush1.msra.mxu0 0.0
        %2355 = vmatprep.subr.mxu0 0.0
        %2356 = vmatpush1.msra.mxu0 0.0
        %2357 = vmatprep.subr.mxu0 0.0
        %2358 = vmatpush1.msra.mxu0 0.0
        %2359 = vmatprep.subr.mxu0 0.0
        %2360 = vmatpush1.msra.mxu0 0.0
        %2361 = vmatprep.subr.mxu0 0.0
        %2362 = vmatpush1.msra.mxu0 0.0
        %2363 = vmatprep.subr.mxu0 0.0
        %2364 = vmatpush1.msra.mxu0 0.0
        %2365 = vmatprep.subr.mxu0 0.0
        %2366 = vmatpush1.msra.mxu0 0.0
        %2367 = vmatprep.subr.mxu0 0.0
        %2368 = vmatpush1.msra.mxu0 0.0
        %2369 = vmatprep.subr.mxu0 0.0
        %2370 = vmatpush1.msra.mxu0 0.0
        %2371 = vmatprep.subr.mxu0 0.0
        %2372 = vmatpush1.msra.mxu0 0.0
        %2373 = vmatprep.subr.mxu0 0.0
        %2374 = vmatpush1.msra.mxu0 0.0
        %2375 = vmatprep.subr.mxu0 0.0
        %2376 = vmatpush1.msra.mxu0 0.0
        %2377 = vmatprep.subr.mxu0 0.0
        %2378 = vmatpush1.msra.mxu0 0.0
        %2379 = vmatprep.subr.mxu0 0.0
        %2380 = vmatpush1.msra.mxu0 0.0
        %2381 = vmatprep.subr.mxu0 0.0
        %2382 = vmatpush1.msra.mxu0 0.0
        %2383 = vmatprep.subr.mxu0 0.0
        %2384 = vmatpush1.msra.mxu0 0.0
        %2385 = vmatprep.subr.mxu0 0.0
        %2386 = vmatpush1.msra.mxu0 0.0
        %2387 = vmatprep.subr.mxu0 0.0
        %2388 = vmatpush1.msra.mxu0 0.0
        %2389 = vmatprep.subr.mxu0 0.0
        %2390 = vmatpush1.msra.mxu0 0.0
        %2391 = vmatprep.mubr.f32.mxu0 0.0
        %2392 = vmatmul.mubr.f32.gmra.mrb[0].mxu0 %v2325
        %v2393 = vpop.f32.mrb[0].mxu0
        %v2394 = vadd.f32 0.0, %v2393
        %v2395 = vpop.f32.mrb[0].mxu0
        %2396 = vdwg.mxu0
        %v2398 = vrot.slane %v2394, 2
        %v2400 = vadd.f32 %v1630, %v2398
        %v2401 = vxor.u32 %v2400, 2147483648
        %v2402 = vmul.f32 %v2401, 1.442695
        %v2403 = vpow.pop %v2402
        %v2404 = vadd.f32 %v2403, 1.0
        %v2405 = vrcp.pop %v2404
        %v2406 = vmul.f32 1.0, %v2405
        %v2407 = vtanh.pop %v2400
        %v2409 = vrot.slane %v2320, 7
        %v2411 = vmul.f32 %v2406, %v2409
        %2413 = vrot.lane.b32.xlu0 %v2407, 64
        %v2414 = vpop.permute.xlu0 %2413
        %v2416 = vmul.f32 %v2406, %v2414
        %2418 = vrot.lane.b32.xlu0 %v2416, 32
        %v2419 = vpop.permute.xlu0 %2418
        %v2421 = vadd.f32 %v2411, %v2419
        %v2422 = vtanh.pop %v2421
        %2424 = vrot.lane.b32.xlu0 %v2422, 64
        %v2425 = vpop.permute.xlu0 %2424
        %v2427 = vmul.f32 %v2406, %v2425
        %p2428 = scmp.gt.s32.totalorder %s1642, 6
        %s2429 = scalar_select %p2428, 1, 0
        %v2430 = vstv %s2429
        %vm2431 = vcmp.eq.s32.totalorder %v2430, 1
        %v2432 = vrot.slane %v2319, 7
        %v2434 = vsel %vm2431, %v2427, %v2432
        %v2435 = vsel %vm2431, %v2421, %v2409
        %v2437 = vrot.slane %v2434, 6
        %2438 = vrot.lane.b32.xlu0 %v2437, 32
        %v2439 = vpop.permute.xlu0 %2438
        %v2440 = vsel %vm811, %v2439, 0
        %2442 = vmatprep.subr.mxu0 0.0
        %2443 = vmatpush1.msra.mxu0 %v1638
        %2444 = vmatprep.subr.mxu0 0.0
        %2445 = vmatpush1.msra.mxu0 %v1639
        %2446 = vmatprep.subr.mxu0 0.0
        %2447 = vmatpush1.msra.mxu0 %v1640
        %2448 = vmatprep.subr.mxu0 0.0
        %2449 = vmatpush1.msra.mxu0 %v1641
        %2450 = vmatprep.subr.mxu0 0.0
        %2451 = vmatpush1.msra.mxu0 0.0
        %2452 = vmatprep.subr.mxu0 0.0
        %2453 = vmatpush1.msra.mxu0 0.0
        %2454 = vmatprep.subr.mxu0 0.0
        %2455 = vmatpush1.msra.mxu0 0.0
        %2456 = vmatprep.subr.mxu0 0.0
        %2457 = vmatpush1.msra.mxu0 0.0
        %2458 = vmatprep.subr.mxu0 0.0
        %2459 = vmatpush1.msra.mxu0 0.0
        %2460 = vmatprep.subr.mxu0 0.0
        %2461 = vmatpush1.msra.mxu0 0.0
        %2462 = vmatprep.subr.mxu0 0.0
        %2463 = vmatpush1.msra.mxu0 0.0
        %2464 = vmatprep.subr.mxu0 0.0
        %2465 = vmatpush1.msra.mxu0 0.0
        %2466 = vmatprep.subr.mxu0 0.0
        %2467 = vmatpush1.msra.mxu0 0.0
        %2468 = vmatprep.subr.mxu0 0.0
        %2469 = vmatpush1.msra.mxu0 0.0
        %2470 = vmatprep.subr.mxu0 0.0
        %2471 = vmatpush1.msra.mxu0 0.0
        %2472 = vmatprep.subr.mxu0 0.0
        %2473 = vmatpush1.msra.mxu0 0.0
        %2474 = vmatprep.subr.mxu0 0.0
        %2475 = vmatpush1.msra.mxu0 0.0
        %2476 = vmatprep.subr.mxu0 0.0
        %2477 = vmatpush1.msra.mxu0 0.0
        %2478 = vmatprep.subr.mxu0 0.0
        %2479 = vmatpush1.msra.mxu0 0.0
        %2480 = vmatprep.subr.mxu0 0.0
        %2481 = vmatpush1.msra.mxu0 0.0
        %2482 = vmatprep.subr.mxu0 0.0
        %2483 = vmatpush1.msra.mxu0 0.0
        %2484 = vmatprep.subr.mxu0 0.0
        %2485 = vmatpush1.msra.mxu0 0.0
        %2486 = vmatprep.subr.mxu0 0.0
        %2487 = vmatpush1.msra.mxu0 0.0
        %2488 = vmatprep.subr.mxu0 0.0
        %2489 = vmatpush1.msra.mxu0 0.0
        %2490 = vmatprep.subr.mxu0 0.0
        %2491 = vmatpush1.msra.mxu0 0.0
        %2492 = vmatprep.subr.mxu0 0.0
        %2493 = vmatpush1.msra.mxu0 0.0
        %2494 = vmatprep.subr.mxu0 0.0
        %2495 = vmatpush1.msra.mxu0 0.0
        %2496 = vmatprep.subr.mxu0 0.0
        %2497 = vmatpush1.msra.mxu0 0.0
        %2498 = vmatprep.subr.mxu0 0.0
        %2499 = vmatpush1.msra.mxu0 0.0
        %2500 = vmatprep.subr.mxu0 0.0
        %2501 = vmatpush1.msra.mxu0 0.0
        %2502 = vmatprep.subr.mxu0 0.0
        %2503 = vmatpush1.msra.mxu0 0.0
        %2504 = vmatprep.subr.mxu0 0.0
        %2505 = vmatpush1.msra.mxu0 0.0
        %2506 = vmatprep.mubr.f32.mxu0 0.0
        %2507 = vmatmul.mubr.f32.gmra.mrb[0].mxu0 %v2440
        %v2508 = vpop.f32.mrb[0].mxu0
        %v2509 = vadd.f32 0.0, %v2508
        %v2510 = vpop.f32.mrb[0].mxu0
        %2511 = vdwg.mxu0
        %v2513 = vrot.slane %v2509, 1
        %v2515 = vadd.f32 %v1630, %v2513
        %v2516 = vxor.u32 %v2515, 2147483648
        %v2517 = vmul.f32 %v2516, 1.442695
        %v2518 = vpow.pop %v2517
        %v2519 = vadd.f32 %v2518, 1.0
        %v2520 = vrcp.pop %v2519
        %v2521 = vmul.f32 1.0, %v2520
        %v2522 = vtanh.pop %v2515
        %v2524 = vrot.slane %v2435, 7
        %v2526 = vmul.f32 %v2521, %v2524
        %2528 = vrot.lane.b32.xlu0 %v2522, 64
        %v2529 = vpop.permute.xlu0 %2528
        %v2531 = vmul.f32 %v2521, %v2529
        %2533 = vrot.lane.b32.xlu0 %v2531, 32
        %v2534 = vpop.permute.xlu0 %2533
        %v2536 = vadd.f32 %v2526, %v2534
        %v2537 = vtanh.pop %v2536
        %2539 = vrot.lane.b32.xlu0 %v2537, 64
        %v2540 = vpop.permute.xlu0 %2539
        %v2542 = vmul.f32 %v2521, %v2540
        %p2543 = scmp.gt.s32.totalorder %s1642, 7
        %s2544 = scalar_select %p2543, 1, 0
        %v2545 = vstv %s2544
        %vm2546 = vcmp.eq.s32.totalorder %v2545, 1
        %v2547 = vrot.slane %v2434, 7
        %v2549 = vsel %vm2546, %v2542, %v2547
        %v2550 = vsel %vm2546, %v2536, %v2524
        %v2552 = vrot.slane %v2549, 7
        %2553 = vrot.lane.b32.xlu0 %v2552, 32
        %v2554 = vpop.permute.xlu0 %2553
        %v2555 = vsel %vm811, %v2554, 0
        %2557 = vmatprep.subr.mxu0 0.0
        %2558 = vmatpush1.msra.mxu0 %v1638
        %2559 = vmatprep.subr.mxu0 0.0
        %2560 = vmatpush1.msra.mxu0 %v1639
        %2561 = vmatprep.subr.mxu0 0.0
        %2562 = vmatpush1.msra.mxu0 %v1640
        %2563 = vmatprep.subr.mxu0 0.0
        %2564 = vmatpush1.msra.mxu0 %v1641
        %2565 = vmatprep.subr.mxu0 0.0
        %2566 = vmatpush1.msra.mxu0 0.0
        %2567 = vmatprep.subr.mxu0 0.0
        %2568 = vmatpush1.msra.mxu0 0.0
        %2569 = vmatprep.subr.mxu0 0.0
        %2570 = vmatpush1.msra.mxu0 0.0
        %2571 = vmatprep.subr.mxu0 0.0
        %2572 = vmatpush1.msra.mxu0 0.0
        %2573 = vmatprep.subr.mxu0 0.0
        %2574 = vmatpush1.msra.mxu0 0.0
        %2575 = vmatprep.subr.mxu0 0.0
        %2576 = vmatpush1.msra.mxu0 0.0
        %2577 = vmatprep.subr.mxu0 0.0
        %2578 = vmatpush1.msra.mxu0 0.0
        %2579 = vmatprep.subr.mxu0 0.0
        %2580 = vmatpush1.msra.mxu0 0.0
        %2581 = vmatprep.subr.mxu0 0.0
        %2582 = vmatpush1.msra.mxu0 0.0
        %2583 = vmatprep.subr.mxu0 0.0
        %2584 = vmatpush1.msra.mxu0 0.0
        %2585 = vmatprep.subr.mxu0 0.0
        %2586 = vmatpush1.msra.mxu0 0.0
        %2587 = vmatprep.subr.mxu0 0.0
        %2588 = vmatpush1.msra.mxu0 0.0
        %2589 = vmatprep.subr.mxu0 0.0
        %2590 = vmatpush1.msra.mxu0 0.0
        %2591 = vmatprep.subr.mxu0 0.0
        %2592 = vmatpush1.msra.mxu0 0.0
        %2593 = vmatprep.subr.mxu0 0.0
        %2594 = vmatpush1.msra.mxu0 0.0
        %2595 = vmatprep.subr.mxu0 0.0
        %2596 = vmatpush1.msra.mxu0 0.0
        %2597 = vmatprep.subr.mxu0 0.0
        %2598 = vmatpush1.msra.mxu0 0.0
        %2599 = vmatprep.subr.mxu0 0.0
        %2600 = vmatpush1.msra.mxu0 0.0
        %2601 = vmatprep.subr.mxu0 0.0
        %2602 = vmatpush1.msra.mxu0 0.0
        %2603 = vmatprep.subr.mxu0 0.0
        %2604 = vmatpush1.msra.mxu0 0.0
        %2605 = vmatprep.subr.mxu0 0.0
        %2606 = vmatpush1.msra.mxu0 0.0
        %2607 = vmatprep.subr.mxu0 0.0
        %2608 = vmatpush1.msra.mxu0 0.0
        %2609 = vmatprep.subr.mxu0 0.0
        %2610 = vmatpush1.msra.mxu0 0.0
        %2611 = vmatprep.subr.mxu0 0.0
        %2612 = vmatpush1.msra.mxu0 0.0
        %2613 = vmatprep.subr.mxu0 0.0
        %2614 = vmatpush1.msra.mxu0 0.0
        %2615 = vmatprep.subr.mxu0 0.0
        %2616 = vmatpush1.msra.mxu0 0.0
        %2617 = vmatprep.subr.mxu0 0.0
        %2618 = vmatpush1.msra.mxu0 0.0
        %2619 = vmatprep.subr.mxu0 0.0
        %2620 = vmatpush1.msra.mxu0 0.0
        %2621 = vmatprep.mubr.f32.mxu0 0.0
        %2622 = vmatmul.mubr.f32.gmra.mrb[0].mxu0 %v2555
        %v2623 = vpop.f32.mrb[0].mxu0
        %v2624 = vadd.f32 0.0, %v2623
        %v2625 = vpop.f32.mrb[0].mxu0
        %2626 = vdwg.mxu0
        %v2627 = vadd.f32 %v1635, %v2624
        %v2628 = vxor.u32 %v2627, 2147483648
        %v2629 = vmul.f32 %v2628, 1.442695
        %v2630 = vpow.pop %v2629
        %v2631 = vadd.f32 %v2630, 1.0
        %v2632 = vrcp.pop %v2631
        %v2633 = vmul.f32 1.0, %v2632
        %v2634 = vtanh.pop %v2627
        %v2636 = vrot.slane %v2550, 7
        %v2638 = vmul.f32 %v2633, %v2636
        %2640 = vrot.lane.b32.xlu0 %v2634, 64
        %v2641 = vpop.permute.xlu0 %2640
        %v2643 = vmul.f32 %v2633, %v2641
        %2645 = vrot.lane.b32.xlu0 %v2643, 32
        %v2646 = vpop.permute.xlu0 %2645
        %v2648 = vadd.f32 %v2638, %v2646
        %v2649 = vtanh.pop %v2648
        %2651 = vrot.lane.b32.xlu0 %v2649, 64
        %v2652 = vpop.permute.xlu0 %2651
        %v2654 = vmul.f32 %v2633, %v2652
        %p2655 = scmp.gt.s32.totalorder %s1642, 8
        %s2656 = scalar_select %p2655, 1, 0
        %v2657 = vstv %s2656
        %vm2658 = vcmp.eq.s32.totalorder %v2657, 1
        %v2660 = vsel %vm2658, %v2654, %v2552
        %v2661 = vsel %vm2658, %v2648, %v2636
        %2663 = vrot.lane.b32.xlu0 %v2660, 32
        %v2664 = vpop.permute.xlu0 %2663
        %v2665 = vsel %vm811, %v2664, 0
        %2667 = vmatprep.subr.mxu0 0.0
        %2668 = vmatpush1.msra.mxu0 %v1638
        %2669 = vmatprep.subr.mxu0 0.0
        %2670 = vmatpush1.msra.mxu0 %v1639
        %2671 = vmatprep.subr.mxu0 0.0
        %2672 = vmatpush1.msra.mxu0 %v1640
        %2673 = vmatprep.subr.mxu0 0.0
        %2674 = vmatpush1.msra.mxu0 %v1641
        %2675 = vmatprep.subr.mxu0 0.0
        %2676 = vmatpush1.msra.mxu0 0.0
        %2677 = vmatprep.subr.mxu0 0.0
        %2678 = vmatpush1.msra.mxu0 0.0
        %2679 = vmatprep.subr.mxu0 0.0
        %2680 = vmatpush1.msra.mxu0 0.0
        %2681 = vmatprep.subr.mxu0 0.0
        %2682 = vmatpush1.msra.mxu0 0.0
        %2683 = vmatprep.subr.mxu0 0.0
        %2684 = vmatpush1.msra.mxu0 0.0
        %2685 = vmatprep.subr.mxu0 0.0
        %2686 = vmatpush1.msra.mxu0 0.0
        %2687 = vmatprep.subr.mxu0 0.0
        %2688 = vmatpush1.msra.mxu0 0.0
        %2689 = vmatprep.subr.mxu0 0.0
        %2690 = vmatpush1.msra.mxu0 0.0
        %2691 = vmatprep.subr.mxu0 0.0
        %2692 = vmatpush1.msra.mxu0 0.0
        %2693 = vmatprep.subr.mxu0 0.0
        %2694 = vmatpush1.msra.mxu0 0.0
        %2695 = vmatprep.subr.mxu0 0.0
        %2696 = vmatpush1.msra.mxu0 0.0
        %2697 = vmatprep.subr.mxu0 0.0
        %2698 = vmatpush1.msra.mxu0 0.0
        %2699 = vmatprep.subr.mxu0 0.0
        %2700 = vmatpush1.msra.mxu0 0.0
        %2701 = vmatprep.subr.mxu0 0.0
        %2702 = vmatpush1.msra.mxu0 0.0
        %2703 = vmatprep.subr.mxu0 0.0
        %2704 = vmatpush1.msra.mxu0 0.0
        %2705 = vmatprep.subr.mxu0 0.0
        %2706 = vmatpush1.msra.mxu0 0.0
        %2707 = vmatprep.subr.mxu0 0.0
        %2708 = vmatpush1.msra.mxu0 0.0
        %2709 = vmatprep.subr.mxu0 0.0
        %2710 = vmatpush1.msra.mxu0 0.0
        %2711 = vmatprep.subr.mxu0 0.0
        %2712 = vmatpush1.msra.mxu0 0.0
        %2713 = vmatprep.subr.mxu0 0.0
        %2714 = vmatpush1.msra.mxu0 0.0
        %2715 = vmatprep.subr.mxu0 0.0
        %2716 = vmatpush1.msra.mxu0 0.0
        %2717 = vmatprep.subr.mxu0 0.0
        %2718 = vmatpush1.msra.mxu0 0.0
        %2719 = vmatprep.subr.mxu0 0.0
        %2720 = vmatpush1.msra.mxu0 0.0
        %2721 = vmatprep.subr.mxu0 0.0
        %2722 = vmatpush1.msra.mxu0 0.0
        %2723 = vmatprep.subr.mxu0 0.0
        %2724 = vmatpush1.msra.mxu0 0.0
        %2725 = vmatprep.subr.mxu0 0.0
        %2726 = vmatpush1.msra.mxu0 0.0
        %2727 = vmatprep.subr.mxu0 0.0
        %2728 = vmatpush1.msra.mxu0 0.0
        %2729 = vmatprep.subr.mxu0 0.0
        %2730 = vmatpush1.msra.mxu0 0.0
        %2731 = vmatprep.mubr.f32.mxu0 0.0
        %2732 = vmatmul.mubr.f32.gmra.mrb[0].mxu0 %v2665
        %v2733 = vpop.f32.mrb[0].mxu0
        %v2734 = vadd.f32 0.0, %v2733
        %v2735 = vpop.f32.mrb[0].mxu0
        %2736 = vdwg.mxu0
        %v2738 = vrot.slane %v2734, 7
        %v2740 = vadd.f32 %v1635, %v2738
        %v2741 = vxor.u32 %v2740, 2147483648
        %v2742 = vmul.f32 %v2741, 1.442695
        %v2743 = vpow.pop %v2742
        %v2744 = vadd.f32 %v2743, 1.0
        %v2745 = vrcp.pop %v2744
        %v2746 = vmul.f32 1.0, %v2745
        %v2747 = vtanh.pop %v2740
        %v2749 = vrot.slane %v2661, 7
        %v2751 = vmul.f32 %v2746, %v2749
        %2753 = vrot.lane.b32.xlu0 %v2747, 64
        %v2754 = vpop.permute.xlu0 %2753
        %v2756 = vmul.f32 %v2746, %v2754
        %2758 = vrot.lane.b32.xlu0 %v2756, 32
        %v2759 = vpop.permute.xlu0 %2758
        %v2761 = vadd.f32 %v2751, %v2759
        %v2762 = vtanh.pop %v2761
        %2764 = vrot.lane.b32.xlu0 %v2762, 64
        %v2765 = vpop.permute.xlu0 %2764
        %v2767 = vmul.f32 %v2746, %v2765
        %p2768 = scmp.gt.s32.totalorder %s1642, 9
        %s2769 = scalar_select %p2768, 1, 0
        %v2770 = vstv %s2769
        %vm2771 = vcmp.eq.s32.totalorder %v2770, 1
        %v2772 = vrot.slane %v2660, 7
        %v2774 = vsel %vm2771, %v2767, %v2772
        %v2775 = vsel %vm2771, %v2761, %v2749
        %v2777 = vrot.slane %v2774, 1
        %2778 = vrot.lane.b32.xlu0 %v2777, 32
        %v2779 = vpop.permute.xlu0 %2778
        %v2780 = vsel %vm811, %v2779, 0
        %2782 = vmatprep.subr.mxu0 0.0
        %2783 = vmatpush1.msra.mxu0 %v1638
        %2784 = vmatprep.subr.mxu0 0.0
        %2785 = vmatpush1.msra.mxu0 %v1639
        %2786 = vmatprep.subr.mxu0 0.0
        %2787 = vmatpush1.msra.mxu0 %v1640
        %2788 = vmatprep.subr.mxu0 0.0
        %2789 = vmatpush1.msra.mxu0 %v1641
        %2790 = vmatprep.subr.mxu0 0.0
        %2791 = vmatpush1.msra.mxu0 0.0
        %2792 = vmatprep.subr.mxu0 0.0
        %2793 = vmatpush1.msra.mxu0 0.0
        %2794 = vmatprep.subr.mxu0 0.0
        %2795 = vmatpush1.msra.mxu0 0.0
        %2796 = vmatprep.subr.mxu0 0.0
        %2797 = vmatpush1.msra.mxu0 0.0
        %2798 = vmatprep.subr.mxu0 0.0
        %2799 = vmatpush1.msra.mxu0 0.0
        %2800 = vmatprep.subr.mxu0 0.0
        %2801 = vmatpush1.msra.mxu0 0.0
        %2802 = vmatprep.subr.mxu0 0.0
        %2803 = vmatpush1.msra.mxu0 0.0
        %2804 = vmatprep.subr.mxu0 0.0
        %2805 = vmatpush1.msra.mxu0 0.0
        %2806 = vmatprep.subr.mxu0 0.0
        %2807 = vmatpush1.msra.mxu0 0.0
        %2808 = vmatprep.subr.mxu0 0.0
        %2809 = vmatpush1.msra.mxu0 0.0
        %2810 = vmatprep.subr.mxu0 0.0
        %2811 = vmatpush1.msra.mxu0 0.0
        %2812 = vmatprep.subr.mxu0 0.0
        %2813 = vmatpush1.msra.mxu0 0.0
        %2814 = vmatprep.subr.mxu0 0.0
        %2815 = vmatpush1.msra.mxu0 0.0
        %2816 = vmatprep.subr.mxu0 0.0
        %2817 = vmatpush1.msra.mxu0 0.0
        %2818 = vmatprep.subr.mxu0 0.0
        %2819 = vmatpush1.msra.mxu0 0.0
        %2820 = vmatprep.subr.mxu0 0.0
        %2821 = vmatpush1.msra.mxu0 0.0
        %2822 = vmatprep.subr.mxu0 0.0
        %2823 = vmatpush1.msra.mxu0 0.0
        %2824 = vmatprep.subr.mxu0 0.0
        %2825 = vmatpush1.msra.mxu0 0.0
        %2826 = vmatprep.subr.mxu0 0.0
        %2827 = vmatpush1.msra.mxu0 0.0
        %2828 = vmatprep.subr.mxu0 0.0
        %2829 = vmatpush1.msra.mxu0 0.0
        %2830 = vmatprep.subr.mxu0 0.0
        %2831 = vmatpush1.msra.mxu0 0.0
        %2832 = vmatprep.subr.mxu0 0.0
        %2833 = vmatpush1.msra.mxu0 0.0
        %2834 = vmatprep.subr.mxu0 0.0
        %2835 = vmatpush1.msra.mxu0 0.0
        %2836 = vmatprep.subr.mxu0 0.0
        %2837 = vmatpush1.msra.mxu0 0.0
        %2838 = vmatprep.subr.mxu0 0.0
        %2839 = vmatpush1.msra.mxu0 0.0
        %2840 = vmatprep.subr.mxu0 0.0
        %2841 = vmatpush1.msra.mxu0 0.0
        %2842 = vmatprep.subr.mxu0 0.0
        %2843 = vmatpush1.msra.mxu0 0.0
        %2844 = vmatprep.subr.mxu0 0.0
        %2845 = vmatpush1.msra.mxu0 0.0
        %2846 = vmatprep.mubr.f32.mxu0 0.0
        %2847 = vmatmul.mubr.f32.gmra.mrb[0].mxu0 %v2780
        %v2848 = vpop.f32.mrb[0].mxu0
        %v2849 = vadd.f32 0.0, %v2848
        %v2850 = vpop.f32.mrb[0].mxu0
        %2851 = vdwg.mxu0
        %v2853 = vrot.slane %v2849, 6
        %v2855 = vadd.f32 %v1635, %v2853
        %v2856 = vxor.u32 %v2855, 2147483648
        %v2857 = vmul.f32 %v2856, 1.442695
        %v2858 = vpow.pop %v2857
        %v2859 = vadd.f32 %v2858, 1.0
        %v2860 = vrcp.pop %v2859
        %v2861 = vmul.f32 1.0, %v2860
        %v2862 = vtanh.pop %v2855
        %v2864 = vrot.slane %v2775, 7
        %v2866 = vmul.f32 %v2861, %v2864
        %2868 = vrot.lane.b32.xlu0 %v2862, 64
        %v2869 = vpop.permute.xlu0 %2868
        %v2871 = vmul.f32 %v2861, %v2869
        %2873 = vrot.lane.b32.xlu0 %v2871, 32
        %v2874 = vpop.permute.xlu0 %2873
        %v2876 = vadd.f32 %v2866, %v2874
        %v2877 = vtanh.pop %v2876
        %2879 = vrot.lane.b32.xlu0 %v2877, 64
        %v2880 = vpop.permute.xlu0 %2879
        %v2882 = vmul.f32 %v2861, %v2880
        %p2883 = scmp.gt.s32.totalorder %s1642, 10
        %s2884 = scalar_select %p2883, 1, 0
        %v2885 = vstv %s2884
        %vm2886 = vcmp.eq.s32.totalorder %v2885, 1
        %v2887 = vrot.slane %v2774, 7
        %v2889 = vsel %vm2886, %v2882, %v2887
        %v2890 = vsel %vm2886, %v2876, %v2864
        %v2892 = vrot.slane %v2889, 2
        %2893 = vrot.lane.b32.xlu0 %v2892, 32
        %v2894 = vpop.permute.xlu0 %2893
        %v2895 = vsel %vm811, %v2894, 0
        %2897 = vmatprep.subr.mxu0 0.0
        %2898 = vmatpush1.msra.mxu0 %v1638
        %2899 = vmatprep.subr.mxu0 0.0
        %2900 = vmatpush1.msra.mxu0 %v1639
        %2901 = vmatprep.subr.mxu0 0.0
        %2902 = vmatpush1.msra.mxu0 %v1640
        %2903 = vmatprep.subr.mxu0 0.0
        %2904 = vmatpush1.msra.mxu0 %v1641
        %2905 = vmatprep.subr.mxu0 0.0
        %2906 = vmatpush1.msra.mxu0 0.0
        %2907 = vmatprep.subr.mxu0 0.0
        %2908 = vmatpush1.msra.mxu0 0.0
        %2909 = vmatprep.subr.mxu0 0.0
        %2910 = vmatpush1.msra.mxu0 0.0
        %2911 = vmatprep.subr.mxu0 0.0
        %2912 = vmatpush1.msra.mxu0 0.0
        %2913 = vmatprep.subr.mxu0 0.0
        %2914 = vmatpush1.msra.mxu0 0.0
        %2915 = vmatprep.subr.mxu0 0.0
        %2916 = vmatpush1.msra.mxu0 0.0
        %2917 = vmatprep.subr.mxu0 0.0
        %2918 = vmatpush1.msra.mxu0 0.0
        %2919 = vmatprep.subr.mxu0 0.0
        %2920 = vmatpush1.msra.mxu0 0.0
        %2921 = vmatprep.subr.mxu0 0.0
        %2922 = vmatpush1.msra.mxu0 0.0
        %2923 = vmatprep.subr.mxu0 0.0
        %2924 = vmatpush1.msra.mxu0 0.0
        %2925 = vmatprep.subr.mxu0 0.0
        %2926 = vmatpush1.msra.mxu0 0.0
        %2927 = vmatprep.subr.mxu0 0.0
        %2928 = vmatpush1.msra.mxu0 0.0
        %2929 = vmatprep.subr.mxu0 0.0
        %2930 = vmatpush1.msra.mxu0 0.0
        %2931 = vmatprep.subr.mxu0 0.0
        %2932 = vmatpush1.msra.mxu0 0.0
        %2933 = vmatprep.subr.mxu0 0.0
        %2934 = vmatpush1.msra.mxu0 0.0
        %2935 = vmatprep.subr.mxu0 0.0
        %2936 = vmatpush1.msra.mxu0 0.0
        %2937 = vmatprep.subr.mxu0 0.0
        %2938 = vmatpush1.msra.mxu0 0.0
        %2939 = vmatprep.subr.mxu0 0.0
        %2940 = vmatpush1.msra.mxu0 0.0
        %2941 = vmatprep.subr.mxu0 0.0
        %2942 = vmatpush1.msra.mxu0 0.0
        %2943 = vmatprep.subr.mxu0 0.0
        %2944 = vmatpush1.msra.mxu0 0.0
        %2945 = vmatprep.subr.mxu0 0.0
        %2946 = vmatpush1.msra.mxu0 0.0
        %2947 = vmatprep.subr.mxu0 0.0
        %2948 = vmatpush1.msra.mxu0 0.0
        %2949 = vmatprep.subr.mxu0 0.0
        %2950 = vmatpush1.msra.mxu0 0.0
        %2951 = vmatprep.subr.mxu0 0.0
        %2952 = vmatpush1.msra.mxu0 0.0
        %2953 = vmatprep.subr.mxu0 0.0
        %2954 = vmatpush1.msra.mxu0 0.0
        %2955 = vmatprep.subr.mxu0 0.0
        %2956 = vmatpush1.msra.mxu0 0.0
        %2957 = vmatprep.subr.mxu0 0.0
        %2958 = vmatpush1.msra.mxu0 0.0
        %2959 = vmatprep.subr.mxu0 0.0
        %2960 = vmatpush1.msra.mxu0 0.0
        %2961 = vmatprep.mubr.f32.mxu0 0.0
        %2962 = vmatmul.mubr.f32.gmra.mrb[0].mxu0 %v2895
        %v2963 = vpop.f32.mrb[0].mxu0
        %v2964 = vadd.f32 0.0, %v2963
        %v2965 = vpop.f32.mrb[0].mxu0
        %2966 = vdwg.mxu0
        %v2968 = vrot.slane %v2964, 5
        %v2970 = vadd.f32 %v1635, %v2968
        %v2971 = vxor.u32 %v2970, 2147483648
        %v2972 = vmul.f32 %v2971, 1.442695
        %v2973 = vpow.pop %v2972
        %v2974 = vadd.f32 %v2973, 1.0
        %v2975 = vrcp.pop %v2974
        %v2976 = vmul.f32 1.0, %v2975
        %v2977 = vtanh.pop %v2970
        %v2979 = vrot.slane %v2890, 7
        %v2981 = vmul.f32 %v2976, %v2979
        %2983 = vrot.lane.b32.xlu0 %v2977, 64
        %v2984 = vpop.permute.xlu0 %2983
        %v2986 = vmul.f32 %v2976, %v2984
        %2988 = vrot.lane.b32.xlu0 %v2986, 32
        %v2989 = vpop.permute.xlu0 %2988
        %v2991 = vadd.f32 %v2981, %v2989
        %v2992 = vtanh.pop %v2991
        %2994 = vrot.lane.b32.xlu0 %v2992, 64
        %v2995 = vpop.permute.xlu0 %2994
        %v2997 = vmul.f32 %v2976, %v2995
        %p2998 = scmp.gt.s32.totalorder %s1642, 11
        %s2999 = scalar_select %p2998, 1, 0
        %v3000 = vstv %s2999
        %vm3001 = vcmp.eq.s32.totalorder %v3000, 1
        %v3002 = vrot.slane %v2889, 7
        %v3004 = vsel %vm3001, %v2997, %v3002
        %3006 = vrot.lane.b32.xlu0 %v3004, 32
        %v3007 = vpop.permute.xlu0 %3006
        %vm3009 = vcmask 257027
        %3010 = vst.msk [vmem:[%s682 - $0x3] sm:$0x8] %vm3009, %v3007
        %s3011 = sand.u32 %s518, 1
        %s3012 = scalar_lea.sflag [#allocation5], %s3011
        %s3013 = sand.u32 %s518, 1
        %s3014 = scalar_lea.vmem [#allocation4], %s3013
        // Predicated region
        $region109: #{tpu_custom_call.1} parent=107 // pred_check
          %p3015 = pneg %p528
        $region110: #{tpu_custom_call.1} parent=107 // pred_check_branch
          %3017 = sbr.rel (%p3015) target = $region112
        $region111: #{tpu_custom_call.1} parent=107 // pred_region
          %s3019 = ssub.s32 16, 16
          %3020 = vsyncadd %s3012, %s3019
          %s3021 = smul.addr %s43, 16
          %s3022 = scalar_lea.hbm %s23, %s3021
          %s3024 = sshll.u32 %s3014, 4
          %s3025 = int_to_ptr.vmem [resolvable:$true] %s3024
          %3027 = dma.vmem_to_hbm [thread:$0]  %s3025, 16, %s3022, %s3012
        $region112: #{tpu_custom_call.1} parent=107 // pred_fallthru
          _
      $region108: #{tpu_custom_call.1} parent=5 // pred_fallthru
        _
      %p3028 = scmp.le.s32.totalorder 2, %s38
      // Predicated region
      $region113: #{tpu_custom_call.1} parent=5 // pred_check
        %p3029 = pneg %p3028
      $region114: #{tpu_custom_call.1} parent=5 // pred_check_branch
        %3031 = sbr.rel (%p3029) target = $region116
      $region115: #{tpu_custom_call.1} parent=5 // pred_region
        %s3032 = ssub.s32 %s38, 2
        // Predicated region
        $region117: #{tpu_custom_call.1} parent=115 // pred_check
          %p3033 = pneg %p534
        $region118: #{tpu_custom_call.1} parent=115 // pred_check_branch
          %3035 = sbr.rel (%p3033) target = $region120
        $region119: #{tpu_custom_call.1} parent=115 // pred_region
          %s3036 = sand.u32 %s519, 1
          %s3037 = scalar_lea.sflag [#allocation5], %s3036
          %s3038 = sand.u32 %s519, 1
          %s3039 = scalar_lea.vmem [#allocation4], %s3038
          %3040 = dma.done %s3037, 16
        $region120: #{tpu_custom_call.1} parent=115 // pred_fallthru
          _
      $region116: #{tpu_custom_call.1} parent=5 // pred_fallthru
        _
    $region6: #{tpu_custom_call.1} parent=1 // loop_footer
      %s42 = sadd.s32 1, %s38
    $region7: #{tpu_custom_call.1} parent=1 // loop_footer_branch
      %37 = sbr.rel target = $region3
    $region8: #{tpu_custom_call.1} parent=1 // loop_exit
      _
    %3041 = vsyncpa [#allocation5], 1
    %s3042 = scalar_lea.sflag [#allocation5], 1
    %3043 = vsyncpa %s3042, 1

</llo_original>
